<compile_context>
chip_gen: v5e
topology: v5e:2x2
jax: 0.10.0
libtpu: 0.0.40
codegen_flags: <defaults>
</compile_context>

<pallas_src>
import math

import jax
import jax.numpy as jnp
from jax import lax
from jax.experimental import pallas as pl
from jax.experimental.pallas import tpu as pltpu

# ----------------------------- configuration --------------------------------
DIM = 32                         # query_dim
N_HEADS = 4
D_HEAD = 8
INNER = N_HEADS * D_HEAD         # 32
CTX_DIM = 16                     # context_dim
CTX_LEN = 77                     # context sequence length
SPATIAL = 64                     # spatial_size == number of tokens (n)
FF_INNER = DIM * 4               # GEGLU inner dim (128)
EPS_LN = 1e-5                    # nn.LayerNorm default
SCALE = 1.0 / math.sqrt(D_HEAD)  # xformers default softmax scale

# row indices inside the packed (9, DIM) gain/bias slab
_N1G, _N1B, _N2G, _N2B, _N3G, _N3B, _A1OB, _A2OB, _FF2B = range(9)


# ------------------------------ kernel helpers --------------------------------

def _layernorm(v, g, b):
    mean = jnp.mean(v, axis=-1, keepdims=True)
    cen = v - mean
    var = jnp.mean(cen * cen, axis=-1, keepdims=True)
    return cen * lax.rsqrt(var + EPS_LN) * g + b


def _heads_softmax_out(q, k, v, w_out):
    """sum_h softmax(q_h k_h^T * scale) v_h @ w_out[h*dh:(h+1)*dh]  for one batch element.

    Fuses the head-merge and the output projection so no (tokens, inner) attention
    output is ever materialized.  Softmax normalization is deferred: unnormalized
    exp-scores hit the MXU, then the (tokens, d_head) result is scaled by 1/rowsum.
    """
    n_q = q.shape[0]
    acc = jnp.zeros((n_q, w_out.shape[1]), jnp.float32)
    for h in range(N_HEADS):
        sl = slice(h * D_HEAD, (h + 1) * D_HEAD)
        qh = q[:, sl]
        kh = k[:, sl]
        vh = v[:, sl]
        s = lax.dot_general(qh, kh, (((1,), (1,)), ((), ())),
                            preferred_element_type=jnp.float32) * SCALE
        s = s - jnp.max(s, axis=-1, keepdims=True)
        p = jnp.exp(s)
        inv_l = 1.0 / jnp.sum(p, axis=-1, keepdims=True)          # deferred normalization
        oh = jnp.dot(p, vh, preferred_element_type=jnp.float32) * inv_l
        acc = acc + jnp.dot(oh, w_out[sl, :], preferred_element_type=jnp.float32)
    return acc


# ------------------------------- fused kernel ---------------------------------

def _hybrid_block_kernel(x_ref, ctx_ref, wqkv1_ref, pos_ref, wmisc_ref, wkv2_ref,
                         ff1w_ref, ff1b_ref, ff2w_ref, vecs_ref, o_ref):
    bb = x_ref.shape[0]                       # batch elements in this grid step
    n = x_ref.shape[1]                        # tokens
    x = x_ref[...].astype(jnp.float32).reshape(bb * n, DIM)   # (M, DIM), leading-dim merge
    ctx = ctx_ref[...].astype(jnp.float32)                    # (bb, L, CTX_DIM)

    def vec(i):                               # one packed (1, DIM) gain / bias row
        return vecs_ref[i:i + 1, :].astype(jnp.float32)

    # ---- attn1: self-attention + shared positional embedding (residual fused) ----
    h = _layernorm(x, vec(_N1G), vec(_N1B))
    qkv = jnp.dot(h, wqkv1_ref[...], preferred_element_type=jnp.float32)   # (M, 96)
    pos = pos_ref[...].astype(jnp.float32)     # (n, 96): pos tiled for q|k, zeros for v
    w_out1 = wmisc_ref[0:INNER, :]
    outs = []
    for b in range(bb):
        row = slice(b * n, (b + 1) * n)
        qkv_b = qkv[row, :] + pos              # one full-width add instead of per-head adds
        outs.append(_heads_softmax_out(qkv_b[:, :INNER],
                                       qkv_b[:, INNER:2 * INNER],
                                       qkv_b[:, 2 * INNER:], w_out1))
    attn1 = outs[0] if bb == 1 else jnp.concatenate(outs, axis=0)
    x = x + attn1 + vec(_A1OB)

    # ---- attn2: cross-attention with context (residual fused) ----
    h = _layernorm(x, vec(_N2G), vec(_N2B))
    w_q2 = wmisc_ref[INNER:2 * INNER, :]
    w_out2 = wmisc_ref[2 * INNER:3 * INNER, :]
    q2 = jnp.dot(h, w_q2, preferred_element_type=jnp.float32)              # (M, 32)
    wkv2 = wkv2_ref[...]
    outs = []
    for b in range(bb):
        row = slice(b * n, (b + 1) * n)
        kv_b = jnp.dot(ctx[b], wkv2, preferred_element_type=jnp.float32)   # (L, 64) fused K|V
        outs.append(_heads_softmax_out(q2[row, :],
                                       kv_b[:, :INNER], kv_b[:, INNER:], w_out2))
    attn2 = outs[0] if bb == 1 else jnp.concatenate(outs, axis=0)
    x = x + attn2 + vec(_A2OB)

    # ---- GEGLU feed-forward (gate + second matmul + residual fused) ----
    h = _layernorm(x, vec(_N3G), vec(_N3B))
    hcat = jnp.dot(h, ff1w_ref[...], preferred_element_type=jnp.float32) + ff1b_ref[...]
    a = hcat[:, :FF_INNER]
    gate = hcat[:, FF_INNER:]
    gelu = 0.5 * gate * (1.0 + lax.erf(gate * (1.0 / math.sqrt(2.0))))     # exact F.gelu
    g = a * gelu
    x = x + jnp.dot(g, ff2w_ref[...], preferred_element_type=jnp.float32) + vec(_FF2B)

    o_ref[...] = x.reshape(bb, n, DIM).astype(o_ref.dtype)


# --------------------------------- wrapper -------------------------------------

def _const_spec(shape):
    zeros = (0,) * len(shape)
    return pl.BlockSpec(shape, lambda i, _z=zeros: _z)


def _pick_batch_block(batch):
    """Largest divisor of `batch` that keeps >= 2 grid steps (v7x: 2 TCs) and caps
    the flattened M at 8*N tokens per step."""
    best = 1
    for cand in range(1, batch + 1):
        if batch % cand == 0 and cand <= max(1, batch // 2) and cand <= 8:
            best = cand
    return best


def hybrid_transformer_block(params, x, context, batch_block=None):
    """x: (B, N, DIM) token sequence; context: (B, L, CTX_DIM)."""
    B, N, D = x.shape
    _, L, Dc = context.shape
    assert D == DIM and Dc == CTX_DIM
    assert N == params['a1_pos'].shape[0]

    bb = batch_block if batch_block is not None else _pick_batch_block(B)
    assert B % bb == 0
    grid = (B // bb,)

    # ---- pack weights into a few wide slabs (fewer DMAs, wider MXU passes) ----
    w_qkv1 = jnp.concatenate(
        [params['a1_q_w'], params['a1_k_w'], params['a1_v_w']], axis=1)          # (32, 96)
    pos96 = jnp.concatenate(
        [jnp.tile(params['a1_pos'], (1, 2 * N_HEADS)),                           # pos for q|k
         jnp.zeros((N, INNER), jnp.float32)], axis=1)                            # zeros for v
    w_misc = jnp.concatenate(
        [params['a1_out_w'], params['a2_q_w'], params['a2_out_w']], axis=0)      # (96, 32)
    w_kv2 = jnp.concatenate([params['a2_k_w'], params['a2_v_w']], axis=1)        # (16, 64)
    vecs = jnp.concatenate(
        [params['norm1_g'], params['norm1_b'],
         params['norm2_g'], params['norm2_b'],
         params['norm3_g'], params['norm3_b'],
         params['a1_out_b'], params['a2_out_b'], params['ff2_b']], axis=0)       # (9, 32)

    weights = [w_qkv1, pos96, w_misc, w_kv2,
               params['ff1_w'], params['ff1_b'], params['ff2_w'], vecs]

    in_specs = [
        pl.BlockSpec((bb, N, D), lambda i: (i, 0, 0)),
        pl.BlockSpec((bb, L, Dc), lambda i: (i, 0, 0)),
    ] + [_const_spec(w.shape) for w in weights]

    return pl.pallas_call(
        _hybrid_block_kernel,
        out_shape=jax.ShapeDtypeStruct((B, N, D), x.dtype),
        grid=grid,
        in_specs=in_specs,
        out_specs=pl.BlockSpec((bb, N, D), lambda i: (i, 0, 0)),
        compiler_params=pltpu.CompilerParams(
            dimension_semantics=("parallel",)),      # shard batch blocks over v7x's 2 TCs
    )(x, context, *weights)


# ----------------------------- pure-JAX reference -----------------------------

def reference_forward(p, x, context):
    def ln(v, g, b):
        mean = jnp.mean(v, -1, keepdims=True)
        var = jnp.mean((v - mean) ** 2, -1, keepdims=True)
        return (v - mean) / jnp.sqrt(var + EPS_LN) * g.reshape(1, 1, -1) + b.reshape(1, 1, -1)

    def mha(q, k, v, wo, bo, pos=None):
        B = q.shape[0]

        def split(t):
            return t.reshape(B, t.shape[1], N_HEADS, D_HEAD).transpose(0, 2, 1, 3)

        qh, kh, vh = split(q), split(k), split(v)
        if pos is not None:
            qh = qh + pos[None, None]
            kh = kh + pos[None, None]
        s = jnp.einsum('bhqd,bhkd->bhqk', qh, kh) * SCALE
        pm = jax.nn.softmax(s, axis=-1)
        o = jnp.einsum('bhqk,bhkd->bhqd', pm, vh)
        o = o.transpose(0, 2, 1, 3).reshape(B, q.shape[1], INNER)
        return o @ wo + bo.reshape(1, 1, -1)

    h = ln(x, p['norm1_g'], p['norm1_b'])
    x = x + mha(h @ p['a1_q_w'], h @ p['a1_k_w'], h @ p['a1_v_w'],
                p['a1_out_w'], p['a1_out_b'], pos=p['a1_pos'])
    h = ln(x, p['norm2_g'], p['norm2_b'])
    x = x + mha(h @ p['a2_q_w'], context @ p['a2_k_w'], context @ p['a2_v_w'],
                p['a2_out_w'], p['a2_out_b'])
    h = ln(x, p['norm3_g'], p['norm3_b'])
    hc = h @ p['ff1_w'] + p['ff1_b'].reshape(1, 1, -1)
    a, gate = hc[..., :FF_INNER], hc[..., FF_INNER:]
    g = a * (0.5 * gate * (1.0 + lax.erf(gate / math.sqrt(2.0))))
    x = x + g @ p['ff2_w'] + p['ff2_b'].reshape(1, 1, -1)
    return x


# ----------------------------- parameter init --------------------------------

def init_params(key):
    ks = iter(jax.random.split(key, 32))

    def nrm(shape, scale=0.02):
        return scale * jax.random.normal(next(ks), shape, jnp.float32)

    d, dh, ctx, ffi = DIM, D_HEAD, CTX_DIM, FF_INNER
    p = {}
    for name in ('norm1', 'norm2', 'norm3'):
        p[name + '_g'] = 1.0 + nrm((1, d))
        p[name + '_b'] = nrm((1, d))
    # Linear weights stored pre-transposed: (in_features, out_features).
    p['a1_q_w'] = nrm((d, d)); p['a1_k_w'] = nrm((d, d)); p['a1_v_w'] = nrm((d, d))
    p['a1_out_w'] = nrm((d, d)); p['a1_out_b'] = nrm((1, d))
    p['a1_pos'] = nrm((SPATIAL, dh))   # reference zero-inits; nonzero here to exercise the path
    p['a2_q_w'] = nrm((d, d))
    p['a2_k_w'] = nrm((ctx, d)); p['a2_v_w'] = nrm((ctx, d))
    p['a2_out_w'] = nrm((d, d)); p['a2_out_b'] = nrm((1, d))
    p['ff1_w'] = nrm((d, 2 * ffi)); p['ff1_b'] = nrm((1, 2 * ffi))
    p['ff2_w'] = nrm((ffi, d)); p['ff2_b'] = nrm((1, d))
    return p


# ---------------------------------- main --------------------------------------

if __name__ == "__main__":
    key = jax.random.PRNGKey(0)
    kp, kx, kc = jax.random.split(key, 3)
    params = init_params(kp)
    x = jax.random.normal(kx, (2, SPATIAL, DIM), jnp.float32)
    context = jax.random.normal(kc, (2, CTX_LEN, CTX_DIM), jnp.float32)

    out = jax.jit(hybrid_transformer_block)(params, x, context)
    jax.block_until_ready(out)
    assert out.shape == x.shape and out.dtype == jnp.float32

    # full-f32 reference so the tightened tolerance is meaningful
    with jax.default_matmul_precision("highest"):
        ref = reference_forward(params, x, context)
    err = float(jnp.max(jnp.abs(out - ref)))
    assert err < 1e-4, f"max abs error {err}"

    print("KERNEL_OK")
</pallas_src>

<mosaic_0001>
module attributes {stable_mosaic.version = 11 : i64} {
  func.func @_hybrid_block_kernel(%arg0: i32, %arg1: memref<1x64x32xf32, #tpu.memory_space<vmem>>, %arg2: memref<1x77x16xf32, #tpu.memory_space<vmem>>, %arg3: memref<32x96xf32, #tpu.memory_space<vmem>>, %arg4: memref<64x96xf32, #tpu.memory_space<vmem>>, %arg5: memref<96x32xf32, #tpu.memory_space<vmem>>, %arg6: memref<16x64xf32, #tpu.memory_space<vmem>>, %arg7: memref<32x256xf32, #tpu.memory_space<vmem>>, %arg8: memref<1x256xf32, #tpu.memory_space<vmem>>, %arg9: memref<128x32xf32, #tpu.memory_space<vmem>>, %arg10: memref<9x32xf32, #tpu.memory_space<vmem>>, %arg11: memref<1x64x32xf32, #tpu.memory_space<vmem>>) attributes {dimension_semantics = [#tpu.dimension_semantics<parallel>], iteration_bounds = array<i64: 2>, scalar_prefetch = 0 : i64, scratch_operands = 0 : i64, tpu.core_type = #tpu.core_type<tc>, window_params = [{transform_indices = @transform_0, window_bounds = array<i64: 1, 64, 32>}, {transform_indices = @transform_1, window_bounds = array<i64: 1, 77, 16>}, {pipeline_mode = #tpu.pipeline_mode<synchronous>, transform_indices = @transform_2, window_bounds = array<i64: 32, 96>}, {pipeline_mode = #tpu.pipeline_mode<synchronous>, transform_indices = @transform_3, window_bounds = array<i64: 64, 96>}, {pipeline_mode = #tpu.pipeline_mode<synchronous>, transform_indices = @transform_4, window_bounds = array<i64: 96, 32>}, {pipeline_mode = #tpu.pipeline_mode<synchronous>, transform_indices = @transform_5, window_bounds = array<i64: 16, 64>}, {pipeline_mode = #tpu.pipeline_mode<synchronous>, transform_indices = @transform_6, window_bounds = array<i64: 32, 256>}, {pipeline_mode = #tpu.pipeline_mode<synchronous>, transform_indices = @transform_7, window_bounds = array<i64: 1, 256>}, {pipeline_mode = #tpu.pipeline_mode<synchronous>, transform_indices = @transform_8, window_bounds = array<i64: 128, 32>}, {pipeline_mode = #tpu.pipeline_mode<synchronous>, transform_indices = @transform_9, window_bounds = array<i64: 9, 32>}, {transform_indices = @transform_10, window_bounds = array<i64: 1, 64, 32>}]} {
    %c0 = arith.constant 0 : index
    %c0_0 = arith.constant 0 : index
    %c0_1 = arith.constant 0 : index
    %0 = vector.load %arg1[%c0, %c0_0, %c0_1] : memref<1x64x32xf32, #tpu.memory_space<vmem>>, vector<1x64x32xf32>
    %1 = vector.shape_cast %0 : vector<1x64x32xf32> to vector<64x32xf32>
    %c0_2 = arith.constant 0 : index
    %c0_3 = arith.constant 0 : index
    %c0_4 = arith.constant 0 : index
    %2 = vector.load %arg2[%c0_2, %c0_3, %c0_4] : memref<1x77x16xf32, #tpu.memory_space<vmem>>, vector<1x77x16xf32>
    %c0_5 = arith.constant 0 : index
    %c0_6 = arith.constant 0 : index
    %3 = vector.load %arg10[%c0_5, %c0_6] : memref<9x32xf32, #tpu.memory_space<vmem>>, vector<1x32xf32>
    %c1 = arith.constant 1 : index
    %c0_7 = arith.constant 0 : index
    %4 = vector.load %arg10[%c1, %c0_7] : memref<9x32xf32, #tpu.memory_space<vmem>>, vector<1x32xf32>
    %cst = arith.constant dense<0.000000e+00> : vector<64xf32>
    %5 = vector.multi_reduction <add>, %1, %cst [1] : vector<64x32xf32> to vector<64xf32>
    %6 = vector.shape_cast %5 : vector<64xf32> to vector<64x1xf32>
    %cst_8 = arith.constant 3.200000e+01 : f32
    %7 = vector.broadcast %cst_8 : f32 to vector<64x1xf32>
    %8 = arith.divf %6, %7 : vector<64x1xf32>
    %9 = vector.broadcast %8 : vector<64x1xf32> to vector<64x32xf32>
    %10 = arith.subf %1, %9 : vector<64x32xf32>
    %11 = arith.mulf %10, %10 : vector<64x32xf32>
    %cst_9 = arith.constant dense<0.000000e+00> : vector<64xf32>
    %12 = vector.multi_reduction <add>, %11, %cst_9 [1] : vector<64x32xf32> to vector<64xf32>
    %13 = vector.shape_cast %12 : vector<64xf32> to vector<64x1xf32>
    %cst_10 = arith.constant 3.200000e+01 : f32
    %14 = vector.broadcast %cst_10 : f32 to vector<64x1xf32>
    %15 = arith.divf %13, %14 : vector<64x1xf32>
    %cst_11 = arith.constant 9.99999974E-6 : f32
    %16 = vector.broadcast %cst_11 : f32 to vector<64x1xf32>
    %17 = arith.addf %15, %16 : vector<64x1xf32>
    %18 = math.rsqrt %17 : vector<64x1xf32>
    %19 = vector.broadcast %18 : vector<64x1xf32> to vector<64x32xf32>
    %20 = arith.mulf %10, %19 : vector<64x32xf32>
    %21 = vector.broadcast %3 : vector<1x32xf32> to vector<64x32xf32>
    %22 = arith.mulf %20, %21 : vector<64x32xf32>
    %23 = vector.broadcast %4 : vector<1x32xf32> to vector<64x32xf32>
    %24 = arith.addf %22, %23 : vector<64x32xf32>
    %c0_12 = arith.constant 0 : index
    %c0_13 = arith.constant 0 : index
    %25 = vector.load %arg3[%c0_12, %c0_13] : memref<32x96xf32, #tpu.memory_space<vmem>>, vector<32x96xf32>
    %cst_14 = arith.constant dense<0.000000e+00> : vector<64x96xf32>
    %26 = tpu.matmul %24, %25, %cst_14 {dimension_numbers = #tpu.dot_dimension_numbers<[1], [0], [0], [1], [0, 0, 1, 1], [], []>} : vector<64x32xf32>, vector<32x96xf32>, vector<64x96xf32> -> vector<64x96xf32>
    %c0_15 = arith.constant 0 : index
    %c0_16 = arith.constant 0 : index
    %27 = vector.load %arg4[%c0_15, %c0_16] : memref<64x96xf32, #tpu.memory_space<vmem>>, vector<64x96xf32>
    %c0_17 = arith.constant 0 : index
    %c0_18 = arith.constant 0 : index
    %28 = vector.load %arg5[%c0_17, %c0_18] : memref<96x32xf32, #tpu.memory_space<vmem>>, vector<32x32xf32>
    %29 = arith.addf %26, %27 : vector<64x96xf32>
    %30 = vector.extract_strided_slice %29 {offsets = [0, 0], sizes = [64, 32], strides = [1, 1]} : vector<64x96xf32> to vector<64x32xf32>
    %31 = vector.extract_strided_slice %29 {offsets = [0, 32], sizes = [64, 32], strides = [1, 1]} : vector<64x96xf32> to vector<64x32xf32>
    %32 = vector.extract_strided_slice %29 {offsets = [0, 64], sizes = [64, 32], strides = [1, 1]} : vector<64x96xf32> to vector<64x32xf32>
    %cst_19 = arith.constant 0.000000e+00 : f32
    %33 = vector.broadcast %cst_19 : f32 to vector<64x32xf32>
    %34 = vector.extract_strided_slice %30 {offsets = [0, 0], sizes = [64, 8], strides = [1, 1]} : vector<64x32xf32> to vector<64x8xf32>
    %35 = vector.extract_strided_slice %31 {offsets = [0, 0], sizes = [64, 8], strides = [1, 1]} : vector<64x32xf32> to vector<64x8xf32>
    %36 = vector.extract_strided_slice %32 {offsets = [0, 0], sizes = [64, 8], strides = [1, 1]} : vector<64x32xf32> to vector<64x8xf32>
    %cst_20 = arith.constant dense<0.000000e+00> : vector<64x64xf32>
    %37 = tpu.matmul %34, %35, %cst_20 {dimension_numbers = #tpu.dot_dimension_numbers<[1], [1], [0], [0], [0, 0, 1, 0], [], []>} : vector<64x8xf32>, vector<64x8xf32>, vector<64x64xf32> -> vector<64x64xf32>
    %cst_21 = arith.constant 0.353553385 : f32
    %38 = vector.broadcast %cst_21 : f32 to vector<64x64xf32>
    %39 = arith.mulf %37, %38 : vector<64x64xf32>
    %cst_22 = arith.constant dense<0xFF800000> : vector<64xf32>
    %40 = vector.multi_reduction <maximumf>, %39, %cst_22 [1] : vector<64x64xf32> to vector<64xf32>
    %41 = vector.shape_cast %40 : vector<64xf32> to vector<64x1xf32>
    %42 = vector.broadcast %41 : vector<64x1xf32> to vector<64x64xf32>
    %43 = arith.subf %39, %42 : vector<64x64xf32>
    %44 = math.exp %43 : vector<64x64xf32>
    %cst_23 = arith.constant dense<0.000000e+00> : vector<64xf32>
    %45 = vector.multi_reduction <add>, %44, %cst_23 [1] : vector<64x64xf32> to vector<64xf32>
    %46 = vector.shape_cast %45 : vector<64xf32> to vector<64x1xf32>
    %cst_24 = arith.constant 1.000000e+00 : f32
    %47 = vector.broadcast %cst_24 : f32 to vector<64x1xf32>
    %48 = arith.divf %47, %46 : vector<64x1xf32>
    %cst_25 = arith.constant dense<0.000000e+00> : vector<64x8xf32>
    %49 = tpu.matmul %44, %36, %cst_25 {dimension_numbers = #tpu.dot_dimension_numbers<[1], [0], [0], [1], [0, 0, 1, 1], [], []>} : vector<64x64xf32>, vector<64x8xf32>, vector<64x8xf32> -> vector<64x8xf32>
    %50 = vector.broadcast %48 : vector<64x1xf32> to vector<64x8xf32>
    %51 = arith.mulf %49, %50 : vector<64x8xf32>
    %52 = vector.extract_strided_slice %28 {offsets = [0, 0], sizes = [8, 32], strides = [1, 1]} : vector<32x32xf32> to vector<8x32xf32>
    %cst_26 = arith.constant dense<0.000000e+00> : vector<64x32xf32>
    %53 = tpu.matmul %51, %52, %cst_26 {dimension_numbers = #tpu.dot_dimension_numbers<[1], [0], [0], [1], [0, 0, 1, 1], [], []>} : vector<64x8xf32>, vector<8x32xf32>, vector<64x32xf32> -> vector<64x32xf32>
    %54 = arith.addf %33, %53 : vector<64x32xf32>
    %55 = vector.extract_strided_slice %30 {offsets = [0, 8], sizes = [64, 8], strides = [1, 1]} : vector<64x32xf32> to vector<64x8xf32>
    %56 = vector.extract_strided_slice %31 {offsets = [0, 8], sizes = [64, 8], strides = [1, 1]} : vector<64x32xf32> to vector<64x8xf32>
    %57 = vector.extract_strided_slice %32 {offsets = [0, 8], sizes = [64, 8], strides = [1, 1]} : vector<64x32xf32> to vector<64x8xf32>
    %cst_27 = arith.constant dense<0.000000e+00> : vector<64x64xf32>
    %58 = tpu.matmul %55, %56, %cst_27 {dimension_numbers = #tpu.dot_dimension_numbers<[1], [1], [0], [0], [0, 0, 1, 0], [], []>} : vector<64x8xf32>, vector<64x8xf32>, vector<64x64xf32> -> vector<64x64xf32>
    %cst_28 = arith.constant 0.353553385 : f32
    %59 = vector.broadcast %cst_28 : f32 to vector<64x64xf32>
    %60 = arith.mulf %58, %59 : vector<64x64xf32>
    %cst_29 = arith.constant dense<0xFF800000> : vector<64xf32>
    %61 = vector.multi_reduction <maximumf>, %60, %cst_29 [1] : vector<64x64xf32> to vector<64xf32>
    %62 = vector.shape_cast %61 : vector<64xf32> to vector<64x1xf32>
    %63 = vector.broadcast %62 : vector<64x1xf32> to vector<64x64xf32>
    %64 = arith.subf %60, %63 : vector<64x64xf32>
    %65 = math.exp %64 : vector<64x64xf32>
    %cst_30 = arith.constant dense<0.000000e+00> : vector<64xf32>
    %66 = vector.multi_reduction <add>, %65, %cst_30 [1] : vector<64x64xf32> to vector<64xf32>
    %67 = vector.shape_cast %66 : vector<64xf32> to vector<64x1xf32>
    %cst_31 = arith.constant 1.000000e+00 : f32
    %68 = vector.broadcast %cst_31 : f32 to vector<64x1xf32>
    %69 = arith.divf %68, %67 : vector<64x1xf32>
    %cst_32 = arith.constant dense<0.000000e+00> : vector<64x8xf32>
    %70 = tpu.matmul %65, %57, %cst_32 {dimension_numbers = #tpu.dot_dimension_numbers<[1], [0], [0], [1], [0, 0, 1, 1], [], []>} : vector<64x64xf32>, vector<64x8xf32>, vector<64x8xf32> -> vector<64x8xf32>
    %71 = vector.broadcast %69 : vector<64x1xf32> to vector<64x8xf32>
    %72 = arith.mulf %70, %71 : vector<64x8xf32>
    %73 = vector.extract_strided_slice %28 {offsets = [8, 0], sizes = [8, 32], strides = [1, 1]} : vector<32x32xf32> to vector<8x32xf32>
    %cst_33 = arith.constant dense<0.000000e+00> : vector<64x32xf32>
    %74 = tpu.matmul %72, %73, %cst_33 {dimension_numbers = #tpu.dot_dimension_numbers<[1], [0], [0], [1], [0, 0, 1, 1], [], []>} : vector<64x8xf32>, vector<8x32xf32>, vector<64x32xf32> -> vector<64x32xf32>
    %75 = arith.addf %54, %74 : vector<64x32xf32>
    %76 = vector.extract_strided_slice %30 {offsets = [0, 16], sizes = [64, 8], strides = [1, 1]} : vector<64x32xf32> to vector<64x8xf32>
    %77 = vector.extract_strided_slice %31 {offsets = [0, 16], sizes = [64, 8], strides = [1, 1]} : vector<64x32xf32> to vector<64x8xf32>
    %78 = vector.extract_strided_slice %32 {offsets = [0, 16], sizes = [64, 8], strides = [1, 1]} : vector<64x32xf32> to vector<64x8xf32>
    %cst_34 = arith.constant dense<0.000000e+00> : vector<64x64xf32>
    %79 = tpu.matmul %76, %77, %cst_34 {dimension_numbers = #tpu.dot_dimension_numbers<[1], [1], [0], [0], [0, 0, 1, 0], [], []>} : vector<64x8xf32>, vector<64x8xf32>, vector<64x64xf32> -> vector<64x64xf32>
    %cst_35 = arith.constant 0.353553385 : f32
    %80 = vector.broadcast %cst_35 : f32 to vector<64x64xf32>
    %81 = arith.mulf %79, %80 : vector<64x64xf32>
    %cst_36 = arith.constant dense<0xFF800000> : vector<64xf32>
    %82 = vector.multi_reduction <maximumf>, %81, %cst_36 [1] : vector<64x64xf32> to vector<64xf32>
    %83 = vector.shape_cast %82 : vector<64xf32> to vector<64x1xf32>
    %84 = vector.broadcast %83 : vector<64x1xf32> to vector<64x64xf32>
    %85 = arith.subf %81, %84 : vector<64x64xf32>
    %86 = math.exp %85 : vector<64x64xf32>
    %cst_37 = arith.constant dense<0.000000e+00> : vector<64xf32>
    %87 = vector.multi_reduction <add>, %86, %cst_37 [1] : vector<64x64xf32> to vector<64xf32>
    %88 = vector.shape_cast %87 : vector<64xf32> to vector<64x1xf32>
    %cst_38 = arith.constant 1.000000e+00 : f32
    %89 = vector.broadcast %cst_38 : f32 to vector<64x1xf32>
    %90 = arith.divf %89, %88 : vector<64x1xf32>
    %cst_39 = arith.constant dense<0.000000e+00> : vector<64x8xf32>
    %91 = tpu.matmul %86, %78, %cst_39 {dimension_numbers = #tpu.dot_dimension_numbers<[1], [0], [0], [1], [0, 0, 1, 1], [], []>} : vector<64x64xf32>, vector<64x8xf32>, vector<64x8xf32> -> vector<64x8xf32>
    %92 = vector.broadcast %90 : vector<64x1xf32> to vector<64x8xf32>
    %93 = arith.mulf %91, %92 : vector<64x8xf32>
    %94 = vector.extract_strided_slice %28 {offsets = [16, 0], sizes = [8, 32], strides = [1, 1]} : vector<32x32xf32> to vector<8x32xf32>
    %cst_40 = arith.constant dense<0.000000e+00> : vector<64x32xf32>
    %95 = tpu.matmul %93, %94, %cst_40 {dimension_numbers = #tpu.dot_dimension_numbers<[1], [0], [0], [1], [0, 0, 1, 1], [], []>} : vector<64x8xf32>, vector<8x32xf32>, vector<64x32xf32> -> vector<64x32xf32>
    %96 = arith.addf %75, %95 : vector<64x32xf32>
    %97 = vector.extract_strided_slice %30 {offsets = [0, 24], sizes = [64, 8], strides = [1, 1]} : vector<64x32xf32> to vector<64x8xf32>
    %98 = vector.extract_strided_slice %31 {offsets = [0, 24], sizes = [64, 8], strides = [1, 1]} : vector<64x32xf32> to vector<64x8xf32>
    %99 = vector.extract_strided_slice %32 {offsets = [0, 24], sizes = [64, 8], strides = [1, 1]} : vector<64x32xf32> to vector<64x8xf32>
    %cst_41 = arith.constant dense<0.000000e+00> : vector<64x64xf32>
    %100 = tpu.matmul %97, %98, %cst_41 {dimension_numbers = #tpu.dot_dimension_numbers<[1], [1], [0], [0], [0, 0, 1, 0], [], []>} : vector<64x8xf32>, vector<64x8xf32>, vector<64x64xf32> -> vector<64x64xf32>
    %cst_42 = arith.constant 0.353553385 : f32
    %101 = vector.broadcast %cst_42 : f32 to vector<64x64xf32>
    %102 = arith.mulf %100, %101 : vector<64x64xf32>
    %cst_43 = arith.constant dense<0xFF800000> : vector<64xf32>
    %103 = vector.multi_reduction <maximumf>, %102, %cst_43 [1] : vector<64x64xf32> to vector<64xf32>
    %104 = vector.shape_cast %103 : vector<64xf32> to vector<64x1xf32>
    %105 = vector.broadcast %104 : vector<64x1xf32> to vector<64x64xf32>
    %106 = arith.subf %102, %105 : vector<64x64xf32>
    %107 = math.exp %106 : vector<64x64xf32>
    %cst_44 = arith.constant dense<0.000000e+00> : vector<64xf32>
    %108 = vector.multi_reduction <add>, %107, %cst_44 [1] : vector<64x64xf32> to vector<64xf32>
    %109 = vector.shape_cast %108 : vector<64xf32> to vector<64x1xf32>
    %cst_45 = arith.constant 1.000000e+00 : f32
    %110 = vector.broadcast %cst_45 : f32 to vector<64x1xf32>
    %111 = arith.divf %110, %109 : vector<64x1xf32>
    %cst_46 = arith.constant dense<0.000000e+00> : vector<64x8xf32>
    %112 = tpu.matmul %107, %99, %cst_46 {dimension_numbers = #tpu.dot_dimension_numbers<[1], [0], [0], [1], [0, 0, 1, 1], [], []>} : vector<64x64xf32>, vector<64x8xf32>, vector<64x8xf32> -> vector<64x8xf32>
    %113 = vector.broadcast %111 : vector<64x1xf32> to vector<64x8xf32>
    %114 = arith.mulf %112, %113 : vector<64x8xf32>
    %115 = vector.extract_strided_slice %28 {offsets = [24, 0], sizes = [8, 32], strides = [1, 1]} : vector<32x32xf32> to vector<8x32xf32>
    %cst_47 = arith.constant dense<0.000000e+00> : vector<64x32xf32>
    %116 = tpu.matmul %114, %115, %cst_47 {dimension_numbers = #tpu.dot_dimension_numbers<[1], [0], [0], [1], [0, 0, 1, 1], [], []>} : vector<64x8xf32>, vector<8x32xf32>, vector<64x32xf32> -> vector<64x32xf32>
    %117 = arith.addf %96, %116 : vector<64x32xf32>
    %118 = arith.addf %1, %117 : vector<64x32xf32>
    %c6 = arith.constant 6 : index
    %c0_48 = arith.constant 0 : index
    %119 = vector.load %arg10[%c6, %c0_48] : memref<9x32xf32, #tpu.memory_space<vmem>>, vector<1x32xf32>
    %120 = vector.broadcast %119 : vector<1x32xf32> to vector<64x32xf32>
    %121 = arith.addf %118, %120 : vector<64x32xf32>
    %c2 = arith.constant 2 : index
    %c0_49 = arith.constant 0 : index
    %122 = vector.load %arg10[%c2, %c0_49] : memref<9x32xf32, #tpu.memory_space<vmem>>, vector<1x32xf32>
    %c3 = arith.constant 3 : index
    %c0_50 = arith.constant 0 : index
    %123 = vector.load %arg10[%c3, %c0_50] : memref<9x32xf32, #tpu.memory_space<vmem>>, vector<1x32xf32>
    %cst_51 = arith.constant dense<0.000000e+00> : vector<64xf32>
    %124 = vector.multi_reduction <add>, %121, %cst_51 [1] : vector<64x32xf32> to vector<64xf32>
    %125 = vector.shape_cast %124 : vector<64xf32> to vector<64x1xf32>
    %cst_52 = arith.constant 3.200000e+01 : f32
    %126 = vector.broadcast %cst_52 : f32 to vector<64x1xf32>
    %127 = arith.divf %125, %126 : vector<64x1xf32>
    %128 = vector.broadcast %127 : vector<64x1xf32> to vector<64x32xf32>
    %129 = arith.subf %121, %128 : vector<64x32xf32>
    %130 = arith.mulf %129, %129 : vector<64x32xf32>
    %cst_53 = arith.constant dense<0.000000e+00> : vector<64xf32>
    %131 = vector.multi_reduction <add>, %130, %cst_53 [1] : vector<64x32xf32> to vector<64xf32>
    %132 = vector.shape_cast %131 : vector<64xf32> to vector<64x1xf32>
    %cst_54 = arith.constant 3.200000e+01 : f32
    %133 = vector.broadcast %cst_54 : f32 to vector<64x1xf32>
    %134 = arith.divf %132, %133 : vector<64x1xf32>
    %cst_55 = arith.constant 9.99999974E-6 : f32
    %135 = vector.broadcast %cst_55 : f32 to vector<64x1xf32>
    %136 = arith.addf %134, %135 : vector<64x1xf32>
    %137 = math.rsqrt %136 : vector<64x1xf32>
    %138 = vector.broadcast %137 : vector<64x1xf32> to vector<64x32xf32>
    %139 = arith.mulf %129, %138 : vector<64x32xf32>
    %140 = vector.broadcast %122 : vector<1x32xf32> to vector<64x32xf32>
    %141 = arith.mulf %139, %140 : vector<64x32xf32>
    %142 = vector.broadcast %123 : vector<1x32xf32> to vector<64x32xf32>
    %143 = arith.addf %141, %142 : vector<64x32xf32>
    %c32 = arith.constant 32 : index
    %c0_56 = arith.constant 0 : index
    %144 = vector.load %arg5[%c32, %c0_56] : memref<96x32xf32, #tpu.memory_space<vmem>>, vector<32x32xf32>
    %c64 = arith.constant 64 : index
    %c0_57 = arith.constant 0 : index
    %145 = vector.load %arg5[%c64, %c0_57] : memref<96x32xf32, #tpu.memory_space<vmem>>, vector<32x32xf32>
    %cst_58 = arith.constant dense<0.000000e+00> : vector<64x32xf32>
    %146 = tpu.matmul %143, %144, %cst_58 {dimension_numbers = #tpu.dot_dimension_numbers<[1], [0], [0], [1], [0, 0, 1, 1], [], []>} : vector<64x32xf32>, vector<32x32xf32>, vector<64x32xf32> -> vector<64x32xf32>
    %c0_59 = arith.constant 0 : index
    %c0_60 = arith.constant 0 : index
    %147 = vector.load %arg6[%c0_59, %c0_60] : memref<16x64xf32, #tpu.memory_space<vmem>>, vector<16x64xf32>
    %148 = vector.shape_cast %2 : vector<1x77x16xf32> to vector<77x16xf32>
    %cst_61 = arith.constant dense<0.000000e+00> : vector<77x64xf32>
    %149 = tpu.matmul %148, %147, %cst_61 {dimension_numbers = #tpu.dot_dimension_numbers<[1], [0], [0], [1], [0, 0, 1, 1], [], []>} : vector<77x16xf32>, vector<16x64xf32>, vector<77x64xf32> -> vector<77x64xf32>
    %150 = vector.extract_strided_slice %149 {offsets = [0, 0], sizes = [77, 32], strides = [1, 1]} : vector<77x64xf32> to vector<77x32xf32>
    %151 = vector.extract_strided_slice %149 {offsets = [0, 32], sizes = [77, 32], strides = [1, 1]} : vector<77x64xf32> to vector<77x32xf32>
    %cst_62 = arith.constant 0.000000e+00 : f32
    %152 = vector.broadcast %cst_62 : f32 to vector<64x32xf32>
    %153 = vector.extract_strided_slice %146 {offsets = [0, 0], sizes = [64, 8], strides = [1, 1]} : vector<64x32xf32> to vector<64x8xf32>
    %154 = vector.extract_strided_slice %150 {offsets = [0, 0], sizes = [77, 8], strides = [1, 1]} : vector<77x32xf32> to vector<77x8xf32>
    %155 = vector.extract_strided_slice %151 {offsets = [0, 0], sizes = [77, 8], strides = [1, 1]} : vector<77x32xf32> to vector<77x8xf32>
    %cst_63 = arith.constant dense<0.000000e+00> : vector<64x77xf32>
    %156 = tpu.matmul %153, %154, %cst_63 {dimension_numbers = #tpu.dot_dimension_numbers<[1], [1], [0], [0], [0, 0, 1, 0], [], []>} : vector<64x8xf32>, vector<77x8xf32>, vector<64x77xf32> -> vector<64x77xf32>
    %cst_64 = arith.constant 0.353553385 : f32
    %157 = vector.broadcast %cst_64 : f32 to vector<64x77xf32>
    %158 = arith.mulf %156, %157 : vector<64x77xf32>
    %cst_65 = arith.constant dense<0xFF800000> : vector<64xf32>
    %159 = vector.multi_reduction <maximumf>, %158, %cst_65 [1] : vector<64x77xf32> to vector<64xf32>
    %160 = vector.shape_cast %159 : vector<64xf32> to vector<64x1xf32>
    %161 = vector.broadcast %160 : vector<64x1xf32> to vector<64x77xf32>
    %162 = arith.subf %158, %161 : vector<64x77xf32>
    %163 = math.exp %162 : vector<64x77xf32>
    %cst_66 = arith.constant dense<0.000000e+00> : vector<64xf32>
    %164 = vector.multi_reduction <add>, %163, %cst_66 [1] : vector<64x77xf32> to vector<64xf32>
    %165 = vector.shape_cast %164 : vector<64xf32> to vector<64x1xf32>
    %cst_67 = arith.constant 1.000000e+00 : f32
    %166 = vector.broadcast %cst_67 : f32 to vector<64x1xf32>
    %167 = arith.divf %166, %165 : vector<64x1xf32>
    %cst_68 = arith.constant dense<0.000000e+00> : vector<64x8xf32>
    %168 = tpu.matmul %163, %155, %cst_68 {dimension_numbers = #tpu.dot_dimension_numbers<[1], [0], [0], [1], [0, 0, 1, 1], [], []>} : vector<64x77xf32>, vector<77x8xf32>, vector<64x8xf32> -> vector<64x8xf32>
    %169 = vector.broadcast %167 : vector<64x1xf32> to vector<64x8xf32>
    %170 = arith.mulf %168, %169 : vector<64x8xf32>
    %171 = vector.extract_strided_slice %145 {offsets = [0, 0], sizes = [8, 32], strides = [1, 1]} : vector<32x32xf32> to vector<8x32xf32>
    %cst_69 = arith.constant dense<0.000000e+00> : vector<64x32xf32>
    %172 = tpu.matmul %170, %171, %cst_69 {dimension_numbers = #tpu.dot_dimension_numbers<[1], [0], [0], [1], [0, 0, 1, 1], [], []>} : vector<64x8xf32>, vector<8x32xf32>, vector<64x32xf32> -> vector<64x32xf32>
    %173 = arith.addf %152, %172 : vector<64x32xf32>
    %174 = vector.extract_strided_slice %146 {offsets = [0, 8], sizes = [64, 8], strides = [1, 1]} : vector<64x32xf32> to vector<64x8xf32>
    %175 = vector.extract_strided_slice %150 {offsets = [0, 8], sizes = [77, 8], strides = [1, 1]} : vector<77x32xf32> to vector<77x8xf32>
    %176 = vector.extract_strided_slice %151 {offsets = [0, 8], sizes = [77, 8], strides = [1, 1]} : vector<77x32xf32> to vector<77x8xf32>
    %cst_70 = arith.constant dense<0.000000e+00> : vector<64x77xf32>
    %177 = tpu.matmul %174, %175, %cst_70 {dimension_numbers = #tpu.dot_dimension_numbers<[1], [1], [0], [0], [0, 0, 1, 0], [], []>} : vector<64x8xf32>, vector<77x8xf32>, vector<64x77xf32> -> vector<64x77xf32>
    %cst_71 = arith.constant 0.353553385 : f32
    %178 = vector.broadcast %cst_71 : f32 to vector<64x77xf32>
    %179 = arith.mulf %177, %178 : vector<64x77xf32>
    %cst_72 = arith.constant dense<0xFF800000> : vector<64xf32>
    %180 = vector.multi_reduction <maximumf>, %179, %cst_72 [1] : vector<64x77xf32> to vector<64xf32>
    %181 = vector.shape_cast %180 : vector<64xf32> to vector<64x1xf32>
    %182 = vector.broadcast %181 : vector<64x1xf32> to vector<64x77xf32>
    %183 = arith.subf %179, %182 : vector<64x77xf32>
    %184 = math.exp %183 : vector<64x77xf32>
    %cst_73 = arith.constant dense<0.000000e+00> : vector<64xf32>
    %185 = vector.multi_reduction <add>, %184, %cst_73 [1] : vector<64x77xf32> to vector<64xf32>
    %186 = vector.shape_cast %185 : vector<64xf32> to vector<64x1xf32>
    %cst_74 = arith.constant 1.000000e+00 : f32
    %187 = vector.broadcast %cst_74 : f32 to vector<64x1xf32>
    %188 = arith.divf %187, %186 : vector<64x1xf32>
    %cst_75 = arith.constant dense<0.000000e+00> : vector<64x8xf32>
    %189 = tpu.matmul %184, %176, %cst_75 {dimension_numbers = #tpu.dot_dimension_numbers<[1], [0], [0], [1], [0, 0, 1, 1], [], []>} : vector<64x77xf32>, vector<77x8xf32>, vector<64x8xf32> -> vector<64x8xf32>
    %190 = vector.broadcast %188 : vector<64x1xf32> to vector<64x8xf32>
    %191 = arith.mulf %189, %190 : vector<64x8xf32>
    %192 = vector.extract_strided_slice %145 {offsets = [8, 0], sizes = [8, 32], strides = [1, 1]} : vector<32x32xf32> to vector<8x32xf32>
    %cst_76 = arith.constant dense<0.000000e+00> : vector<64x32xf32>
    %193 = tpu.matmul %191, %192, %cst_76 {dimension_numbers = #tpu.dot_dimension_numbers<[1], [0], [0], [1], [0, 0, 1, 1], [], []>} : vector<64x8xf32>, vector<8x32xf32>, vector<64x32xf32> -> vector<64x32xf32>
    %194 = arith.addf %173, %193 : vector<64x32xf32>
    %195 = vector.extract_strided_slice %146 {offsets = [0, 16], sizes = [64, 8], strides = [1, 1]} : vector<64x32xf32> to vector<64x8xf32>
    %196 = vector.extract_strided_slice %150 {offsets = [0, 16], sizes = [77, 8], strides = [1, 1]} : vector<77x32xf32> to vector<77x8xf32>
    %197 = vector.extract_strided_slice %151 {offsets = [0, 16], sizes = [77, 8], strides = [1, 1]} : vector<77x32xf32> to vector<77x8xf32>
    %cst_77 = arith.constant dense<0.000000e+00> : vector<64x77xf32>
    %198 = tpu.matmul %195, %196, %cst_77 {dimension_numbers = #tpu.dot_dimension_numbers<[1], [1], [0], [0], [0, 0, 1, 0], [], []>} : vector<64x8xf32>, vector<77x8xf32>, vector<64x77xf32> -> vector<64x77xf32>
    %cst_78 = arith.constant 0.353553385 : f32
    %199 = vector.broadcast %cst_78 : f32 to vector<64x77xf32>
    %200 = arith.mulf %198, %199 : vector<64x77xf32>
    %cst_79 = arith.constant dense<0xFF800000> : vector<64xf32>
    %201 = vector.multi_reduction <maximumf>, %200, %cst_79 [1] : vector<64x77xf32> to vector<64xf32>
    %202 = vector.shape_cast %201 : vector<64xf32> to vector<64x1xf32>
    %203 = vector.broadcast %202 : vector<64x1xf32> to vector<64x77xf32>
    %204 = arith.subf %200, %203 : vector<64x77xf32>
    %205 = math.exp %204 : vector<64x77xf32>
    %cst_80 = arith.constant dense<0.000000e+00> : vector<64xf32>
    %206 = vector.multi_reduction <add>, %205, %cst_80 [1] : vector<64x77xf32> to vector<64xf32>
    %207 = vector.shape_cast %206 : vector<64xf32> to vector<64x1xf32>
    %cst_81 = arith.constant 1.000000e+00 : f32
    %208 = vector.broadcast %cst_81 : f32 to vector<64x1xf32>
    %209 = arith.divf %208, %207 : vector<64x1xf32>
    %cst_82 = arith.constant dense<0.000000e+00> : vector<64x8xf32>
    %210 = tpu.matmul %205, %197, %cst_82 {dimension_numbers = #tpu.dot_dimension_numbers<[1], [0], [0], [1], [0, 0, 1, 1], [], []>} : vector<64x77xf32>, vector<77x8xf32>, vector<64x8xf32> -> vector<64x8xf32>
    %211 = vector.broadcast %209 : vector<64x1xf32> to vector<64x8xf32>
    %212 = arith.mulf %210, %211 : vector<64x8xf32>
    %213 = vector.extract_strided_slice %145 {offsets = [16, 0], sizes = [8, 32], strides = [1, 1]} : vector<32x32xf32> to vector<8x32xf32>
    %cst_83 = arith.constant dense<0.000000e+00> : vector<64x32xf32>
    %214 = tpu.matmul %212, %213, %cst_83 {dimension_numbers = #tpu.dot_dimension_numbers<[1], [0], [0], [1], [0, 0, 1, 1], [], []>} : vector<64x8xf32>, vector<8x32xf32>, vector<64x32xf32> -> vector<64x32xf32>
    %215 = arith.addf %194, %214 : vector<64x32xf32>
    %216 = vector.extract_strided_slice %146 {offsets = [0, 24], sizes = [64, 8], strides = [1, 1]} : vector<64x32xf32> to vector<64x8xf32>
    %217 = vector.extract_strided_slice %150 {offsets = [0, 24], sizes = [77, 8], strides = [1, 1]} : vector<77x32xf32> to vector<77x8xf32>
    %218 = vector.extract_strided_slice %151 {offsets = [0, 24], sizes = [77, 8], strides = [1, 1]} : vector<77x32xf32> to vector<77x8xf32>
    %cst_84 = arith.constant dense<0.000000e+00> : vector<64x77xf32>
    %219 = tpu.matmul %216, %217, %cst_84 {dimension_numbers = #tpu.dot_dimension_numbers<[1], [1], [0], [0], [0, 0, 1, 0], [], []>} : vector<64x8xf32>, vector<77x8xf32>, vector<64x77xf32> -> vector<64x77xf32>
    %cst_85 = arith.constant 0.353553385 : f32
    %220 = vector.broadcast %cst_85 : f32 to vector<64x77xf32>
    %221 = arith.mulf %219, %220 : vector<64x77xf32>
    %cst_86 = arith.constant dense<0xFF800000> : vector<64xf32>
    %222 = vector.multi_reduction <maximumf>, %221, %cst_86 [1] : vector<64x77xf32> to vector<64xf32>
    %223 = vector.shape_cast %222 : vector<64xf32> to vector<64x1xf32>
    %224 = vector.broadcast %223 : vector<64x1xf32> to vector<64x77xf32>
    %225 = arith.subf %221, %224 : vector<64x77xf32>
    %226 = math.exp %225 : vector<64x77xf32>
    %cst_87 = arith.constant dense<0.000000e+00> : vector<64xf32>
    %227 = vector.multi_reduction <add>, %226, %cst_87 [1] : vector<64x77xf32> to vector<64xf32>
    %228 = vector.shape_cast %227 : vector<64xf32> to vector<64x1xf32>
    %cst_88 = arith.constant 1.000000e+00 : f32
    %229 = vector.broadcast %cst_88 : f32 to vector<64x1xf32>
    %230 = arith.divf %229, %228 : vector<64x1xf32>
    %cst_89 = arith.constant dense<0.000000e+00> : vector<64x8xf32>
    %231 = tpu.matmul %226, %218, %cst_89 {dimension_numbers = #tpu.dot_dimension_numbers<[1], [0], [0], [1], [0, 0, 1, 1], [], []>} : vector<64x77xf32>, vector<77x8xf32>, vector<64x8xf32> -> vector<64x8xf32>
    %232 = vector.broadcast %230 : vector<64x1xf32> to vector<64x8xf32>
    %233 = arith.mulf %231, %232 : vector<64x8xf32>
    %234 = vector.extract_strided_slice %145 {offsets = [24, 0], sizes = [8, 32], strides = [1, 1]} : vector<32x32xf32> to vector<8x32xf32>
    %cst_90 = arith.constant dense<0.000000e+00> : vector<64x32xf32>
    %235 = tpu.matmul %233, %234, %cst_90 {dimension_numbers = #tpu.dot_dimension_numbers<[1], [0], [0], [1], [0, 0, 1, 1], [], []>} : vector<64x8xf32>, vector<8x32xf32>, vector<64x32xf32> -> vector<64x32xf32>
    %236 = arith.addf %215, %235 : vector<64x32xf32>
    %237 = arith.addf %121, %236 : vector<64x32xf32>
    %c7 = arith.constant 7 : index
    %c0_91 = arith.constant 0 : index
    %238 = vector.load %arg10[%c7, %c0_91] : memref<9x32xf32, #tpu.memory_space<vmem>>, vector<1x32xf32>
    %239 = vector.broadcast %238 : vector<1x32xf32> to vector<64x32xf32>
    %240 = arith.addf %237, %239 : vector<64x32xf32>
    %c4 = arith.constant 4 : index
    %c0_92 = arith.constant 0 : index
    %241 = vector.load %arg10[%c4, %c0_92] : memref<9x32xf32, #tpu.memory_space<vmem>>, vector<1x32xf32>
    %c5 = arith.constant 5 : index
    %c0_93 = arith.constant 0 : index
    %242 = vector.load %arg10[%c5, %c0_93] : memref<9x32xf32, #tpu.memory_space<vmem>>, vector<1x32xf32>
    %cst_94 = arith.constant dense<0.000000e+00> : vector<64xf32>
    %243 = vector.multi_reduction <add>, %240, %cst_94 [1] : vector<64x32xf32> to vector<64xf32>
    %244 = vector.shape_cast %243 : vector<64xf32> to vector<64x1xf32>
    %cst_95 = arith.constant 3.200000e+01 : f32
    %245 = vector.broadcast %cst_95 : f32 to vector<64x1xf32>
    %246 = arith.divf %244, %245 : vector<64x1xf32>
    %247 = vector.broadcast %246 : vector<64x1xf32> to vector<64x32xf32>
    %248 = arith.subf %240, %247 : vector<64x32xf32>
    %249 = arith.mulf %248, %248 : vector<64x32xf32>
    %cst_96 = arith.constant dense<0.000000e+00> : vector<64xf32>
    %250 = vector.multi_reduction <add>, %249, %cst_96 [1] : vector<64x32xf32> to vector<64xf32>
    %251 = vector.shape_cast %250 : vector<64xf32> to vector<64x1xf32>
    %cst_97 = arith.constant 3.200000e+01 : f32
    %252 = vector.broadcast %cst_97 : f32 to vector<64x1xf32>
    %253 = arith.divf %251, %252 : vector<64x1xf32>
    %cst_98 = arith.constant 9.99999974E-6 : f32
    %254 = vector.broadcast %cst_98 : f32 to vector<64x1xf32>
    %255 = arith.addf %253, %254 : vector<64x1xf32>
    %256 = math.rsqrt %255 : vector<64x1xf32>
    %257 = vector.broadcast %256 : vector<64x1xf32> to vector<64x32xf32>
    %258 = arith.mulf %248, %257 : vector<64x32xf32>
    %259 = vector.broadcast %241 : vector<1x32xf32> to vector<64x32xf32>
    %260 = arith.mulf %258, %259 : vector<64x32xf32>
    %261 = vector.broadcast %242 : vector<1x32xf32> to vector<64x32xf32>
    %262 = arith.addf %260, %261 : vector<64x32xf32>
    %c0_99 = arith.constant 0 : index
    %c0_100 = arith.constant 0 : index
    %263 = vector.load %arg7[%c0_99, %c0_100] : memref<32x256xf32, #tpu.memory_space<vmem>>, vector<32x256xf32>
    %cst_101 = arith.constant dense<0.000000e+00> : vector<64x256xf32>
    %264 = tpu.matmul %262, %263, %cst_101 {dimension_numbers = #tpu.dot_dimension_numbers<[1], [0], [0], [1], [0, 0, 1, 1], [], []>} : vector<64x32xf32>, vector<32x256xf32>, vector<64x256xf32> -> vector<64x256xf32>
    %c0_102 = arith.constant 0 : index
    %c0_103 = arith.constant 0 : index
    %265 = vector.load %arg8[%c0_102, %c0_103] : memref<1x256xf32, #tpu.memory_space<vmem>>, vector<1x256xf32>
    %266 = vector.broadcast %265 : vector<1x256xf32> to vector<64x256xf32>
    %267 = arith.addf %264, %266 : vector<64x256xf32>
    %268 = vector.extract_strided_slice %267 {offsets = [0, 0], sizes = [64, 128], strides = [1, 1]} : vector<64x256xf32> to vector<64x128xf32>
    %269 = vector.extract_strided_slice %267 {offsets = [0, 128], sizes = [64, 128], strides = [1, 1]} : vector<64x256xf32> to vector<64x128xf32>
    %cst_104 = arith.constant 5.000000e-01 : f32
    %270 = vector.broadcast %cst_104 : f32 to vector<64x128xf32>
    %271 = arith.mulf %270, %269 : vector<64x128xf32>
    %cst_105 = arith.constant 0.707106769 : f32
    %272 = vector.broadcast %cst_105 : f32 to vector<64x128xf32>
    %273 = arith.mulf %269, %272 : vector<64x128xf32>
    %274 = math.erf %273 : vector<64x128xf32>
    %cst_106 = arith.constant 1.000000e+00 : f32
    %275 = vector.broadcast %cst_106 : f32 to vector<64x128xf32>
    %276 = arith.addf %275, %274 : vector<64x128xf32>
    %277 = arith.mulf %271, %276 : vector<64x128xf32>
    %278 = arith.mulf %268, %277 : vector<64x128xf32>
    %c0_107 = arith.constant 0 : index
    %c0_108 = arith.constant 0 : index
    %279 = vector.load %arg9[%c0_107, %c0_108] : memref<128x32xf32, #tpu.memory_space<vmem>>, vector<128x32xf32>
    %cst_109 = arith.constant dense<0.000000e+00> : vector<64x32xf32>
    %280 = tpu.matmul %278, %279, %cst_109 {dimension_numbers = #tpu.dot_dimension_numbers<[1], [0], [0], [1], [0, 0, 1, 1], [], []>} : vector<64x128xf32>, vector<128x32xf32>, vector<64x32xf32> -> vector<64x32xf32>
    %281 = arith.addf %240, %280 : vector<64x32xf32>
    %c8 = arith.constant 8 : index
    %c0_110 = arith.constant 0 : index
    %282 = vector.load %arg10[%c8, %c0_110] : memref<9x32xf32, #tpu.memory_space<vmem>>, vector<1x32xf32>
    %283 = vector.broadcast %282 : vector<1x32xf32> to vector<64x32xf32>
    %284 = arith.addf %281, %283 : vector<64x32xf32>
    %285 = vector.shape_cast %284 : vector<64x32xf32> to vector<1x64x32xf32>
    %c0_111 = arith.constant 0 : index
    %c0_112 = arith.constant 0 : index
    %c0_113 = arith.constant 0 : index
    %286 = vector.load %arg11[%c0_111, %c0_112, %c0_113] : memref<1x64x32xf32, #tpu.memory_space<vmem>>, vector<1x64x32xf32>
    tpu.vector_store %arg11[%c0_111, %c0_112, %c0_113], %285 {strides = array<i32>} : memref<1x64x32xf32, #tpu.memory_space<vmem>>, vector<1x64x32xf32>,
    return
  }
  func.func @transform_0(%arg0: i32) -> (i32, i32, i32) {
    %c0_i32 = arith.constant 0 : i32
    %c0_i32_0 = arith.constant 0 : i32
    %c0_i32_1 = arith.constant 0 : i32
    return %arg0, %c0_i32, %c0_i32_0 : i32, i32, i32
  }
  func.func @transform_1(%arg0: i32) -> (i32, i32, i32) {
    %c0_i32 = arith.constant 0 : i32
    %c0_i32_0 = arith.constant 0 : i32
    %c0_i32_1 = arith.constant 0 : i32
    return %arg0, %c0_i32, %c0_i32_0 : i32, i32, i32
  }
  func.func @transform_2(%arg0: i32) -> (i32, i32) {
    %c0_i32 = arith.constant 0 : i32
    %c0_i32_0 = arith.constant 0 : i32
    %c0_i32_1 = arith.constant 0 : i32
    return %c0_i32, %c0_i32_0 : i32, i32
  }
  func.func @transform_3(%arg0: i32) -> (i32, i32) {
    %c0_i32 = arith.constant 0 : i32
    %c0_i32_0 = arith.constant 0 : i32
    %c0_i32_1 = arith.constant 0 : i32
    return %c0_i32, %c0_i32_0 : i32, i32
  }
  func.func @transform_4(%arg0: i32) -> (i32, i32) {
    %c0_i32 = arith.constant 0 : i32
    %c0_i32_0 = arith.constant 0 : i32
    %c0_i32_1 = arith.constant 0 : i32
    return %c0_i32, %c0_i32_0 : i32, i32
  }
  func.func @transform_5(%arg0: i32) -> (i32, i32) {
    %c0_i32 = arith.constant 0 : i32
    %c0_i32_0 = arith.constant 0 : i32
    %c0_i32_1 = arith.constant 0 : i32
    return %c0_i32, %c0_i32_0 : i32, i32
  }
  func.func @transform_6(%arg0: i32) -> (i32, i32) {
    %c0_i32 = arith.constant 0 : i32
    %c0_i32_0 = arith.constant 0 : i32
    %c0_i32_1 = arith.constant 0 : i32
    return %c0_i32, %c0_i32_0 : i32, i32
  }
  func.func @transform_7(%arg0: i32) -> (i32, i32) {
    %c0_i32 = arith.constant 0 : i32
    %c0_i32_0 = arith.constant 0 : i32
    %c0_i32_1 = arith.constant 0 : i32
    return %c0_i32, %c0_i32_0 : i32, i32
  }
  func.func @transform_8(%arg0: i32) -> (i32, i32) {
    %c0_i32 = arith.constant 0 : i32
    %c0_i32_0 = arith.constant 0 : i32
    %c0_i32_1 = arith.constant 0 : i32
    return %c0_i32, %c0_i32_0 : i32, i32
  }
  func.func @transform_9(%arg0: i32) -> (i32, i32) {
    %c0_i32 = arith.constant 0 : i32
    %c0_i32_0 = arith.constant 0 : i32
    %c0_i32_1 = arith.constant 0 : i32
    return %c0_i32, %c0_i32_0 : i32, i32
  }
  func.func @transform_10(%arg0: i32) -> (i32, i32, i32) {
    %c0_i32 = arith.constant 0 : i32
    %c0_i32_0 = arith.constant 0 : i32
    %c0_i32_1 = arith.constant 0 : i32
    return %arg0, %c0_i32, %c0_i32_0 : i32, i32, i32
  }
}

</mosaic_0001>

<llo_original>
// kernel: hybrid_transformer_block.1
$region0: #{hybrid_transformer_block.1}
  #allocation0 [shape = 'u32[]', space=smem, size = 0x4, offset = 0x4, fixed_abs, tag = 'smem constant byte address 0x4 - core index']
  #allocation1 [shape = 'u32[72,128]{1,0:T(1,128)}', space=vmem, size = 0x9000, scoped, tag = 'internal scratch']
  %s0 = inlined_call_operand.vmem [shape: f32[2,64,32], index: 0, kind: input, shape index: {}]
  %s1 = inlined_call_operand.vmem [shape: f32[2,77,16], index: 1, kind: input, shape index: {}]
  %s2 = inlined_call_operand.vmem [shape: f32[32,96], index: 2, kind: input, shape index: {}]
  %s3 = inlined_call_operand.vmem [shape: f32[64,96], index: 3, kind: input, shape index: {}]
  %s4 = inlined_call_operand.vmem [shape: f32[96,32], index: 4, kind: input, shape index: {}]
  %s5 = inlined_call_operand.vmem [shape: f32[16,64], index: 5, kind: input, shape index: {}]
  %s6 = inlined_call_operand.vmem [shape: f32[32,256], index: 6, kind: input, shape index: {}]
  %s7 = inlined_call_operand.vmem [shape: f32[1,256], index: 7, kind: input, shape index: {}]
  %s8 = inlined_call_operand.vmem [shape: f32[128,32], index: 8, kind: input, shape index: {}]
  %s9 = inlined_call_operand.vmem [shape: f32[9,32], index: 9, kind: input, shape index: {}]
  %s10 = inlined_call_operand.vmem [shape: f32[2,64,32], index: 10, kind: output, shape index: {}]
  %s11 = sld [smem:[#allocation0]]
  $region73: #{hybrid_transformer_block.1} parent=0
    _
  %s13 = ssub.s32 1, %s11
  %s14 = scalar_select 0, %s13, %s11
  loop: start=0, step=1, limit=4
  $region2: #{hybrid_transformer_block.1} parent=0 // loop_pre_header
    _
  $region3: #{hybrid_transformer_block.1} parent=0 // loop_header
    %s16 = sphi 0, %s20
    %p17 = scmp.ge.s32.totalorder %s16, 4
    %s26 = sphi 0, %s28
    %s29 = sphi 0, %s26
    %s30 = sphi 0, %s29
    %s46 = sphi 0, %s30
    %s52 = sphi 0, %s54
    %s55 = sphi 0, %s52
    %s56 = sphi 0, %s55
    %s72 = sphi 0, %s56
    %s76 = sphi 0, %s76
    %s78 = sphi 0, %s76
    %s79 = sphi 0, %s78
    %s93 = sphi 0, %s79
    %s97 = sphi 0, %s97
    %s99 = sphi 0, %s97
    %s100 = sphi 0, %s99
    %s114 = sphi 0, %s100
    %s118 = sphi 0, %s118
    %s120 = sphi 0, %s118
    %s121 = sphi 0, %s120
    %s135 = sphi 0, %s121
    %s139 = sphi 0, %s139
    %s141 = sphi 0, %s139
    %s142 = sphi 0, %s141
    %s156 = sphi 0, %s142
    %s160 = sphi 0, %s160
    %s162 = sphi 0, %s160
    %s163 = sphi 0, %s162
    %s177 = sphi 0, %s163
    %s181 = sphi 0, %s181
    %s183 = sphi 0, %s181
    %s184 = sphi 0, %s183
    %s198 = sphi 0, %s184
    %s202 = sphi 0, %s202
    %s204 = sphi 0, %s202
    %s205 = sphi 0, %s204
    %s219 = sphi 0, %s205
    %s223 = sphi 0, %s223
    %s225 = sphi 0, %s223
    %s226 = sphi 0, %s225
    %s240 = sphi 0, %s226
    %s246 = sphi 0, %s248
    %s249 = sphi 0, %s246
    %s250 = sphi 0, %s249
    %s266 = sphi 0, %s250
  $region4: #{hybrid_transformer_block.1} parent=0 // loop_header_branch
    %19 = sbr.rel (%p17) target = $region8
  $region5: #{hybrid_transformer_block.1} parent=0 // loop_body
    %s21 = ssub.s32 %s16, 1
    %s22 = ssub.s32 %s16, 2
    %s23 = sadd.s32 %s16, 1
    %s24 = ssub.s32 %s16, %s23
    %p25 = scmp.eq.s32.totalorder %s24, 0
    %s27 = sadd.s32 %s26, 1
    %s28 = scalar_select %p25, %s26, %s27
    %p31 = pneg %p25
    %p32 = scmp.eq.s32.totalorder %s16, 1
    %p33 = por %p31, %p32
    %p34 = scmp.ne.s32.totalorder %s26, %s29
    %p35 = scmp.eq.s32.totalorder %s16, 0
    %p36 = por %p34, %p35
    %p37 = scmp.ne.s32.totalorder %s26, %s29
    %p38 = scmp.eq.s32.totalorder %s21, 1
    %p39 = por %p37, %p38
    %p40 = scmp.ne.s32.totalorder %s29, %s30
    %p41 = scmp.eq.s32.totalorder %s21, 0
    %p42 = por %p40, %p41
    %p43 = scmp.ne.s32.totalorder %s29, %s30
    %p44 = scmp.eq.s32.totalorder %s22, 1
    %p45 = por %p43, %p44
    %p47 = scmp.ne.s32.totalorder %s30, %s46
    %p48 = scmp.eq.s32.totalorder %s22, 0
    %p49 = por %p47, %p48
    %s50 = ssub.s32 %s16, %s23
    %p51 = scmp.eq.s32.totalorder %s50, 0
    %s53 = sadd.s32 %s52, 1
    %s54 = scalar_select %p51, %s52, %s53
    %p57 = pneg %p51
    %p58 = scmp.eq.s32.totalorder %s16, 1
    %p59 = por %p57, %p58
    %p60 = scmp.ne.s32.totalorder %s52, %s55
    %p61 = scmp.eq.s32.totalorder %s16, 0
    %p62 = por %p60, %p61
    %p63 = scmp.ne.s32.totalorder %s52, %s55
    %p64 = scmp.eq.s32.totalorder %s21, 1
    %p65 = por %p63, %p64
    %p66 = scmp.ne.s32.totalorder %s55, %s56
    %p67 = scmp.eq.s32.totalorder %s21, 0
    %p68 = por %p66, %p67
    %p69 = scmp.ne.s32.totalorder %s55, %s56
    %p70 = scmp.eq.s32.totalorder %s22, 1
    %p71 = por %p69, %p70
    %p73 = scmp.ne.s32.totalorder %s56, %s72
    %p74 = scmp.eq.s32.totalorder %s22, 0
    %p75 = por %p73, %p74
    %s77 = sadd.s32 %s76, 1
    %p80 = scmp.eq.s32.totalorder %s16, 1
    %p81 = scmp.ne.s32.totalorder %s76, %s78
    %p82 = scmp.eq.s32.totalorder %s16, 0
    %p83 = por %p81, %p82
    %p84 = scmp.ne.s32.totalorder %s76, %s78
    %p85 = scmp.eq.s32.totalorder %s21, 1
    %p86 = por %p84, %p85
    %p87 = scmp.ne.s32.totalorder %s78, %s79
    %p88 = scmp.eq.s32.totalorder %s21, 0
    %p89 = por %p87, %p88
    %p90 = scmp.ne.s32.totalorder %s78, %s79
    %p91 = scmp.eq.s32.totalorder %s22, 1
    %p92 = por %p90, %p91
    %p94 = scmp.ne.s32.totalorder %s79, %s93
    %p95 = scmp.eq.s32.totalorder %s22, 0
    %p96 = por %p94, %p95
    %s98 = sadd.s32 %s97, 1
    %p101 = scmp.eq.s32.totalorder %s16, 1
    %p102 = scmp.ne.s32.totalorder %s97, %s99
    %p103 = scmp.eq.s32.totalorder %s16, 0
    %p104 = por %p102, %p103
    %p105 = scmp.ne.s32.totalorder %s97, %s99
    %p106 = scmp.eq.s32.totalorder %s21, 1
    %p107 = por %p105, %p106
    %p108 = scmp.ne.s32.totalorder %s99, %s100
    %p109 = scmp.eq.s32.totalorder %s21, 0
    %p110 = por %p108, %p109
    %p111 = scmp.ne.s32.totalorder %s99, %s100
    %p112 = scmp.eq.s32.totalorder %s22, 1
    %p113 = por %p111, %p112
    %p115 = scmp.ne.s32.totalorder %s100, %s114
    %p116 = scmp.eq.s32.totalorder %s22, 0
    %p117 = por %p115, %p116
    %s119 = sadd.s32 %s118, 1
    %p122 = scmp.eq.s32.totalorder %s16, 1
    %p123 = scmp.ne.s32.totalorder %s118, %s120
    %p124 = scmp.eq.s32.totalorder %s16, 0
    %p125 = por %p123, %p124
    %p126 = scmp.ne.s32.totalorder %s118, %s120
    %p127 = scmp.eq.s32.totalorder %s21, 1
    %p128 = por %p126, %p127
    %p129 = scmp.ne.s32.totalorder %s120, %s121
    %p130 = scmp.eq.s32.totalorder %s21, 0
    %p131 = por %p129, %p130
    %p132 = scmp.ne.s32.totalorder %s120, %s121
    %p133 = scmp.eq.s32.totalorder %s22, 1
    %p134 = por %p132, %p133
    %p136 = scmp.ne.s32.totalorder %s121, %s135
    %p137 = scmp.eq.s32.totalorder %s22, 0
    %p138 = por %p136, %p137
    %s140 = sadd.s32 %s139, 1
    %p143 = scmp.eq.s32.totalorder %s16, 1
    %p144 = scmp.ne.s32.totalorder %s139, %s141
    %p145 = scmp.eq.s32.totalorder %s16, 0
    %p146 = por %p144, %p145
    %p147 = scmp.ne.s32.totalorder %s139, %s141
    %p148 = scmp.eq.s32.totalorder %s21, 1
    %p149 = por %p147, %p148
    %p150 = scmp.ne.s32.totalorder %s141, %s142
    %p151 = scmp.eq.s32.totalorder %s21, 0
    %p152 = por %p150, %p151
    %p153 = scmp.ne.s32.totalorder %s141, %s142
    %p154 = scmp.eq.s32.totalorder %s22, 1
    %p155 = por %p153, %p154
    %p157 = scmp.ne.s32.totalorder %s142, %s156
    %p158 = scmp.eq.s32.totalorder %s22, 0
    %p159 = por %p157, %p158
    %s161 = sadd.s32 %s160, 1
    %p164 = scmp.eq.s32.totalorder %s16, 1
    %p165 = scmp.ne.s32.totalorder %s160, %s162
    %p166 = scmp.eq.s32.totalorder %s16, 0
    %p167 = por %p165, %p166
    %p168 = scmp.ne.s32.totalorder %s160, %s162
    %p169 = scmp.eq.s32.totalorder %s21, 1
    %p170 = por %p168, %p169
    %p171 = scmp.ne.s32.totalorder %s162, %s163
    %p172 = scmp.eq.s32.totalorder %s21, 0
    %p173 = por %p171, %p172
    %p174 = scmp.ne.s32.totalorder %s162, %s163
    %p175 = scmp.eq.s32.totalorder %s22, 1
    %p176 = por %p174, %p175
    %p178 = scmp.ne.s32.totalorder %s163, %s177
    %p179 = scmp.eq.s32.totalorder %s22, 0
    %p180 = por %p178, %p179
    %s182 = sadd.s32 %s181, 1
    %p185 = scmp.eq.s32.totalorder %s16, 1
    %p186 = scmp.ne.s32.totalorder %s181, %s183
    %p187 = scmp.eq.s32.totalorder %s16, 0
    %p188 = por %p186, %p187
    %p189 = scmp.ne.s32.totalorder %s181, %s183
    %p190 = scmp.eq.s32.totalorder %s21, 1
    %p191 = por %p189, %p190
    %p192 = scmp.ne.s32.totalorder %s183, %s184
    %p193 = scmp.eq.s32.totalorder %s21, 0
    %p194 = por %p192, %p193
    %p195 = scmp.ne.s32.totalorder %s183, %s184
    %p196 = scmp.eq.s32.totalorder %s22, 1
    %p197 = por %p195, %p196
    %p199 = scmp.ne.s32.totalorder %s184, %s198
    %p200 = scmp.eq.s32.totalorder %s22, 0
    %p201 = por %p199, %p200
    %s203 = sadd.s32 %s202, 1
    %p206 = scmp.eq.s32.totalorder %s16, 1
    %p207 = scmp.ne.s32.totalorder %s202, %s204
    %p208 = scmp.eq.s32.totalorder %s16, 0
    %p209 = por %p207, %p208
    %p210 = scmp.ne.s32.totalorder %s202, %s204
    %p211 = scmp.eq.s32.totalorder %s21, 1
    %p212 = por %p210, %p211
    %p213 = scmp.ne.s32.totalorder %s204, %s205
    %p214 = scmp.eq.s32.totalorder %s21, 0
    %p215 = por %p213, %p214
    %p216 = scmp.ne.s32.totalorder %s204, %s205
    %p217 = scmp.eq.s32.totalorder %s22, 1
    %p218 = por %p216, %p217
    %p220 = scmp.ne.s32.totalorder %s205, %s219
    %p221 = scmp.eq.s32.totalorder %s22, 0
    %p222 = por %p220, %p221
    %s224 = sadd.s32 %s223, 1
    %p227 = scmp.eq.s32.totalorder %s16, 1
    %p228 = scmp.ne.s32.totalorder %s223, %s225
    %p229 = scmp.eq.s32.totalorder %s16, 0
    %p230 = por %p228, %p229
    %p231 = scmp.ne.s32.totalorder %s223, %s225
    %p232 = scmp.eq.s32.totalorder %s21, 1
    %p233 = por %p231, %p232
    %p234 = scmp.ne.s32.totalorder %s225, %s226
    %p235 = scmp.eq.s32.totalorder %s21, 0
    %p236 = por %p234, %p235
    %p237 = scmp.ne.s32.totalorder %s225, %s226
    %p238 = scmp.eq.s32.totalorder %s22, 1
    %p239 = por %p237, %p238
    %p241 = scmp.ne.s32.totalorder %s226, %s240
    %p242 = scmp.eq.s32.totalorder %s22, 0
    %p243 = por %p241, %p242
    %s244 = ssub.s32 %s16, %s23
    %p245 = scmp.eq.s32.totalorder %s244, 0
    %s247 = sadd.s32 %s246, 1
    %s248 = scalar_select %p245, %s246, %s247
    %p251 = pneg %p245
    %p252 = scmp.eq.s32.totalorder %s16, 1
    %p253 = por %p251, %p252
    %p254 = scmp.ne.s32.totalorder %s246, %s249
    %p255 = scmp.eq.s32.totalorder %s16, 0
    %p256 = por %p254, %p255
    %p257 = scmp.ne.s32.totalorder %s246, %s249
    %p258 = scmp.eq.s32.totalorder %s21, 1
    %p259 = por %p257, %p258
    %p260 = scmp.ne.s32.totalorder %s249, %s250
    %p261 = scmp.eq.s32.totalorder %s21, 0
    %p262 = por %p260, %p261
    %p263 = scmp.ne.s32.totalorder %s249, %s250
    %p264 = scmp.eq.s32.totalorder %s22, 1
    %p265 = por %p263, %p264
    %p267 = scmp.ne.s32.totalorder %s250, %s266
    %p268 = scmp.eq.s32.totalorder %s22, 0
    %p269 = por %p267, %p268
    %p270 = scmp.le.s32.totalorder 1, %s16
    %p271 = scmp.lt.s32.totalorder %s16, 3
    %p272 = pnand %p270, %p271
    %p273 = pneg %p272
    // Predicated region
    $region9: #{hybrid_transformer_block.1} parent=5 // pred_check
      _
    $region10: #{hybrid_transformer_block.1} parent=5 // pred_check_branch
      %275 = sbr.rel (%p272) target = $region12
    $region11: #{hybrid_transformer_block.1} parent=5 // pred_region
      %s276 = ssub.s32 %s16, 1
      // Predicated region
      $region13: #{hybrid_transformer_block.1} parent=11 // pred_check
        %p277 = pneg %p89
      $region14: #{hybrid_transformer_block.1} parent=11 // pred_check_branch
        %279 = sbr.rel (%p277) target = $region16
      $region15: #{hybrid_transformer_block.1} parent=11 // pred_region
        _
      $region16: #{hybrid_transformer_block.1} parent=11 // pred_fallthru
        _
      // Predicated region
      $region17: #{hybrid_transformer_block.1} parent=11 // pred_check
        %p280 = pneg %p110
      $region18: #{hybrid_transformer_block.1} parent=11 // pred_check_branch
        %282 = sbr.rel (%p280) target = $region20
      $region19: #{hybrid_transformer_block.1} parent=11 // pred_region
        _
      $region20: #{hybrid_transformer_block.1} parent=11 // pred_fallthru
        _
      // Predicated region
      $region21: #{hybrid_transformer_block.1} parent=11 // pred_check
        %p283 = pneg %p131
      $region22: #{hybrid_transformer_block.1} parent=11 // pred_check_branch
        %285 = sbr.rel (%p283) target = $region24
      $region23: #{hybrid_transformer_block.1} parent=11 // pred_region
        _
      $region24: #{hybrid_transformer_block.1} parent=11 // pred_fallthru
        _
      // Predicated region
      $region25: #{hybrid_transformer_block.1} parent=11 // pred_check
        %p286 = pneg %p152
      $region26: #{hybrid_transformer_block.1} parent=11 // pred_check_branch
        %288 = sbr.rel (%p286) target = $region28
      $region27: #{hybrid_transformer_block.1} parent=11 // pred_region
        _
      $region28: #{hybrid_transformer_block.1} parent=11 // pred_fallthru
        _
      // Predicated region
      $region29: #{hybrid_transformer_block.1} parent=11 // pred_check
        %p289 = pneg %p173
      $region30: #{hybrid_transformer_block.1} parent=11 // pred_check_branch
        %291 = sbr.rel (%p289) target = $region32
      $region31: #{hybrid_transformer_block.1} parent=11 // pred_region
        _
      $region32: #{hybrid_transformer_block.1} parent=11 // pred_fallthru
        _
      // Predicated region
      $region33: #{hybrid_transformer_block.1} parent=11 // pred_check
        %p292 = pneg %p194
      $region34: #{hybrid_transformer_block.1} parent=11 // pred_check_branch
        %294 = sbr.rel (%p292) target = $region36
      $region35: #{hybrid_transformer_block.1} parent=11 // pred_region
        _
      $region36: #{hybrid_transformer_block.1} parent=11 // pred_fallthru
        _
      // Predicated region
      $region37: #{hybrid_transformer_block.1} parent=11 // pred_check
        %p295 = pneg %p215
      $region38: #{hybrid_transformer_block.1} parent=11 // pred_check_branch
        %297 = sbr.rel (%p295) target = $region40
      $region39: #{hybrid_transformer_block.1} parent=11 // pred_region
        _
      $region40: #{hybrid_transformer_block.1} parent=11 // pred_fallthru
        _
      // Predicated region
      $region41: #{hybrid_transformer_block.1} parent=11 // pred_check
        %p298 = pneg %p236
      $region42: #{hybrid_transformer_block.1} parent=11 // pred_check_branch
        %300 = sbr.rel (%p298) target = $region44
      $region43: #{hybrid_transformer_block.1} parent=11 // pred_region
        _
      $region44: #{hybrid_transformer_block.1} parent=11 // pred_fallthru
        _
    $region12: #{hybrid_transformer_block.1} parent=5 // pred_fallthru
      _
    %p301 = scmp.lt.s32.totalorder %s16, 2
    // Predicated region
    $region45: #{hybrid_transformer_block.1} parent=5 // pred_check
      %p302 = pneg %p301
    $region46: #{hybrid_transformer_block.1} parent=5 // pred_check_branch
      %304 = sbr.rel (%p302) target = $region48
    $region47: #{hybrid_transformer_block.1} parent=5 // pred_region
      // Predicated region
      $region49: #{hybrid_transformer_block.1} parent=47 // pred_check
        %p305 = pneg %p36
      $region50: #{hybrid_transformer_block.1} parent=47 // pred_check_branch
        %307 = sbr.rel (%p305) target = $region52
      $region51: #{hybrid_transformer_block.1} parent=47 // pred_region
        %p308 = scmp.lt.s32.totalorder %s16, 1
        %s309 = scalar_select %p308, %s16, 1
        %s310 = smul.addr %s309, 8
        %s311 = smul.addr %s310, 8
        %s312 = scalar_lea.vmem %s0, %s311
      $region52: #{hybrid_transformer_block.1} parent=47 // pred_fallthru
        _
      // Predicated region
      $region53: #{hybrid_transformer_block.1} parent=47 // pred_check
        %p313 = pneg %p62
      $region54: #{hybrid_transformer_block.1} parent=47 // pred_check_branch
        %315 = sbr.rel (%p313) target = $region56
      $region55: #{hybrid_transformer_block.1} parent=47 // pred_region
        %p316 = scmp.lt.s32.totalorder %s16, 1
        %s317 = scalar_select %p316, %s16, 1
        %s318 = smul.addr %s317, 10
        %s319 = smul.addr %s318, 8
        %s320 = scalar_lea.vmem %s1, %s319
      $region56: #{hybrid_transformer_block.1} parent=47 // pred_fallthru
        _
    $region48: #{hybrid_transformer_block.1} parent=5 // pred_fallthru
      _
    %p321 = scmp.le.s32.totalorder 1, %s16
    %p322 = scmp.lt.s32.totalorder %s16, 3
    %p323 = pnand %p321, %p322
    %p324 = pneg %p323
    // Predicated region
    $region57: #{hybrid_transformer_block.1} parent=5 // pred_check
      _
    $region58: #{hybrid_transformer_block.1} parent=5 // pred_check_branch
      %326 = sbr.rel (%p323) target = $region60
    $region59: #{hybrid_transformer_block.1} parent=5 // pred_region
      %s327 = ssub.s32 %s16, 1
      %p328 = scmp.lt.s32.totalorder %s21, 1
      %s329 = scalar_select %p328, %s21, 1
      %s330 = smul.addr %s329, 8
      %s331 = smul.addr %s330, 8
      %s332 = scalar_lea.vmem %s0, %s331
      %p333 = pneg %p42
      %p334 = pneg %p39
      %p335 = scmp.lt.s32.totalorder %s21, 1
      %s336 = scalar_select %p335, %s21, 1
      %s337 = smul.addr %s336, 10
      %s338 = smul.addr %s337, 8
      %s339 = scalar_lea.vmem %s1, %s338
      %p340 = pneg %p68
      %p341 = pneg %p65
      %p342 = pneg %p89
      %p343 = pneg %p86
      %p344 = pneg %p110
      %p345 = pneg %p107
      %p346 = pneg %p131
      %p347 = pneg %p128
      %p348 = pneg %p152
      %p349 = pneg %p149
      %p350 = pneg %p173
      %p351 = pneg %p170
      %p352 = pneg %p194
      %p353 = pneg %p191
      %p354 = pneg %p215
      %p355 = pneg %p212
      %p356 = pneg %p236
      %p357 = pneg %p233
      %p358 = pneg %p262
      %p359 = pneg %p259
      %p360 = scmp.lt.s32.totalorder %s21, 1
      %s361 = scalar_select %p360, %s21, 1
      %s362 = smul.addr %s361, 8
      %s363 = smul.addr %s362, 8
      %s364 = scalar_lea.vmem %s10, %s363
      %p365 = scmp.lt.s32.totalorder %s21, 1
      %s366 = scalar_select %p365, %s21, 1
      %s367 = smul.addr %s366, 8
      %s368 = smul.addr %s367, 8
      %s369 = scalar_lea.vmem %s0, %s368
      %p370 = scmp.lt.s32.totalorder %s21, 1
      %s371 = scalar_select %p370, %s21, 1
      %s372 = smul.addr %s371, 10
      %s373 = smul.addr %s372, 8
      %s374 = scalar_lea.vmem %s1, %s373
      %p375 = scmp.lt.s32.totalorder %s21, 1
      %s376 = scalar_select %p375, %s21, 1
      %s377 = smul.addr %s376, 8
      %s378 = smul.addr %s377, 8
      %s379 = scalar_lea.vmem %s10, %s378
      %v380 = vld [vmem:[%s369] sm:$0xff]
      %v381 = vld [vmem:[%s369 + $0x8] sm:$0xff]
      %v382 = vld [vmem:[%s369 + $0x10] sm:$0xff]
      %v383 = vld [vmem:[%s369 + $0x18] sm:$0xff]
      %v384 = vld [vmem:[%s369 + $0x20] sm:$0xff]
      %v385 = vld [vmem:[%s369 + $0x28] sm:$0xff]
      %v386 = vld [vmem:[%s369 + $0x30] sm:$0xff]
      %v387 = vld [vmem:[%s369 + $0x38] sm:$0xff]
      %v388 = vld [vmem:[%s374] sm:$0xff]
      %v389 = vld [vmem:[%s374 + $0x8] sm:$0xff]
      %v390 = vld [vmem:[%s374 + $0x10] sm:$0xff]
      %v391 = vld [vmem:[%s374 + $0x18] sm:$0xff]
      %v392 = vld [vmem:[%s374 + $0x20] sm:$0xff]
      %v393 = vld [vmem:[%s374 + $0x28] sm:$0xff]
      %v394 = vld [vmem:[%s374 + $0x30] sm:$0xff]
      %v395 = vld [vmem:[%s374 + $0x38] sm:$0xff]
      %v396 = vld [vmem:[%s374 + $0x40] sm:$0xff]
      %v397 = vld [vmem:[%s374 + $0x48] sm:$0x1f]
      %v398 = vld [vmem:[%s9] sm:$0x1]
      %v399 = vld [vmem:[%s9 + $0x1] sm:$0x1]
      %vm400 = vcmask 261120
      %v401 = vsel %vm400, %v380, 0.0
      %402 = vadd.xlane.f32.xlu0 %v401
      %v403 = vpop.xlane.xlu0 %402
      %v404 = vsel %vm400, %v381, 0.0
      %405 = vadd.xlane.f32.xlu0 %v404
      %v406 = vpop.xlane.xlu0 %405
      %v407 = vsel %vm400, %v382, 0.0
      %408 = vadd.xlane.f32.xlu0 %v407
      %v409 = vpop.xlane.xlu0 %408
      %v410 = vsel %vm400, %v383, 0.0
      %411 = vadd.xlane.f32.xlu0 %v410
      %v412 = vpop.xlane.xlu0 %411
      %v413 = vsel %vm400, %v384, 0.0
      %414 = vadd.xlane.f32.xlu0 %v413
      %v415 = vpop.xlane.xlu0 %414
      %v416 = vsel %vm400, %v385, 0.0
      %417 = vadd.xlane.f32.xlu0 %v416
      %v418 = vpop.xlane.xlu0 %417
      %v419 = vsel %vm400, %v386, 0.0
      %420 = vadd.xlane.f32.xlu0 %v419
      %v421 = vpop.xlane.xlu0 %420
      %v422 = vsel %vm400, %v387, 0.0
      %423 = vadd.xlane.f32.xlu0 %v422
      %v424 = vpop.xlane.xlu0 %423
      %v425 = vrcp.pop 32.0
      %v426 = vmul.f32 32.0, %v425
      %v427 = vsub.f32 1.0, %v426
      %v428 = vmul.f32 %v425, %v427
      %v429 = vadd.f32 %v425, %v428
      %vm430 = vweird.f32 %v425
      %v431 = vsel %vm430, %v425, %v429
      %v432 = vmul.f32 %v403, %v431
      %v433 = vmul.f32 %v406, %v431
      %v434 = vmul.f32 %v409, %v431
      %v435 = vmul.f32 %v412, %v431
      %v436 = vmul.f32 %v415, %v431
      %v437 = vmul.f32 %v418, %v431
      %v438 = vmul.f32 %v421, %v431
      %v439 = vmul.f32 %v424, %v431
      %v440 = vsub.f32 %v380, %v432
      %v441 = vsub.f32 %v381, %v433
      %v442 = vsub.f32 %v382, %v434
      %v443 = vsub.f32 %v383, %v435
      %v444 = vsub.f32 %v384, %v436
      %v445 = vsub.f32 %v385, %v437
      %v446 = vsub.f32 %v386, %v438
      %v447 = vsub.f32 %v387, %v439
      %v448 = vmul.f32 %v440, %v440
      %v449 = vmul.f32 %v441, %v441
      %v450 = vmul.f32 %v442, %v442
      %v451 = vmul.f32 %v443, %v443
      %v452 = vmul.f32 %v444, %v444
      %v453 = vmul.f32 %v445, %v445
      %v454 = vmul.f32 %v446, %v446
      %v455 = vmul.f32 %v447, %v447
      %v456 = vsel %vm400, %v448, 0.0
      %457 = vadd.xlane.f32.xlu0 %v456
      %v458 = vpop.xlane.xlu0 %457
      %v459 = vsel %vm400, %v449, 0.0
      %460 = vadd.xlane.f32.xlu0 %v459
      %v461 = vpop.xlane.xlu0 %460
      %v462 = vsel %vm400, %v450, 0.0
      %463 = vadd.xlane.f32.xlu0 %v462
      %v464 = vpop.xlane.xlu0 %463
      %v465 = vsel %vm400, %v451, 0.0
      %466 = vadd.xlane.f32.xlu0 %v465
      %v467 = vpop.xlane.xlu0 %466
      %v468 = vsel %vm400, %v452, 0.0
      %469 = vadd.xlane.f32.xlu0 %v468
      %v470 = vpop.xlane.xlu0 %469
      %v471 = vsel %vm400, %v453, 0.0
      %472 = vadd.xlane.f32.xlu0 %v471
      %v473 = vpop.xlane.xlu0 %472
      %v474 = vsel %vm400, %v454, 0.0
      %475 = vadd.xlane.f32.xlu0 %v474
      %v476 = vpop.xlane.xlu0 %475
      %v477 = vsel %vm400, %v455, 0.0
      %478 = vadd.xlane.f32.xlu0 %v477
      %v479 = vpop.xlane.xlu0 %478
      %v480 = vmul.f32 %v458, %v431
      %v481 = vmul.f32 %v461, %v431
      %v482 = vmul.f32 %v464, %v431
      %v483 = vmul.f32 %v467, %v431
      %v484 = vmul.f32 %v470, %v431
      %v485 = vmul.f32 %v473, %v431
      %v486 = vmul.f32 %v476, %v431
      %v487 = vmul.f32 %v479, %v431
      %v488 = vadd.f32 %v480, 1e-05
      %v489 = vadd.f32 %v481, 1e-05
      %v490 = vadd.f32 %v482, 1e-05
      %v491 = vadd.f32 %v483, 1e-05
      %v492 = vadd.f32 %v484, 1e-05
      %v493 = vadd.f32 %v485, 1e-05
      %v494 = vadd.f32 %v486, 1e-05
      %v495 = vadd.f32 %v487, 1e-05
      %v496 = vrsqrt.pop %v488
      %v497 = vmul.f32 %v496, %v488
      %v498 = vmul.f32 %v497, %v496
      %v499 = vmul.f32 0.5, %v498
      %v500 = vsub.f32 1.5, %v499
      %v501 = vmul.f32 %v496, %v500
      %vm502 = vweird.f32 %v488
      %vm503 = vweird.f32 %v496
      %vm504 = vmor %vm502, %vm503
      %v505 = vsel %vm504, %v496, %v501
      %v506 = vrsqrt.pop %v489
      %v507 = vmul.f32 %v506, %v489
      %v508 = vmul.f32 %v507, %v506
      %v509 = vmul.f32 0.5, %v508
      %v510 = vsub.f32 1.5, %v509
      %v511 = vmul.f32 %v506, %v510
      %vm512 = vweird.f32 %v489
      %vm513 = vweird.f32 %v506
      %vm514 = vmor %vm512, %vm513
      %v515 = vsel %vm514, %v506, %v511
      %v516 = vrsqrt.pop %v490
      %v517 = vmul.f32 %v516, %v490
      %v518 = vmul.f32 %v517, %v516
      %v519 = vmul.f32 0.5, %v518
      %v520 = vsub.f32 1.5, %v519
      %v521 = vmul.f32 %v516, %v520
      %vm522 = vweird.f32 %v490
      %vm523 = vweird.f32 %v516
      %vm524 = vmor %vm522, %vm523
      %v525 = vsel %vm524, %v516, %v521
      %v526 = vrsqrt.pop %v491
      %v527 = vmul.f32 %v526, %v491
      %v528 = vmul.f32 %v527, %v526
      %v529 = vmul.f32 0.5, %v528
      %v530 = vsub.f32 1.5, %v529
      %v531 = vmul.f32 %v526, %v530
      %vm532 = vweird.f32 %v491
      %vm533 = vweird.f32 %v526
      %vm534 = vmor %vm532, %vm533
      %v535 = vsel %vm534, %v526, %v531
      %v536 = vrsqrt.pop %v492
      %v537 = vmul.f32 %v536, %v492
      %v538 = vmul.f32 %v537, %v536
      %v539 = vmul.f32 0.5, %v538
      %v540 = vsub.f32 1.5, %v539
      %v541 = vmul.f32 %v536, %v540
      %vm542 = vweird.f32 %v492
      %vm543 = vweird.f32 %v536
      %vm544 = vmor %vm542, %vm543
      %v545 = vsel %vm544, %v536, %v541
      %v546 = vrsqrt.pop %v493
      %v547 = vmul.f32 %v546, %v493
      %v548 = vmul.f32 %v547, %v546
      %v549 = vmul.f32 0.5, %v548
      %v550 = vsub.f32 1.5, %v549
      %v551 = vmul.f32 %v546, %v550
      %vm552 = vweird.f32 %v493
      %vm553 = vweird.f32 %v546
      %vm554 = vmor %vm552, %vm553
      %v555 = vsel %vm554, %v546, %v551
      %v556 = vrsqrt.pop %v494
      %v557 = vmul.f32 %v556, %v494
      %v558 = vmul.f32 %v557, %v556
      %v559 = vmul.f32 0.5, %v558
      %v560 = vsub.f32 1.5, %v559
      %v561 = vmul.f32 %v556, %v560
      %vm562 = vweird.f32 %v494
      %vm563 = vweird.f32 %v556
      %vm564 = vmor %vm562, %vm563
      %v565 = vsel %vm564, %v556, %v561
      %v566 = vrsqrt.pop %v495
      %v567 = vmul.f32 %v566, %v495
      %v568 = vmul.f32 %v567, %v566
      %v569 = vmul.f32 0.5, %v568
      %v570 = vsub.f32 1.5, %v569
      %v571 = vmul.f32 %v566, %v570
      %vm572 = vweird.f32 %v495
      %vm573 = vweird.f32 %v566
      %vm574 = vmor %vm572, %vm573
      %v575 = vsel %vm574, %v566, %v571
      %v576 = vmul.f32 %v440, %v505
      %v577 = vmul.f32 %v441, %v515
      %v578 = vmul.f32 %v442, %v525
      %v579 = vmul.f32 %v443, %v535
      %v580 = vmul.f32 %v444, %v545
      %v581 = vmul.f32 %v445, %v555
      %v582 = vmul.f32 %v446, %v565
      %v583 = vmul.f32 %v447, %v575
      %v584 = vperm.slane %v398, 0
      %v585 = vmul.f32 %v576, %v584
      %v586 = vmul.f32 %v577, %v584
      %v587 = vmul.f32 %v578, %v584
      %v588 = vmul.f32 %v579, %v584
      %v589 = vmul.f32 %v580, %v584
      %v590 = vmul.f32 %v581, %v584
      %v591 = vmul.f32 %v582, %v584
      %v592 = vmul.f32 %v583, %v584
      %v593 = vperm.slane %v399, 0
      %v594 = vadd.f32 %v585, %v593
      %v595 = vadd.f32 %v586, %v593
      %v596 = vadd.f32 %v587, %v593
      %v597 = vadd.f32 %v588, %v593
      %v598 = vadd.f32 %v589, %v593
      %v599 = vadd.f32 %v590, %v593
      %v600 = vadd.f32 %v591, %v593
      %v601 = vadd.f32 %v592, %v593
      %v602 = vld [vmem:[%s2] sm:$0xff]
      %v603 = vld [vmem:[%s2 + $0x8] sm:$0xff]
      %v604 = vld [vmem:[%s2 + $0x10] sm:$0xff]
      %v605 = vld [vmem:[%s2 + $0x18] sm:$0xff]
      %v606 = vld [vmem:[%s3] sm:$0xff]
      %v607 = vld [vmem:[%s3 + $0x8] sm:$0xff]
      %v608 = vld [vmem:[%s3 + $0x10] sm:$0xff]
      %v609 = vld [vmem:[%s3 + $0x18] sm:$0xff]
      %v610 = vld [vmem:[%s3 + $0x20] sm:$0xff]
      %v611 = vld [vmem:[%s3 + $0x28] sm:$0xff]
      %v612 = vld [vmem:[%s3 + $0x30] sm:$0xff]
      %v613 = vld [vmem:[%s3 + $0x38] sm:$0xff]
      %v614 = vld [vmem:[%s4] sm:$0xff]
      %v615 = vld [vmem:[%s4 + $0x8] sm:$0xff]
      %v616 = vld [vmem:[%s4 + $0x10] sm:$0xff]
      %v617 = vld [vmem:[%s4 + $0x18] sm:$0xff]
      %v619 = vsel %vm400, %v594, 0
      %v622 = vsel %vm400, %v595, 0
      %v625 = vsel %vm400, %v596, 0
      %v628 = vsel %vm400, %v597, 0
      %v631 = vsel %vm400, %v598, 0
      %v634 = vsel %vm400, %v599, 0
      %v637 = vsel %vm400, %v600, 0
      %v640 = vsel %vm400, %v601, 0
      %642 = vmatpush.msra.mxu0 0.0
      %643 = vmatpush.msra.mxu0 0.0
      %644 = vmatpush.msra.mxu0 0.0
      %645 = vmatpush.msra.mxu0 0.0
      %646 = vmatpush.msra.mxu0 0.0
      %647 = vmatpush.msra.mxu0 0.0
      %648 = vmatpush.msra.mxu0 0.0
      %649 = vmatpush.msra.mxu0 0.0
      %650 = vmatpush.msra.mxu0 0.0
      %651 = vmatpush.msra.mxu0 0.0
      %652 = vmatpush.msra.mxu0 0.0
      %653 = vmatpush.msra.mxu0 0.0
      %654 = vmatpush.msra.mxu0 %v605
      %655 = vmatpush.msra.mxu0 %v604
      %656 = vmatpush.msra.mxu0 %v603
      %657 = vmatpush.msra.mxu0 %v602
      %658 = vmatmul.f32.gmra.mxu0 %v619
      %v659 = vpop.f32.mrf.mxu0
      %v660 = vadd.f32 %v606, %v659
      %661 = vmatmul.f32.gmra.mxu0 %v622
      %v662 = vpop.f32.mrf.mxu0
      %v663 = vadd.f32 %v607, %v662
      %664 = vmatmul.f32.gmra.mxu0 %v625
      %v665 = vpop.f32.mrf.mxu0
      %v666 = vadd.f32 %v608, %v665
      %667 = vmatmul.f32.gmra.mxu0 %v628
      %v668 = vpop.f32.mrf.mxu0
      %v669 = vadd.f32 %v609, %v668
      %670 = vmatmul.f32.gmra.mxu0 %v631
      %v671 = vpop.f32.mrf.mxu0
      %v672 = vadd.f32 %v610, %v671
      %673 = vmatmul.f32.gmra.mxu0 %v634
      %v674 = vpop.f32.mrf.mxu0
      %v675 = vadd.f32 %v611, %v674
      %676 = vmatmul.f32.gmra.mxu0 %v637
      %v677 = vpop.f32.mrf.mxu0
      %v678 = vadd.f32 %v612, %v677
      %679 = vmatmul.f32.gmra.mxu0 %v640
      %v680 = vpop.f32.mrf.mxu0
      %v681 = vadd.f32 %v613, %v680
      %682 = vdwg.mxu0
      %691 = vrot.lane.b32.xlu0 %v660, 96
      %v692 = vpop.permute.xlu0 %691
      %693 = vrot.lane.b32.xlu0 %v663, 96
      %v694 = vpop.permute.xlu0 %693
      %695 = vrot.lane.b32.xlu0 %v666, 96
      %v696 = vpop.permute.xlu0 %695
      %697 = vrot.lane.b32.xlu0 %v669, 96
      %v698 = vpop.permute.xlu0 %697
      %699 = vrot.lane.b32.xlu0 %v672, 96
      %v700 = vpop.permute.xlu0 %699
      %701 = vrot.lane.b32.xlu0 %v675, 96
      %v702 = vpop.permute.xlu0 %701
      %703 = vrot.lane.b32.xlu0 %v678, 96
      %v704 = vpop.permute.xlu0 %703
      %705 = vrot.lane.b32.xlu0 %v681, 96
      %v706 = vpop.permute.xlu0 %705
      %vm707 = vcmask 64512
      %v708 = vsel %vm707, %v660, 0
      %v710 = vsel %vm707, %v663, 0
      %v712 = vsel %vm707, %v666, 0
      %v714 = vsel %vm707, %v669, 0
      %v716 = vsel %vm707, %v672, 0
      %v718 = vsel %vm707, %v675, 0
      %v720 = vsel %vm707, %v678, 0
      %v722 = vsel %vm707, %v681, 0
      %v724 = vsel %vm707, %v692, 0
      %v726 = vsel %vm707, %v694, 0
      %v728 = vsel %vm707, %v696, 0
      %v730 = vsel %vm707, %v698, 0
      %v732 = vsel %vm707, %v700, 0
      %v734 = vsel %vm707, %v702, 0
      %v736 = vsel %vm707, %v704, 0
      %v738 = vsel %vm707, %v706, 0
      %740 = vmatpush.xpose.msra.mxu0 0.0
      %741 = vmatpush.xpose.msra.mxu0 0.0
      %742 = vmatpush.xpose.msra.mxu0 0.0
      %743 = vmatpush.xpose.msra.mxu0 0.0
      %744 = vmatpush.xpose.msra.mxu0 0.0
      %745 = vmatpush.xpose.msra.mxu0 0.0
      %746 = vmatpush.xpose.msra.mxu0 0.0
      %747 = vmatpush.xpose.msra.mxu0 0.0
      %748 = vmatpush.xpose.msra.mxu0 %v738
      %749 = vmatpush.xpose.msra.mxu0 %v736
      %750 = vmatpush.xpose.msra.mxu0 %v734
      %751 = vmatpush.xpose.msra.mxu0 %v732
      %752 = vmatpush.xpose.msra.mxu0 %v730
      %753 = vmatpush.xpose.msra.mxu0 %v728
      %754 = vmatpush.xpose.msra.mxu0 %v726
      %755 = vmatpush.xpose.msra.mxu0 %v724
      %756 = vmatmul.f32.gmra.mxu0 %v708
      %v757 = vpop.f32.mrf.mxu0
      %v758 = vadd.f32 0.0, %v757
      %759 = vmatmul.f32.gmra.mxu0 %v710
      %v760 = vpop.f32.mrf.mxu0
      %v761 = vadd.f32 0.0, %v760
      %762 = vmatmul.f32.gmra.mxu0 %v712
      %v763 = vpop.f32.mrf.mxu0
      %v764 = vadd.f32 0.0, %v763
      %765 = vmatmul.f32.gmra.mxu0 %v714
      %v766 = vpop.f32.mrf.mxu0
      %v767 = vadd.f32 0.0, %v766
      %768 = vmatmul.f32.gmra.mxu0 %v716
      %v769 = vpop.f32.mrf.mxu0
      %v770 = vadd.f32 0.0, %v769
      %771 = vmatmul.f32.gmra.mxu0 %v718
      %v772 = vpop.f32.mrf.mxu0
      %v773 = vadd.f32 0.0, %v772
      %774 = vmatmul.f32.gmra.mxu0 %v720
      %v775 = vpop.f32.mrf.mxu0
      %v776 = vadd.f32 0.0, %v775
      %777 = vmatmul.f32.gmra.mxu0 %v722
      %v778 = vpop.f32.mrf.mxu0
      %v779 = vadd.f32 0.0, %v778
      %780 = vdwg.mxu0
      %v781 = vmul.f32 %v758, 0.35355338
      %v782 = vmul.f32 %v761, 0.35355338
      %v783 = vmul.f32 %v764, 0.35355338
      %v784 = vmul.f32 %v767, 0.35355338
      %v785 = vmul.f32 %v770, 0.35355338
      %v786 = vmul.f32 %v773, 0.35355338
      %v787 = vmul.f32 %v776, 0.35355338
      %v788 = vmul.f32 %v779, 0.35355338
      %vm789 = vcmask 523264
      %v790 = vsel %vm789, %v781, -inf
      %791 = vmax.xlane.f32.xlu0 %v790
      %v792 = vpop.xlane.xlu0 %791
      %v793 = vsel %vm789, %v782, -inf
      %794 = vmax.xlane.f32.xlu0 %v793
      %v795 = vpop.xlane.xlu0 %794
      %v796 = vsel %vm789, %v783, -inf
      %797 = vmax.xlane.f32.xlu0 %v796
      %v798 = vpop.xlane.xlu0 %797
      %v799 = vsel %vm789, %v784, -inf
      %800 = vmax.xlane.f32.xlu0 %v799
      %v801 = vpop.xlane.xlu0 %800
      %v802 = vsel %vm789, %v785, -inf
      %803 = vmax.xlane.f32.xlu0 %v802
      %v804 = vpop.xlane.xlu0 %803
      %v805 = vsel %vm789, %v786, -inf
      %806 = vmax.xlane.f32.xlu0 %v805
      %v807 = vpop.xlane.xlu0 %806
      %v808 = vsel %vm789, %v787, -inf
      %809 = vmax.xlane.f32.xlu0 %v808
      %v810 = vpop.xlane.xlu0 %809
      %v811 = vsel %vm789, %v788, -inf
      %812 = vmax.xlane.f32.xlu0 %v811
      %v813 = vpop.xlane.xlu0 %812
      %v814 = vsub.f32 %v781, %v792
      %v815 = vsub.f32 %v782, %v795
      %v816 = vsub.f32 %v783, %v798
      %v817 = vsub.f32 %v784, %v801
      %v818 = vsub.f32 %v785, %v804
      %v819 = vsub.f32 %v786, %v807
      %v820 = vsub.f32 %v787, %v810
      %v821 = vsub.f32 %v788, %v813
      %v822 = vmul.f32 %v814, 1.442695
      %v823 = vpow.pop %v822
      %v824 = vmul.f32 %v815, 1.442695
      %v825 = vpow.pop %v824
      %v826 = vmul.f32 %v816, 1.442695
      %v827 = vpow.pop %v826
      %v828 = vmul.f32 %v817, 1.442695
      %v829 = vpow.pop %v828
      %v830 = vmul.f32 %v818, 1.442695
      %v831 = vpow.pop %v830
      %v832 = vmul.f32 %v819, 1.442695
      %v833 = vpow.pop %v832
      %v834 = vmul.f32 %v820, 1.442695
      %v835 = vpow.pop %v834
      %v836 = vmul.f32 %v821, 1.442695
      %v837 = vpow.pop %v836
      %v838 = vsel %vm789, %v823, 0.0
      %839 = vadd.xlane.f32.xlu0 %v838
      %v840 = vpop.xlane.xlu0 %839
      %v841 = vsel %vm789, %v825, 0.0
      %842 = vadd.xlane.f32.xlu0 %v841
      %v843 = vpop.xlane.xlu0 %842
      %v844 = vsel %vm789, %v827, 0.0
      %845 = vadd.xlane.f32.xlu0 %v844
      %v846 = vpop.xlane.xlu0 %845
      %v847 = vsel %vm789, %v829, 0.0
      %848 = vadd.xlane.f32.xlu0 %v847
      %v849 = vpop.xlane.xlu0 %848
      %v850 = vsel %vm789, %v831, 0.0
      %851 = vadd.xlane.f32.xlu0 %v850
      %v852 = vpop.xlane.xlu0 %851
      %v853 = vsel %vm789, %v833, 0.0
      %854 = vadd.xlane.f32.xlu0 %v853
      %v855 = vpop.xlane.xlu0 %854
      %v856 = vsel %vm789, %v835, 0.0
      %857 = vadd.xlane.f32.xlu0 %v856
      %v858 = vpop.xlane.xlu0 %857
      %v859 = vsel %vm789, %v837, 0.0
      %860 = vadd.xlane.f32.xlu0 %v859
      %v861 = vpop.xlane.xlu0 %860
      %v862 = vrcp.pop %v840
      %v863 = vmul.f32 %v840, %v862
      %v864 = vsub.f32 1.0, %v863
      %v865 = vmul.f32 %v862, %v864
      %v866 = vadd.f32 %v862, %v865
      %vm867 = vweird.f32 %v840
      %vm868 = vweird.f32 %v862
      %vm869 = vmor %vm867, %vm868
      %v870 = vsel %vm869, %v862, %v866
      %v871 = vand.u32 2147483647, %v840
      %vm872 = vcmp.eq.f32.partialorder %v871, 8.507059e+37
      %v873 = vand.u32 %v840, 2147483648
      %v874 = vor.u32 1.1754944e-38, %v873
      %v875 = vsel %vm872, %v874, %v870
      %v876 = vmul.f32 1.0, %v875
      %v877 = vrcp.pop %v843
      %v878 = vmul.f32 %v843, %v877
      %v879 = vsub.f32 1.0, %v878
      %v880 = vmul.f32 %v877, %v879
      %v881 = vadd.f32 %v877, %v880
      %vm882 = vweird.f32 %v843
      %vm883 = vweird.f32 %v877
      %vm884 = vmor %vm882, %vm883
      %v885 = vsel %vm884, %v877, %v881
      %v886 = vand.u32 2147483647, %v843
      %vm887 = vcmp.eq.f32.partialorder %v886, 8.507059e+37
      %v888 = vand.u32 %v843, 2147483648
      %v889 = vor.u32 1.1754944e-38, %v888
      %v890 = vsel %vm887, %v889, %v885
      %v891 = vmul.f32 1.0, %v890
      %v892 = vrcp.pop %v846
      %v893 = vmul.f32 %v846, %v892
      %v894 = vsub.f32 1.0, %v893
      %v895 = vmul.f32 %v892, %v894
      %v896 = vadd.f32 %v892, %v895
      %vm897 = vweird.f32 %v846
      %vm898 = vweird.f32 %v892
      %vm899 = vmor %vm897, %vm898
      %v900 = vsel %vm899, %v892, %v896
      %v901 = vand.u32 2147483647, %v846
      %vm902 = vcmp.eq.f32.partialorder %v901, 8.507059e+37
      %v903 = vand.u32 %v846, 2147483648
      %v904 = vor.u32 1.1754944e-38, %v903
      %v905 = vsel %vm902, %v904, %v900
      %v906 = vmul.f32 1.0, %v905
      %v907 = vrcp.pop %v849
      %v908 = vmul.f32 %v849, %v907
      %v909 = vsub.f32 1.0, %v908
      %v910 = vmul.f32 %v907, %v909
      %v911 = vadd.f32 %v907, %v910
      %vm912 = vweird.f32 %v849
      %vm913 = vweird.f32 %v907
      %vm914 = vmor %vm912, %vm913
      %v915 = vsel %vm914, %v907, %v911
      %v916 = vand.u32 2147483647, %v849
      %vm917 = vcmp.eq.f32.partialorder %v916, 8.507059e+37
      %v918 = vand.u32 %v849, 2147483648
      %v919 = vor.u32 1.1754944e-38, %v918
      %v920 = vsel %vm917, %v919, %v915
      %v921 = vmul.f32 1.0, %v920
      %v922 = vrcp.pop %v852
      %v923 = vmul.f32 %v852, %v922
      %v924 = vsub.f32 1.0, %v923
      %v925 = vmul.f32 %v922, %v924
      %v926 = vadd.f32 %v922, %v925
      %vm927 = vweird.f32 %v852
      %vm928 = vweird.f32 %v922
      %vm929 = vmor %vm927, %vm928
      %v930 = vsel %vm929, %v922, %v926
      %v931 = vand.u32 2147483647, %v852
      %vm932 = vcmp.eq.f32.partialorder %v931, 8.507059e+37
      %v933 = vand.u32 %v852, 2147483648
      %v934 = vor.u32 1.1754944e-38, %v933
      %v935 = vsel %vm932, %v934, %v930
      %v936 = vmul.f32 1.0, %v935
      %v937 = vrcp.pop %v855
      %v938 = vmul.f32 %v855, %v937
      %v939 = vsub.f32 1.0, %v938
      %v940 = vmul.f32 %v937, %v939
      %v941 = vadd.f32 %v937, %v940
      %vm942 = vweird.f32 %v855
      %vm943 = vweird.f32 %v937
      %vm944 = vmor %vm942, %vm943
      %v945 = vsel %vm944, %v937, %v941
      %v946 = vand.u32 2147483647, %v855
      %vm947 = vcmp.eq.f32.partialorder %v946, 8.507059e+37
      %v948 = vand.u32 %v855, 2147483648
      %v949 = vor.u32 1.1754944e-38, %v948
      %v950 = vsel %vm947, %v949, %v945
      %v951 = vmul.f32 1.0, %v950
      %v952 = vrcp.pop %v858
      %v953 = vmul.f32 %v858, %v952
      %v954 = vsub.f32 1.0, %v953
      %v955 = vmul.f32 %v952, %v954
      %v956 = vadd.f32 %v952, %v955
      %vm957 = vweird.f32 %v858
      %vm958 = vweird.f32 %v952
      %vm959 = vmor %vm957, %vm958
      %v960 = vsel %vm959, %v952, %v956
      %v961 = vand.u32 2147483647, %v858
      %vm962 = vcmp.eq.f32.partialorder %v961, 8.507059e+37
      %v963 = vand.u32 %v858, 2147483648
      %v964 = vor.u32 1.1754944e-38, %v963
      %v965 = vsel %vm962, %v964, %v960
      %v966 = vmul.f32 1.0, %v965
      %v967 = vrcp.pop %v861
      %v968 = vmul.f32 %v861, %v967
      %v969 = vsub.f32 1.0, %v968
      %v970 = vmul.f32 %v967, %v969
      %v971 = vadd.f32 %v967, %v970
      %vm972 = vweird.f32 %v861
      %vm973 = vweird.f32 %v967
      %vm974 = vmor %vm972, %vm973
      %v975 = vsel %vm974, %v967, %v971
      %v976 = vand.u32 2147483647, %v861
      %vm977 = vcmp.eq.f32.partialorder %v976, 8.507059e+37
      %v978 = vand.u32 %v861, 2147483648
      %v979 = vor.u32 1.1754944e-38, %v978
      %v980 = vsel %vm977, %v979, %v975
      %v981 = vmul.f32 1.0, %v980
      %982 = vrot.lane.b32.xlu0 %v660, 64
      %v983 = vpop.permute.xlu0 %982
      %984 = vrot.lane.b32.xlu0 %v663, 64
      %v985 = vpop.permute.xlu0 %984
      %986 = vrot.lane.b32.xlu0 %v666, 64
      %v987 = vpop.permute.xlu0 %986
      %988 = vrot.lane.b32.xlu0 %v669, 64
      %v989 = vpop.permute.xlu0 %988
      %990 = vrot.lane.b32.xlu0 %v672, 64
      %v991 = vpop.permute.xlu0 %990
      %992 = vrot.lane.b32.xlu0 %v675, 64
      %v993 = vpop.permute.xlu0 %992
      %994 = vrot.lane.b32.xlu0 %v678, 64
      %v995 = vpop.permute.xlu0 %994
      %996 = vrot.lane.b32.xlu0 %v681, 64
      %v997 = vpop.permute.xlu0 %996
      %v1007 = vsel %vm789, %v823, 0
      %v1010 = vsel %vm789, %v825, 0
      %v1013 = vsel %vm789, %v827, 0
      %v1016 = vsel %vm789, %v829, 0
      %v1019 = vsel %vm789, %v831, 0
      %v1022 = vsel %vm789, %v833, 0
      %v1025 = vsel %vm789, %v835, 0
      %v1028 = vsel %vm789, %v837, 0
      %1030 = vmatpush.msra.mxu0 0.0
      %1031 = vmatpush.msra.mxu0 0.0
      %1032 = vmatpush.msra.mxu0 0.0
      %1033 = vmatpush.msra.mxu0 0.0
      %1034 = vmatpush.msra.mxu0 0.0
      %1035 = vmatpush.msra.mxu0 0.0
      %1036 = vmatpush.msra.mxu0 0.0
      %1037 = vmatpush.msra.mxu0 0.0
      %1038 = vmatpush.msra.mxu0 %v997
      %1039 = vmatpush.msra.mxu0 %v995
      %1040 = vmatpush.msra.mxu0 %v993
      %1041 = vmatpush.msra.mxu0 %v991
      %1042 = vmatpush.msra.mxu0 %v989
      %1043 = vmatpush.msra.mxu0 %v987
      %1044 = vmatpush.msra.mxu0 %v985
      %1045 = vmatpush.msra.mxu0 %v983
      %1046 = vmatmul.f32.gmra.mxu0 %v1007
      %v1047 = vpop.f32.mrf.mxu0
      %v1048 = vadd.f32 0.0, %v1047
      %1049 = vmatmul.f32.gmra.mxu0 %v1010
      %v1050 = vpop.f32.mrf.mxu0
      %v1051 = vadd.f32 0.0, %v1050
      %1052 = vmatmul.f32.gmra.mxu0 %v1013
      %v1053 = vpop.f32.mrf.mxu0
      %v1054 = vadd.f32 0.0, %v1053
      %1055 = vmatmul.f32.gmra.mxu0 %v1016
      %v1056 = vpop.f32.mrf.mxu0
      %v1057 = vadd.f32 0.0, %v1056
      %1058 = vmatmul.f32.gmra.mxu0 %v1019
      %v1059 = vpop.f32.mrf.mxu0
      %v1060 = vadd.f32 0.0, %v1059
      %1061 = vmatmul.f32.gmra.mxu0 %v1022
      %v1062 = vpop.f32.mrf.mxu0
      %v1063 = vadd.f32 0.0, %v1062
      %1064 = vmatmul.f32.gmra.mxu0 %v1025
      %v1065 = vpop.f32.mrf.mxu0
      %v1066 = vadd.f32 0.0, %v1065
      %1067 = vmatmul.f32.gmra.mxu0 %v1028
      %v1068 = vpop.f32.mrf.mxu0
      %v1069 = vadd.f32 0.0, %v1068
      %1070 = vdwg.mxu0
      %v1071 = vmul.f32 %v1048, %v876
      %v1072 = vmul.f32 %v1051, %v891
      %v1073 = vmul.f32 %v1054, %v906
      %v1074 = vmul.f32 %v1057, %v921
      %v1075 = vmul.f32 %v1060, %v936
      %v1076 = vmul.f32 %v1063, %v951
      %v1077 = vmul.f32 %v1066, %v966
      %v1078 = vmul.f32 %v1069, %v981
      %1079 = vrot.lane.b32.xlu0 %v660, 120
      %v1080 = vpop.permute.xlu0 %1079
      %1081 = vrot.lane.b32.xlu0 %v663, 120
      %v1082 = vpop.permute.xlu0 %1081
      %1083 = vrot.lane.b32.xlu0 %v666, 120
      %v1084 = vpop.permute.xlu0 %1083
      %1085 = vrot.lane.b32.xlu0 %v669, 120
      %v1086 = vpop.permute.xlu0 %1085
      %1087 = vrot.lane.b32.xlu0 %v672, 120
      %v1088 = vpop.permute.xlu0 %1087
      %1089 = vrot.lane.b32.xlu0 %v675, 120
      %v1090 = vpop.permute.xlu0 %1089
      %1091 = vrot.lane.b32.xlu0 %v678, 120
      %v1092 = vpop.permute.xlu0 %1091
      %1093 = vrot.lane.b32.xlu0 %v681, 120
      %v1094 = vpop.permute.xlu0 %1093
      %1095 = vrot.lane.b32.xlu0 %v660, 88
      %v1096 = vpop.permute.xlu0 %1095
      %1097 = vrot.lane.b32.xlu0 %v663, 88
      %v1098 = vpop.permute.xlu0 %1097
      %1099 = vrot.lane.b32.xlu0 %v666, 88
      %v1100 = vpop.permute.xlu0 %1099
      %1101 = vrot.lane.b32.xlu0 %v669, 88
      %v1102 = vpop.permute.xlu0 %1101
      %1103 = vrot.lane.b32.xlu0 %v672, 88
      %v1104 = vpop.permute.xlu0 %1103
      %1105 = vrot.lane.b32.xlu0 %v675, 88
      %v1106 = vpop.permute.xlu0 %1105
      %1107 = vrot.lane.b32.xlu0 %v678, 88
      %v1108 = vpop.permute.xlu0 %1107
      %1109 = vrot.lane.b32.xlu0 %v681, 88
      %v1110 = vpop.permute.xlu0 %1109
      %v1111 = vsel %vm707, %v1080, 0
      %v1113 = vsel %vm707, %v1082, 0
      %v1115 = vsel %vm707, %v1084, 0
      %v1117 = vsel %vm707, %v1086, 0
      %v1119 = vsel %vm707, %v1088, 0
      %v1121 = vsel %vm707, %v1090, 0
      %v1123 = vsel %vm707, %v1092, 0
      %v1125 = vsel %vm707, %v1094, 0
      %v1127 = vsel %vm707, %v1096, 0
      %v1129 = vsel %vm707, %v1098, 0
      %v1131 = vsel %vm707, %v1100, 0
      %v1133 = vsel %vm707, %v1102, 0
      %v1135 = vsel %vm707, %v1104, 0
      %v1137 = vsel %vm707, %v1106, 0
      %v1139 = vsel %vm707, %v1108, 0
      %v1141 = vsel %vm707, %v1110, 0
      %1143 = vmatpush.xpose.msra.mxu0 0.0
      %1144 = vmatpush.xpose.msra.mxu0 0.0
      %1145 = vmatpush.xpose.msra.mxu0 0.0
      %1146 = vmatpush.xpose.msra.mxu0 0.0
      %1147 = vmatpush.xpose.msra.mxu0 0.0
      %1148 = vmatpush.xpose.msra.mxu0 0.0
      %1149 = vmatpush.xpose.msra.mxu0 0.0
      %1150 = vmatpush.xpose.msra.mxu0 0.0
      %1151 = vmatpush.xpose.msra.mxu0 %v1141
      %1152 = vmatpush.xpose.msra.mxu0 %v1139
      %1153 = vmatpush.xpose.msra.mxu0 %v1137
      %1154 = vmatpush.xpose.msra.mxu0 %v1135
      %1155 = vmatpush.xpose.msra.mxu0 %v1133
      %1156 = vmatpush.xpose.msra.mxu0 %v1131
      %1157 = vmatpush.xpose.msra.mxu0 %v1129
      %1158 = vmatpush.xpose.msra.mxu0 %v1127
      %1159 = vmatmul.f32.gmra.mxu0 %v1111
      %v1160 = vpop.f32.mrf.mxu0
      %v1161 = vadd.f32 0.0, %v1160
      %1162 = vmatmul.f32.gmra.mxu0 %v1113
      %v1163 = vpop.f32.mrf.mxu0
      %v1164 = vadd.f32 0.0, %v1163
      %1165 = vmatmul.f32.gmra.mxu0 %v1115
      %v1166 = vpop.f32.mrf.mxu0
      %v1167 = vadd.f32 0.0, %v1166
      %1168 = vmatmul.f32.gmra.mxu0 %v1117
      %v1169 = vpop.f32.mrf.mxu0
      %v1170 = vadd.f32 0.0, %v1169
      %1171 = vmatmul.f32.gmra.mxu0 %v1119
      %v1172 = vpop.f32.mrf.mxu0
      %v1173 = vadd.f32 0.0, %v1172
      %1174 = vmatmul.f32.gmra.mxu0 %v1121
      %v1175 = vpop.f32.mrf.mxu0
      %v1176 = vadd.f32 0.0, %v1175
      %1177 = vmatmul.f32.gmra.mxu0 %v1123
      %v1178 = vpop.f32.mrf.mxu0
      %v1179 = vadd.f32 0.0, %v1178
      %1180 = vmatmul.f32.gmra.mxu0 %v1125
      %v1181 = vpop.f32.mrf.mxu0
      %v1182 = vadd.f32 0.0, %v1181
      %1183 = vdwg.mxu0
      %v1184 = vmul.f32 %v1161, 0.35355338
      %v1185 = vmul.f32 %v1164, 0.35355338
      %v1186 = vmul.f32 %v1167, 0.35355338
      %v1187 = vmul.f32 %v1170, 0.35355338
      %v1188 = vmul.f32 %v1173, 0.35355338
      %v1189 = vmul.f32 %v1176, 0.35355338
      %v1190 = vmul.f32 %v1179, 0.35355338
      %v1191 = vmul.f32 %v1182, 0.35355338
      %v1192 = vsel %vm789, %v1184, -inf
      %1193 = vmax.xlane.f32.xlu0 %v1192
      %v1194 = vpop.xlane.xlu0 %1193
      %v1195 = vsel %vm789, %v1185, -inf
      %1196 = vmax.xlane.f32.xlu0 %v1195
      %v1197 = vpop.xlane.xlu0 %1196
      %v1198 = vsel %vm789, %v1186, -inf
      %1199 = vmax.xlane.f32.xlu0 %v1198
      %v1200 = vpop.xlane.xlu0 %1199
      %v1201 = vsel %vm789, %v1187, -inf
      %1202 = vmax.xlane.f32.xlu0 %v1201
      %v1203 = vpop.xlane.xlu0 %1202
      %v1204 = vsel %vm789, %v1188, -inf
      %1205 = vmax.xlane.f32.xlu0 %v1204
      %v1206 = vpop.xlane.xlu0 %1205
      %v1207 = vsel %vm789, %v1189, -inf
      %1208 = vmax.xlane.f32.xlu0 %v1207
      %v1209 = vpop.xlane.xlu0 %1208
      %v1210 = vsel %vm789, %v1190, -inf
      %1211 = vmax.xlane.f32.xlu0 %v1210
      %v1212 = vpop.xlane.xlu0 %1211
      %v1213 = vsel %vm789, %v1191, -inf
      %1214 = vmax.xlane.f32.xlu0 %v1213
      %v1215 = vpop.xlane.xlu0 %1214
      %v1216 = vsub.f32 %v1184, %v1194
      %v1217 = vsub.f32 %v1185, %v1197
      %v1218 = vsub.f32 %v1186, %v1200
      %v1219 = vsub.f32 %v1187, %v1203
      %v1220 = vsub.f32 %v1188, %v1206
      %v1221 = vsub.f32 %v1189, %v1209
      %v1222 = vsub.f32 %v1190, %v1212
      %v1223 = vsub.f32 %v1191, %v1215
      %v1224 = vmul.f32 %v1216, 1.442695
      %v1225 = vpow.pop %v1224
      %v1226 = vmul.f32 %v1217, 1.442695
      %v1227 = vpow.pop %v1226
      %v1228 = vmul.f32 %v1218, 1.442695
      %v1229 = vpow.pop %v1228
      %v1230 = vmul.f32 %v1219, 1.442695
      %v1231 = vpow.pop %v1230
      %v1232 = vmul.f32 %v1220, 1.442695
      %v1233 = vpow.pop %v1232
      %v1234 = vmul.f32 %v1221, 1.442695
      %v1235 = vpow.pop %v1234
      %v1236 = vmul.f32 %v1222, 1.442695
      %v1237 = vpow.pop %v1236
      %v1238 = vmul.f32 %v1223, 1.442695
      %v1239 = vpow.pop %v1238
      %v1240 = vsel %vm789, %v1225, 0.0
      %1241 = vadd.xlane.f32.xlu0 %v1240
      %v1242 = vpop.xlane.xlu0 %1241
      %v1243 = vsel %vm789, %v1227, 0.0
      %1244 = vadd.xlane.f32.xlu0 %v1243
      %v1245 = vpop.xlane.xlu0 %1244
      %v1246 = vsel %vm789, %v1229, 0.0
      %1247 = vadd.xlane.f32.xlu0 %v1246
      %v1248 = vpop.xlane.xlu0 %1247
      %v1249 = vsel %vm789, %v1231, 0.0
      %1250 = vadd.xlane.f32.xlu0 %v1249
      %v1251 = vpop.xlane.xlu0 %1250
      %v1252 = vsel %vm789, %v1233, 0.0
      %1253 = vadd.xlane.f32.xlu0 %v1252
      %v1254 = vpop.xlane.xlu0 %1253
      %v1255 = vsel %vm789, %v1235, 0.0
      %1256 = vadd.xlane.f32.xlu0 %v1255
      %v1257 = vpop.xlane.xlu0 %1256
      %v1258 = vsel %vm789, %v1237, 0.0
      %1259 = vadd.xlane.f32.xlu0 %v1258
      %v1260 = vpop.xlane.xlu0 %1259
      %v1261 = vsel %vm789, %v1239, 0.0
      %1262 = vadd.xlane.f32.xlu0 %v1261
      %v1263 = vpop.xlane.xlu0 %1262
      %v1264 = vrcp.pop %v1242
      %v1265 = vmul.f32 %v1242, %v1264
      %v1266 = vsub.f32 1.0, %v1265
      %v1267 = vmul.f32 %v1264, %v1266
      %v1268 = vadd.f32 %v1264, %v1267
      %vm1269 = vweird.f32 %v1242
      %vm1270 = vweird.f32 %v1264
      %vm1271 = vmor %vm1269, %vm1270
      %v1272 = vsel %vm1271, %v1264, %v1268
      %v1273 = vand.u32 2147483647, %v1242
      %vm1274 = vcmp.eq.f32.partialorder %v1273, 8.507059e+37
      %v1275 = vand.u32 %v1242, 2147483648
      %v1276 = vor.u32 1.1754944e-38, %v1275
      %v1277 = vsel %vm1274, %v1276, %v1272
      %v1278 = vmul.f32 1.0, %v1277
      %v1279 = vrcp.pop %v1245
      %v1280 = vmul.f32 %v1245, %v1279
      %v1281 = vsub.f32 1.0, %v1280
      %v1282 = vmul.f32 %v1279, %v1281
      %v1283 = vadd.f32 %v1279, %v1282
      %vm1284 = vweird.f32 %v1245
      %vm1285 = vweird.f32 %v1279
      %vm1286 = vmor %vm1284, %vm1285
      %v1287 = vsel %vm1286, %v1279, %v1283
      %v1288 = vand.u32 2147483647, %v1245
      %vm1289 = vcmp.eq.f32.partialorder %v1288, 8.507059e+37
      %v1290 = vand.u32 %v1245, 2147483648
      %v1291 = vor.u32 1.1754944e-38, %v1290
      %v1292 = vsel %vm1289, %v1291, %v1287
      %v1293 = vmul.f32 1.0, %v1292
      %v1294 = vrcp.pop %v1248
      %v1295 = vmul.f32 %v1248, %v1294
      %v1296 = vsub.f32 1.0, %v1295
      %v1297 = vmul.f32 %v1294, %v1296
      %v1298 = vadd.f32 %v1294, %v1297
      %vm1299 = vweird.f32 %v1248
      %vm1300 = vweird.f32 %v1294
      %vm1301 = vmor %vm1299, %vm1300
      %v1302 = vsel %vm1301, %v1294, %v1298
      %v1303 = vand.u32 2147483647, %v1248
      %vm1304 = vcmp.eq.f32.partialorder %v1303, 8.507059e+37
      %v1305 = vand.u32 %v1248, 2147483648
      %v1306 = vor.u32 1.1754944e-38, %v1305
      %v1307 = vsel %vm1304, %v1306, %v1302
      %v1308 = vmul.f32 1.0, %v1307
      %v1309 = vrcp.pop %v1251
      %v1310 = vmul.f32 %v1251, %v1309
      %v1311 = vsub.f32 1.0, %v1310
      %v1312 = vmul.f32 %v1309, %v1311
      %v1313 = vadd.f32 %v1309, %v1312
      %vm1314 = vweird.f32 %v1251
      %vm1315 = vweird.f32 %v1309
      %vm1316 = vmor %vm1314, %vm1315
      %v1317 = vsel %vm1316, %v1309, %v1313
      %v1318 = vand.u32 2147483647, %v1251
      %vm1319 = vcmp.eq.f32.partialorder %v1318, 8.507059e+37
      %v1320 = vand.u32 %v1251, 2147483648
      %v1321 = vor.u32 1.1754944e-38, %v1320
      %v1322 = vsel %vm1319, %v1321, %v1317
      %v1323 = vmul.f32 1.0, %v1322
      %v1324 = vrcp.pop %v1254
      %v1325 = vmul.f32 %v1254, %v1324
      %v1326 = vsub.f32 1.0, %v1325
      %v1327 = vmul.f32 %v1324, %v1326
      %v1328 = vadd.f32 %v1324, %v1327
      %vm1329 = vweird.f32 %v1254
      %vm1330 = vweird.f32 %v1324
      %vm1331 = vmor %vm1329, %vm1330
      %v1332 = vsel %vm1331, %v1324, %v1328
      %v1333 = vand.u32 2147483647, %v1254
      %vm1334 = vcmp.eq.f32.partialorder %v1333, 8.507059e+37
      %v1335 = vand.u32 %v1254, 2147483648
      %v1336 = vor.u32 1.1754944e-38, %v1335
      %v1337 = vsel %vm1334, %v1336, %v1332
      %v1338 = vmul.f32 1.0, %v1337
      %v1339 = vrcp.pop %v1257
      %v1340 = vmul.f32 %v1257, %v1339
      %v1341 = vsub.f32 1.0, %v1340
      %v1342 = vmul.f32 %v1339, %v1341
      %v1343 = vadd.f32 %v1339, %v1342
      %vm1344 = vweird.f32 %v1257
      %vm1345 = vweird.f32 %v1339
      %vm1346 = vmor %vm1344, %vm1345
      %v1347 = vsel %vm1346, %v1339, %v1343
      %v1348 = vand.u32 2147483647, %v1257
      %vm1349 = vcmp.eq.f32.partialorder %v1348, 8.507059e+37
      %v1350 = vand.u32 %v1257, 2147483648
      %v1351 = vor.u32 1.1754944e-38, %v1350
      %v1352 = vsel %vm1349, %v1351, %v1347
      %v1353 = vmul.f32 1.0, %v1352
      %v1354 = vrcp.pop %v1260
      %v1355 = vmul.f32 %v1260, %v1354
      %v1356 = vsub.f32 1.0, %v1355
      %v1357 = vmul.f32 %v1354, %v1356
      %v1358 = vadd.f32 %v1354, %v1357
      %vm1359 = vweird.f32 %v1260
      %vm1360 = vweird.f32 %v1354
      %vm1361 = vmor %vm1359, %vm1360
      %v1362 = vsel %vm1361, %v1354, %v1358
      %v1363 = vand.u32 2147483647, %v1260
      %vm1364 = vcmp.eq.f32.partialorder %v1363, 8.507059e+37
      %v1365 = vand.u32 %v1260, 2147483648
      %v1366 = vor.u32 1.1754944e-38, %v1365
      %v1367 = vsel %vm1364, %v1366, %v1362
      %v1368 = vmul.f32 1.0, %v1367
      %v1369 = vrcp.pop %v1263
      %v1370 = vmul.f32 %v1263, %v1369
      %v1371 = vsub.f32 1.0, %v1370
      %v1372 = vmul.f32 %v1369, %v1371
      %v1373 = vadd.f32 %v1369, %v1372
      %vm1374 = vweird.f32 %v1263
      %vm1375 = vweird.f32 %v1369
      %vm1376 = vmor %vm1374, %vm1375
      %v1377 = vsel %vm1376, %v1369, %v1373
      %v1378 = vand.u32 2147483647, %v1263
      %vm1379 = vcmp.eq.f32.partialorder %v1378, 8.507059e+37
      %v1380 = vand.u32 %v1263, 2147483648
      %v1381 = vor.u32 1.1754944e-38, %v1380
      %v1382 = vsel %vm1379, %v1381, %v1377
      %v1383 = vmul.f32 1.0, %v1382
      %1384 = vrot.lane.b32.xlu0 %v660, 56
      %v1385 = vpop.permute.xlu0 %1384
      %1386 = vrot.lane.b32.xlu0 %v663, 56
      %v1387 = vpop.permute.xlu0 %1386
      %1388 = vrot.lane.b32.xlu0 %v666, 56
      %v1389 = vpop.permute.xlu0 %1388
      %1390 = vrot.lane.b32.xlu0 %v669, 56
      %v1391 = vpop.permute.xlu0 %1390
      %1392 = vrot.lane.b32.xlu0 %v672, 56
      %v1393 = vpop.permute.xlu0 %1392
      %1394 = vrot.lane.b32.xlu0 %v675, 56
      %v1395 = vpop.permute.xlu0 %1394
      %1396 = vrot.lane.b32.xlu0 %v678, 56
      %v1397 = vpop.permute.xlu0 %1396
      %1398 = vrot.lane.b32.xlu0 %v681, 56
      %v1399 = vpop.permute.xlu0 %1398
      %v1409 = vsel %vm789, %v1225, 0
      %v1412 = vsel %vm789, %v1227, 0
      %v1415 = vsel %vm789, %v1229, 0
      %v1418 = vsel %vm789, %v1231, 0
      %v1421 = vsel %vm789, %v1233, 0
      %v1424 = vsel %vm789, %v1235, 0
      %v1427 = vsel %vm789, %v1237, 0
      %v1430 = vsel %vm789, %v1239, 0
      %1432 = vmatpush.msra.mxu0 0.0
      %1433 = vmatpush.msra.mxu0 0.0
      %1434 = vmatpush.msra.mxu0 0.0
      %1435 = vmatpush.msra.mxu0 0.0
      %1436 = vmatpush.msra.mxu0 0.0
      %1437 = vmatpush.msra.mxu0 0.0
      %1438 = vmatpush.msra.mxu0 0.0
      %1439 = vmatpush.msra.mxu0 0.0
      %1440 = vmatpush.msra.mxu0 %v1399
      %1441 = vmatpush.msra.mxu0 %v1397
      %1442 = vmatpush.msra.mxu0 %v1395
      %1443 = vmatpush.msra.mxu0 %v1393
      %1444 = vmatpush.msra.mxu0 %v1391
      %1445 = vmatpush.msra.mxu0 %v1389
      %1446 = vmatpush.msra.mxu0 %v1387
      %1447 = vmatpush.msra.mxu0 %v1385
      %1448 = vmatmul.f32.gmra.mxu0 %v1409
      %v1449 = vpop.f32.mrf.mxu0
      %v1450 = vadd.f32 0.0, %v1449
      %1451 = vmatmul.f32.gmra.mxu0 %v1412
      %v1452 = vpop.f32.mrf.mxu0
      %v1453 = vadd.f32 0.0, %v1452
      %1454 = vmatmul.f32.gmra.mxu0 %v1415
      %v1455 = vpop.f32.mrf.mxu0
      %v1456 = vadd.f32 0.0, %v1455
      %1457 = vmatmul.f32.gmra.mxu0 %v1418
      %v1458 = vpop.f32.mrf.mxu0
      %v1459 = vadd.f32 0.0, %v1458
      %1460 = vmatmul.f32.gmra.mxu0 %v1421
      %v1461 = vpop.f32.mrf.mxu0
      %v1462 = vadd.f32 0.0, %v1461
      %1463 = vmatmul.f32.gmra.mxu0 %v1424
      %v1464 = vpop.f32.mrf.mxu0
      %v1465 = vadd.f32 0.0, %v1464
      %1466 = vmatmul.f32.gmra.mxu0 %v1427
      %v1467 = vpop.f32.mrf.mxu0
      %v1468 = vadd.f32 0.0, %v1467
      %1469 = vmatmul.f32.gmra.mxu0 %v1430
      %v1470 = vpop.f32.mrf.mxu0
      %v1471 = vadd.f32 0.0, %v1470
      %1472 = vdwg.mxu0
      %v1473 = vmul.f32 %v1450, %v1278
      %v1474 = vmul.f32 %v1453, %v1293
      %v1475 = vmul.f32 %v1456, %v1308
      %v1476 = vmul.f32 %v1459, %v1323
      %v1477 = vmul.f32 %v1462, %v1338
      %v1478 = vmul.f32 %v1465, %v1353
      %v1479 = vmul.f32 %v1468, %v1368
      %v1480 = vmul.f32 %v1471, %v1383
      %v1482 = vsel %vm707, %v1473, 0
      %v1485 = vsel %vm707, %v1474, 0
      %v1488 = vsel %vm707, %v1475, 0
      %v1491 = vsel %vm707, %v1476, 0
      %v1494 = vsel %vm707, %v1477, 0
      %v1497 = vsel %vm707, %v1478, 0
      %v1500 = vsel %vm707, %v1479, 0
      %v1503 = vsel %vm707, %v1480, 0
      %1505 = vmatpush.msra.mxu0 0.0
      %1506 = vmatpush.msra.mxu0 0.0
      %1507 = vmatpush.msra.mxu0 0.0
      %1508 = vmatpush.msra.mxu0 0.0
      %1509 = vmatpush.msra.mxu0 0.0
      %1510 = vmatpush.msra.mxu0 0.0
      %1511 = vmatpush.msra.mxu0 0.0
      %1512 = vmatpush.msra.mxu0 0.0
      %1513 = vmatpush.msra.mxu0 0.0
      %1514 = vmatpush.msra.mxu0 0.0
      %1515 = vmatpush.msra.mxu0 0.0
      %1516 = vmatpush.msra.mxu0 0.0
      %1517 = vmatpush.msra.mxu0 0.0
      %1518 = vmatpush.msra.mxu0 0.0
      %1519 = vmatpush.msra.mxu0 0.0
      %1520 = vmatpush.msra.mxu0 %v615
      %1521 = vmatmul.f32.gmra.mxu0 %v1482
      %v1522 = vpop.f32.mrf.mxu0
      %v1523 = vadd.f32 0.0, %v1522
      %1524 = vmatmul.f32.gmra.mxu0 %v1485
      %v1525 = vpop.f32.mrf.mxu0
      %v1526 = vadd.f32 0.0, %v1525
      %1527 = vmatmul.f32.gmra.mxu0 %v1488
      %v1528 = vpop.f32.mrf.mxu0
      %v1529 = vadd.f32 0.0, %v1528
      %1530 = vmatmul.f32.gmra.mxu0 %v1491
      %v1531 = vpop.f32.mrf.mxu0
      %v1532 = vadd.f32 0.0, %v1531
      %1533 = vmatmul.f32.gmra.mxu0 %v1494
      %v1534 = vpop.f32.mrf.mxu0
      %v1535 = vadd.f32 0.0, %v1534
      %1536 = vmatmul.f32.gmra.mxu0 %v1497
      %v1537 = vpop.f32.mrf.mxu0
      %v1538 = vadd.f32 0.0, %v1537
      %1539 = vmatmul.f32.gmra.mxu0 %v1500
      %v1540 = vpop.f32.mrf.mxu0
      %v1541 = vadd.f32 0.0, %v1540
      %1542 = vmatmul.f32.gmra.mxu0 %v1503
      %v1543 = vpop.f32.mrf.mxu0
      %v1544 = vadd.f32 0.0, %v1543
      %1545 = vdwg.mxu0
      %v1547 = vsel %vm707, %v1071, 0
      %v1550 = vsel %vm707, %v1072, 0
      %v1553 = vsel %vm707, %v1073, 0
      %v1556 = vsel %vm707, %v1074, 0
      %v1559 = vsel %vm707, %v1075, 0
      %v1562 = vsel %vm707, %v1076, 0
      %v1565 = vsel %vm707, %v1077, 0
      %v1568 = vsel %vm707, %v1078, 0
      %1570 = vmatpush.msra.mxu0 0.0
      %1571 = vmatpush.msra.mxu0 0.0
      %1572 = vmatpush.msra.mxu0 0.0
      %1573 = vmatpush.msra.mxu0 0.0
      %1574 = vmatpush.msra.mxu0 0.0
      %1575 = vmatpush.msra.mxu0 0.0
      %1576 = vmatpush.msra.mxu0 0.0
      %1577 = vmatpush.msra.mxu0 0.0
      %1578 = vmatpush.msra.mxu0 0.0
      %1579 = vmatpush.msra.mxu0 0.0
      %1580 = vmatpush.msra.mxu0 0.0
      %1581 = vmatpush.msra.mxu0 0.0
      %1582 = vmatpush.msra.mxu0 0.0
      %1583 = vmatpush.msra.mxu0 0.0
      %1584 = vmatpush.msra.mxu0 0.0
      %1585 = vmatpush.msra.mxu0 %v614
      %1586 = vmatmul.f32.gmra.mxu0 %v1547
      %v1587 = vpop.f32.mrf.mxu0
      %v1588 = vadd.f32 %v1523, %v1587
      %1589 = vmatmul.f32.gmra.mxu0 %v1550
      %v1590 = vpop.f32.mrf.mxu0
      %v1591 = vadd.f32 %v1526, %v1590
      %1592 = vmatmul.f32.gmra.mxu0 %v1553
      %v1593 = vpop.f32.mrf.mxu0
      %v1594 = vadd.f32 %v1529, %v1593
      %1595 = vmatmul.f32.gmra.mxu0 %v1556
      %v1596 = vpop.f32.mrf.mxu0
      %v1597 = vadd.f32 %v1532, %v1596
      %1598 = vmatmul.f32.gmra.mxu0 %v1559
      %v1599 = vpop.f32.mrf.mxu0
      %v1600 = vadd.f32 %v1535, %v1599
      %1601 = vmatmul.f32.gmra.mxu0 %v1562
      %v1602 = vpop.f32.mrf.mxu0
      %v1603 = vadd.f32 %v1538, %v1602
      %1604 = vmatmul.f32.gmra.mxu0 %v1565
      %v1605 = vpop.f32.mrf.mxu0
      %v1606 = vadd.f32 %v1541, %v1605
      %1607 = vmatmul.f32.gmra.mxu0 %v1568
      %v1608 = vpop.f32.mrf.mxu0
      %v1609 = vadd.f32 %v1544, %v1608
      %1610 = vdwg.mxu0
      %1611 = vrot.lane.b32.xlu0 %v660, 112
      %v1612 = vpop.permute.xlu0 %1611
      %1613 = vrot.lane.b32.xlu0 %v663, 112
      %v1614 = vpop.permute.xlu0 %1613
      %1615 = vrot.lane.b32.xlu0 %v666, 112
      %v1616 = vpop.permute.xlu0 %1615
      %1617 = vrot.lane.b32.xlu0 %v669, 112
      %v1618 = vpop.permute.xlu0 %1617
      %1619 = vrot.lane.b32.xlu0 %v672, 112
      %v1620 = vpop.permute.xlu0 %1619
      %1621 = vrot.lane.b32.xlu0 %v675, 112
      %v1622 = vpop.permute.xlu0 %1621
      %1623 = vrot.lane.b32.xlu0 %v678, 112
      %v1624 = vpop.permute.xlu0 %1623
      %1625 = vrot.lane.b32.xlu0 %v681, 112
      %v1626 = vpop.permute.xlu0 %1625
      %1627 = vrot.lane.b32.xlu0 %v660, 80
      %v1628 = vpop.permute.xlu0 %1627
      %1629 = vrot.lane.b32.xlu0 %v663, 80
      %v1630 = vpop.permute.xlu0 %1629
      %1631 = vrot.lane.b32.xlu0 %v666, 80
      %v1632 = vpop.permute.xlu0 %1631
      %1633 = vrot.lane.b32.xlu0 %v669, 80
      %v1634 = vpop.permute.xlu0 %1633
      %1635 = vrot.lane.b32.xlu0 %v672, 80
      %v1636 = vpop.permute.xlu0 %1635
      %1637 = vrot.lane.b32.xlu0 %v675, 80
      %v1638 = vpop.permute.xlu0 %1637
      %1639 = vrot.lane.b32.xlu0 %v678, 80
      %v1640 = vpop.permute.xlu0 %1639
      %1641 = vrot.lane.b32.xlu0 %v681, 80
      %v1642 = vpop.permute.xlu0 %1641
      %v1643 = vsel %vm707, %v1612, 0
      %v1645 = vsel %vm707, %v1614, 0
      %v1647 = vsel %vm707, %v1616, 0
      %v1649 = vsel %vm707, %v1618, 0
      %v1651 = vsel %vm707, %v1620, 0
      %v1653 = vsel %vm707, %v1622, 0
      %v1655 = vsel %vm707, %v1624, 0
      %v1657 = vsel %vm707, %v1626, 0
      %v1659 = vsel %vm707, %v1628, 0
      %v1661 = vsel %vm707, %v1630, 0
      %v1663 = vsel %vm707, %v1632, 0
      %v1665 = vsel %vm707, %v1634, 0
      %v1667 = vsel %vm707, %v1636, 0
      %v1669 = vsel %vm707, %v1638, 0
      %v1671 = vsel %vm707, %v1640, 0
      %v1673 = vsel %vm707, %v1642, 0
      %1675 = vmatpush.xpose.msra.mxu0 0.0
      %1676 = vmatpush.xpose.msra.mxu0 0.0
      %1677 = vmatpush.xpose.msra.mxu0 0.0
      %1678 = vmatpush.xpose.msra.mxu0 0.0
      %1679 = vmatpush.xpose.msra.mxu0 0.0
      %1680 = vmatpush.xpose.msra.mxu0 0.0
      %1681 = vmatpush.xpose.msra.mxu0 0.0
      %1682 = vmatpush.xpose.msra.mxu0 0.0
      %1683 = vmatpush.xpose.msra.mxu0 %v1673
      %1684 = vmatpush.xpose.msra.mxu0 %v1671
      %1685 = vmatpush.xpose.msra.mxu0 %v1669
      %1686 = vmatpush.xpose.msra.mxu0 %v1667
      %1687 = vmatpush.xpose.msra.mxu0 %v1665
      %1688 = vmatpush.xpose.msra.mxu0 %v1663
      %1689 = vmatpush.xpose.msra.mxu0 %v1661
      %1690 = vmatpush.xpose.msra.mxu0 %v1659
      %1691 = vmatmul.f32.gmra.mxu0 %v1643
      %v1692 = vpop.f32.mrf.mxu0
      %v1693 = vadd.f32 0.0, %v1692
      %1694 = vmatmul.f32.gmra.mxu0 %v1645
      %v1695 = vpop.f32.mrf.mxu0
      %v1696 = vadd.f32 0.0, %v1695
      %1697 = vmatmul.f32.gmra.mxu0 %v1647
      %v1698 = vpop.f32.mrf.mxu0
      %v1699 = vadd.f32 0.0, %v1698
      %1700 = vmatmul.f32.gmra.mxu0 %v1649
      %v1701 = vpop.f32.mrf.mxu0
      %v1702 = vadd.f32 0.0, %v1701
      %1703 = vmatmul.f32.gmra.mxu0 %v1651
      %v1704 = vpop.f32.mrf.mxu0
      %v1705 = vadd.f32 0.0, %v1704
      %1706 = vmatmul.f32.gmra.mxu0 %v1653
      %v1707 = vpop.f32.mrf.mxu0
      %v1708 = vadd.f32 0.0, %v1707
      %1709 = vmatmul.f32.gmra.mxu0 %v1655
      %v1710 = vpop.f32.mrf.mxu0
      %v1711 = vadd.f32 0.0, %v1710
      %1712 = vmatmul.f32.gmra.mxu0 %v1657
      %v1713 = vpop.f32.mrf.mxu0
      %v1714 = vadd.f32 0.0, %v1713
      %1715 = vdwg.mxu0
      %v1716 = vmul.f32 %v1693, 0.35355338
      %v1717 = vmul.f32 %v1696, 0.35355338
      %v1718 = vmul.f32 %v1699, 0.35355338
      %v1719 = vmul.f32 %v1702, 0.35355338
      %v1720 = vmul.f32 %v1705, 0.35355338
      %v1721 = vmul.f32 %v1708, 0.35355338
      %v1722 = vmul.f32 %v1711, 0.35355338
      %v1723 = vmul.f32 %v1714, 0.35355338
      %v1724 = vsel %vm789, %v1716, -inf
      %1725 = vmax.xlane.f32.xlu0 %v1724
      %v1726 = vpop.xlane.xlu0 %1725
      %v1727 = vsel %vm789, %v1717, -inf
      %1728 = vmax.xlane.f32.xlu0 %v1727
      %v1729 = vpop.xlane.xlu0 %1728
      %v1730 = vsel %vm789, %v1718, -inf
      %1731 = vmax.xlane.f32.xlu0 %v1730
      %v1732 = vpop.xlane.xlu0 %1731
      %v1733 = vsel %vm789, %v1719, -inf
      %1734 = vmax.xlane.f32.xlu0 %v1733
      %v1735 = vpop.xlane.xlu0 %1734
      %v1736 = vsel %vm789, %v1720, -inf
      %1737 = vmax.xlane.f32.xlu0 %v1736
      %v1738 = vpop.xlane.xlu0 %1737
      %v1739 = vsel %vm789, %v1721, -inf
      %1740 = vmax.xlane.f32.xlu0 %v1739
      %v1741 = vpop.xlane.xlu0 %1740
      %v1742 = vsel %vm789, %v1722, -inf
      %1743 = vmax.xlane.f32.xlu0 %v1742
      %v1744 = vpop.xlane.xlu0 %1743
      %v1745 = vsel %vm789, %v1723, -inf
      %1746 = vmax.xlane.f32.xlu0 %v1745
      %v1747 = vpop.xlane.xlu0 %1746
      %v1748 = vsub.f32 %v1716, %v1726
      %v1749 = vsub.f32 %v1717, %v1729
      %v1750 = vsub.f32 %v1718, %v1732
      %v1751 = vsub.f32 %v1719, %v1735
      %v1752 = vsub.f32 %v1720, %v1738
      %v1753 = vsub.f32 %v1721, %v1741
      %v1754 = vsub.f32 %v1722, %v1744
      %v1755 = vsub.f32 %v1723, %v1747
      %v1756 = vmul.f32 %v1748, 1.442695
      %v1757 = vpow.pop %v1756
      %v1758 = vmul.f32 %v1749, 1.442695
      %v1759 = vpow.pop %v1758
      %v1760 = vmul.f32 %v1750, 1.442695
      %v1761 = vpow.pop %v1760
      %v1762 = vmul.f32 %v1751, 1.442695
      %v1763 = vpow.pop %v1762
      %v1764 = vmul.f32 %v1752, 1.442695
      %v1765 = vpow.pop %v1764
      %v1766 = vmul.f32 %v1753, 1.442695
      %v1767 = vpow.pop %v1766
      %v1768 = vmul.f32 %v1754, 1.442695
      %v1769 = vpow.pop %v1768
      %v1770 = vmul.f32 %v1755, 1.442695
      %v1771 = vpow.pop %v1770
      %v1772 = vsel %vm789, %v1757, 0.0
      %1773 = vadd.xlane.f32.xlu0 %v1772
      %v1774 = vpop.xlane.xlu0 %1773
      %v1775 = vsel %vm789, %v1759, 0.0
      %1776 = vadd.xlane.f32.xlu0 %v1775
      %v1777 = vpop.xlane.xlu0 %1776
      %v1778 = vsel %vm789, %v1761, 0.0
      %1779 = vadd.xlane.f32.xlu0 %v1778
      %v1780 = vpop.xlane.xlu0 %1779
      %v1781 = vsel %vm789, %v1763, 0.0
      %1782 = vadd.xlane.f32.xlu0 %v1781
      %v1783 = vpop.xlane.xlu0 %1782
      %v1784 = vsel %vm789, %v1765, 0.0
      %1785 = vadd.xlane.f32.xlu0 %v1784
      %v1786 = vpop.xlane.xlu0 %1785
      %v1787 = vsel %vm789, %v1767, 0.0
      %1788 = vadd.xlane.f32.xlu0 %v1787
      %v1789 = vpop.xlane.xlu0 %1788
      %v1790 = vsel %vm789, %v1769, 0.0
      %1791 = vadd.xlane.f32.xlu0 %v1790
      %v1792 = vpop.xlane.xlu0 %1791
      %v1793 = vsel %vm789, %v1771, 0.0
      %1794 = vadd.xlane.f32.xlu0 %v1793
      %v1795 = vpop.xlane.xlu0 %1794
      %v1796 = vrcp.pop %v1774
      %v1797 = vmul.f32 %v1774, %v1796
      %v1798 = vsub.f32 1.0, %v1797
      %v1799 = vmul.f32 %v1796, %v1798
      %v1800 = vadd.f32 %v1796, %v1799
      %vm1801 = vweird.f32 %v1774
      %vm1802 = vweird.f32 %v1796
      %vm1803 = vmor %vm1801, %vm1802
      %v1804 = vsel %vm1803, %v1796, %v1800
      %v1805 = vand.u32 2147483647, %v1774
      %vm1806 = vcmp.eq.f32.partialorder %v1805, 8.507059e+37
      %v1807 = vand.u32 %v1774, 2147483648
      %v1808 = vor.u32 1.1754944e-38, %v1807
      %v1809 = vsel %vm1806, %v1808, %v1804
      %v1810 = vmul.f32 1.0, %v1809
      %v1811 = vrcp.pop %v1777
      %v1812 = vmul.f32 %v1777, %v1811
      %v1813 = vsub.f32 1.0, %v1812
      %v1814 = vmul.f32 %v1811, %v1813
      %v1815 = vadd.f32 %v1811, %v1814
      %vm1816 = vweird.f32 %v1777
      %vm1817 = vweird.f32 %v1811
      %vm1818 = vmor %vm1816, %vm1817
      %v1819 = vsel %vm1818, %v1811, %v1815
      %v1820 = vand.u32 2147483647, %v1777
      %vm1821 = vcmp.eq.f32.partialorder %v1820, 8.507059e+37
      %v1822 = vand.u32 %v1777, 2147483648
      %v1823 = vor.u32 1.1754944e-38, %v1822
      %v1824 = vsel %vm1821, %v1823, %v1819
      %v1825 = vmul.f32 1.0, %v1824
      %v1826 = vrcp.pop %v1780
      %v1827 = vmul.f32 %v1780, %v1826
      %v1828 = vsub.f32 1.0, %v1827
      %v1829 = vmul.f32 %v1826, %v1828
      %v1830 = vadd.f32 %v1826, %v1829
      %vm1831 = vweird.f32 %v1780
      %vm1832 = vweird.f32 %v1826
      %vm1833 = vmor %vm1831, %vm1832
      %v1834 = vsel %vm1833, %v1826, %v1830
      %v1835 = vand.u32 2147483647, %v1780
      %vm1836 = vcmp.eq.f32.partialorder %v1835, 8.507059e+37
      %v1837 = vand.u32 %v1780, 2147483648
      %v1838 = vor.u32 1.1754944e-38, %v1837
      %v1839 = vsel %vm1836, %v1838, %v1834
      %v1840 = vmul.f32 1.0, %v1839
      %v1841 = vrcp.pop %v1783
      %v1842 = vmul.f32 %v1783, %v1841
      %v1843 = vsub.f32 1.0, %v1842
      %v1844 = vmul.f32 %v1841, %v1843
      %v1845 = vadd.f32 %v1841, %v1844
      %vm1846 = vweird.f32 %v1783
      %vm1847 = vweird.f32 %v1841
      %vm1848 = vmor %vm1846, %vm1847
      %v1849 = vsel %vm1848, %v1841, %v1845
      %v1850 = vand.u32 2147483647, %v1783
      %vm1851 = vcmp.eq.f32.partialorder %v1850, 8.507059e+37
      %v1852 = vand.u32 %v1783, 2147483648
      %v1853 = vor.u32 1.1754944e-38, %v1852
      %v1854 = vsel %vm1851, %v1853, %v1849
      %v1855 = vmul.f32 1.0, %v1854
      %v1856 = vrcp.pop %v1786
      %v1857 = vmul.f32 %v1786, %v1856
      %v1858 = vsub.f32 1.0, %v1857
      %v1859 = vmul.f32 %v1856, %v1858
      %v1860 = vadd.f32 %v1856, %v1859
      %vm1861 = vweird.f32 %v1786
      %vm1862 = vweird.f32 %v1856
      %vm1863 = vmor %vm1861, %vm1862
      %v1864 = vsel %vm1863, %v1856, %v1860
      %v1865 = vand.u32 2147483647, %v1786
      %vm1866 = vcmp.eq.f32.partialorder %v1865, 8.507059e+37
      %v1867 = vand.u32 %v1786, 2147483648
      %v1868 = vor.u32 1.1754944e-38, %v1867
      %v1869 = vsel %vm1866, %v1868, %v1864
      %v1870 = vmul.f32 1.0, %v1869
      %v1871 = vrcp.pop %v1789
      %v1872 = vmul.f32 %v1789, %v1871
      %v1873 = vsub.f32 1.0, %v1872
      %v1874 = vmul.f32 %v1871, %v1873
      %v1875 = vadd.f32 %v1871, %v1874
      %vm1876 = vweird.f32 %v1789
      %vm1877 = vweird.f32 %v1871
      %vm1878 = vmor %vm1876, %vm1877
      %v1879 = vsel %vm1878, %v1871, %v1875
      %v1880 = vand.u32 2147483647, %v1789
      %vm1881 = vcmp.eq.f32.partialorder %v1880, 8.507059e+37
      %v1882 = vand.u32 %v1789, 2147483648
      %v1883 = vor.u32 1.1754944e-38, %v1882
      %v1884 = vsel %vm1881, %v1883, %v1879
      %v1885 = vmul.f32 1.0, %v1884
      %v1886 = vrcp.pop %v1792
      %v1887 = vmul.f32 %v1792, %v1886
      %v1888 = vsub.f32 1.0, %v1887
      %v1889 = vmul.f32 %v1886, %v1888
      %v1890 = vadd.f32 %v1886, %v1889
      %vm1891 = vweird.f32 %v1792
      %vm1892 = vweird.f32 %v1886
      %vm1893 = vmor %vm1891, %vm1892
      %v1894 = vsel %vm1893, %v1886, %v1890
      %v1895 = vand.u32 2147483647, %v1792
      %vm1896 = vcmp.eq.f32.partialorder %v1895, 8.507059e+37
      %v1897 = vand.u32 %v1792, 2147483648
      %v1898 = vor.u32 1.1754944e-38, %v1897
      %v1899 = vsel %vm1896, %v1898, %v1894
      %v1900 = vmul.f32 1.0, %v1899
      %v1901 = vrcp.pop %v1795
      %v1902 = vmul.f32 %v1795, %v1901
      %v1903 = vsub.f32 1.0, %v1902
      %v1904 = vmul.f32 %v1901, %v1903
      %v1905 = vadd.f32 %v1901, %v1904
      %vm1906 = vweird.f32 %v1795
      %vm1907 = vweird.f32 %v1901
      %vm1908 = vmor %vm1906, %vm1907
      %v1909 = vsel %vm1908, %v1901, %v1905
      %v1910 = vand.u32 2147483647, %v1795
      %vm1911 = vcmp.eq.f32.partialorder %v1910, 8.507059e+37
      %v1912 = vand.u32 %v1795, 2147483648
      %v1913 = vor.u32 1.1754944e-38, %v1912
      %v1914 = vsel %vm1911, %v1913, %v1909
      %v1915 = vmul.f32 1.0, %v1914
      %1916 = vrot.lane.b32.xlu0 %v660, 48
      %v1917 = vpop.permute.xlu0 %1916
      %1918 = vrot.lane.b32.xlu0 %v663, 48
      %v1919 = vpop.permute.xlu0 %1918
      %1920 = vrot.lane.b32.xlu0 %v666, 48
      %v1921 = vpop.permute.xlu0 %1920
      %1922 = vrot.lane.b32.xlu0 %v669, 48
      %v1923 = vpop.permute.xlu0 %1922
      %1924 = vrot.lane.b32.xlu0 %v672, 48
      %v1925 = vpop.permute.xlu0 %1924
      %1926 = vrot.lane.b32.xlu0 %v675, 48
      %v1927 = vpop.permute.xlu0 %1926
      %1928 = vrot.lane.b32.xlu0 %v678, 48
      %v1929 = vpop.permute.xlu0 %1928
      %1930 = vrot.lane.b32.xlu0 %v681, 48
      %v1931 = vpop.permute.xlu0 %1930
      %v1941 = vsel %vm789, %v1757, 0
      %v1944 = vsel %vm789, %v1759, 0
      %v1947 = vsel %vm789, %v1761, 0
      %v1950 = vsel %vm789, %v1763, 0
      %v1953 = vsel %vm789, %v1765, 0
      %v1956 = vsel %vm789, %v1767, 0
      %v1959 = vsel %vm789, %v1769, 0
      %v1962 = vsel %vm789, %v1771, 0
      %1964 = vmatpush.msra.mxu0 0.0
      %1965 = vmatpush.msra.mxu0 0.0
      %1966 = vmatpush.msra.mxu0 0.0
      %1967 = vmatpush.msra.mxu0 0.0
      %1968 = vmatpush.msra.mxu0 0.0
      %1969 = vmatpush.msra.mxu0 0.0
      %1970 = vmatpush.msra.mxu0 0.0
      %1971 = vmatpush.msra.mxu0 0.0
      %1972 = vmatpush.msra.mxu0 %v1931
      %1973 = vmatpush.msra.mxu0 %v1929
      %1974 = vmatpush.msra.mxu0 %v1927
      %1975 = vmatpush.msra.mxu0 %v1925
      %1976 = vmatpush.msra.mxu0 %v1923
      %1977 = vmatpush.msra.mxu0 %v1921
      %1978 = vmatpush.msra.mxu0 %v1919
      %1979 = vmatpush.msra.mxu0 %v1917
      %1980 = vmatmul.f32.gmra.mxu0 %v1941
      %v1981 = vpop.f32.mrf.mxu0
      %v1982 = vadd.f32 0.0, %v1981
      %1983 = vmatmul.f32.gmra.mxu0 %v1944
      %v1984 = vpop.f32.mrf.mxu0
      %v1985 = vadd.f32 0.0, %v1984
      %1986 = vmatmul.f32.gmra.mxu0 %v1947
      %v1987 = vpop.f32.mrf.mxu0
      %v1988 = vadd.f32 0.0, %v1987
      %1989 = vmatmul.f32.gmra.mxu0 %v1950
      %v1990 = vpop.f32.mrf.mxu0
      %v1991 = vadd.f32 0.0, %v1990
      %1992 = vmatmul.f32.gmra.mxu0 %v1953
      %v1993 = vpop.f32.mrf.mxu0
      %v1994 = vadd.f32 0.0, %v1993
      %1995 = vmatmul.f32.gmra.mxu0 %v1956
      %v1996 = vpop.f32.mrf.mxu0
      %v1997 = vadd.f32 0.0, %v1996
      %1998 = vmatmul.f32.gmra.mxu0 %v1959
      %v1999 = vpop.f32.mrf.mxu0
      %v2000 = vadd.f32 0.0, %v1999
      %2001 = vmatmul.f32.gmra.mxu0 %v1962
      %v2002 = vpop.f32.mrf.mxu0
      %v2003 = vadd.f32 0.0, %v2002
      %2004 = vdwg.mxu0
      %v2005 = vmul.f32 %v1982, %v1810
      %v2006 = vmul.f32 %v1985, %v1825
      %v2007 = vmul.f32 %v1988, %v1840
      %v2008 = vmul.f32 %v1991, %v1855
      %v2009 = vmul.f32 %v1994, %v1870
      %v2010 = vmul.f32 %v1997, %v1885
      %v2011 = vmul.f32 %v2000, %v1900
      %v2012 = vmul.f32 %v2003, %v1915
      %v2014 = vsel %vm707, %v2005, 0
      %v2017 = vsel %vm707, %v2006, 0
      %v2020 = vsel %vm707, %v2007, 0
      %v2023 = vsel %vm707, %v2008, 0
      %v2026 = vsel %vm707, %v2009, 0
      %v2029 = vsel %vm707, %v2010, 0
      %v2032 = vsel %vm707, %v2011, 0
      %v2035 = vsel %vm707, %v2012, 0
      %2037 = vmatpush.msra.mxu0 0.0
      %2038 = vmatpush.msra.mxu0 0.0
      %2039 = vmatpush.msra.mxu0 0.0
      %2040 = vmatpush.msra.mxu0 0.0
      %2041 = vmatpush.msra.mxu0 0.0
      %2042 = vmatpush.msra.mxu0 0.0
      %2043 = vmatpush.msra.mxu0 0.0
      %2044 = vmatpush.msra.mxu0 0.0
      %2045 = vmatpush.msra.mxu0 0.0
      %2046 = vmatpush.msra.mxu0 0.0
      %2047 = vmatpush.msra.mxu0 0.0
      %2048 = vmatpush.msra.mxu0 0.0
      %2049 = vmatpush.msra.mxu0 0.0
      %2050 = vmatpush.msra.mxu0 0.0
      %2051 = vmatpush.msra.mxu0 0.0
      %2052 = vmatpush.msra.mxu0 %v616
      %2053 = vmatmul.f32.gmra.mxu0 %v2014
      %v2054 = vpop.f32.mrf.mxu0
      %v2055 = vadd.f32 0.0, %v2054
      %2056 = vmatmul.f32.gmra.mxu0 %v2017
      %v2057 = vpop.f32.mrf.mxu0
      %v2058 = vadd.f32 0.0, %v2057
      %2059 = vmatmul.f32.gmra.mxu0 %v2020
      %v2060 = vpop.f32.mrf.mxu0
      %v2061 = vadd.f32 0.0, %v2060
      %2062 = vmatmul.f32.gmra.mxu0 %v2023
      %v2063 = vpop.f32.mrf.mxu0
      %v2064 = vadd.f32 0.0, %v2063
      %2065 = vmatmul.f32.gmra.mxu0 %v2026
      %v2066 = vpop.f32.mrf.mxu0
      %v2067 = vadd.f32 0.0, %v2066
      %2068 = vmatmul.f32.gmra.mxu0 %v2029
      %v2069 = vpop.f32.mrf.mxu0
      %v2070 = vadd.f32 0.0, %v2069
      %2071 = vmatmul.f32.gmra.mxu0 %v2032
      %v2072 = vpop.f32.mrf.mxu0
      %v2073 = vadd.f32 0.0, %v2072
      %2074 = vmatmul.f32.gmra.mxu0 %v2035
      %v2075 = vpop.f32.mrf.mxu0
      %v2076 = vadd.f32 0.0, %v2075
      %2077 = vdwg.mxu0
      %v2078 = vadd.f32 %v1588, %v2055
      %v2079 = vadd.f32 %v1591, %v2058
      %v2080 = vadd.f32 %v1594, %v2061
      %v2081 = vadd.f32 %v1597, %v2064
      %v2082 = vadd.f32 %v1600, %v2067
      %v2083 = vadd.f32 %v1603, %v2070
      %v2084 = vadd.f32 %v1606, %v2073
      %v2085 = vadd.f32 %v1609, %v2076
      %2086 = vrot.lane.b32.xlu0 %v660, 104
      %v2087 = vpop.permute.xlu0 %2086
      %2088 = vrot.lane.b32.xlu0 %v663, 104
      %v2089 = vpop.permute.xlu0 %2088
      %2090 = vrot.lane.b32.xlu0 %v666, 104
      %v2091 = vpop.permute.xlu0 %2090
      %2092 = vrot.lane.b32.xlu0 %v669, 104
      %v2093 = vpop.permute.xlu0 %2092
      %2094 = vrot.lane.b32.xlu0 %v672, 104
      %v2095 = vpop.permute.xlu0 %2094
      %2096 = vrot.lane.b32.xlu0 %v675, 104
      %v2097 = vpop.permute.xlu0 %2096
      %2098 = vrot.lane.b32.xlu0 %v678, 104
      %v2099 = vpop.permute.xlu0 %2098
      %2100 = vrot.lane.b32.xlu0 %v681, 104
      %v2101 = vpop.permute.xlu0 %2100
      %2102 = vrot.lane.b32.xlu0 %v660, 72
      %v2103 = vpop.permute.xlu0 %2102
      %2104 = vrot.lane.b32.xlu0 %v663, 72
      %v2105 = vpop.permute.xlu0 %2104
      %2106 = vrot.lane.b32.xlu0 %v666, 72
      %v2107 = vpop.permute.xlu0 %2106
      %2108 = vrot.lane.b32.xlu0 %v669, 72
      %v2109 = vpop.permute.xlu0 %2108
      %2110 = vrot.lane.b32.xlu0 %v672, 72
      %v2111 = vpop.permute.xlu0 %2110
      %2112 = vrot.lane.b32.xlu0 %v675, 72
      %v2113 = vpop.permute.xlu0 %2112
      %2114 = vrot.lane.b32.xlu0 %v678, 72
      %v2115 = vpop.permute.xlu0 %2114
      %2116 = vrot.lane.b32.xlu0 %v681, 72
      %v2117 = vpop.permute.xlu0 %2116
      %v2118 = vsel %vm707, %v2087, 0
      %v2120 = vsel %vm707, %v2089, 0
      %v2122 = vsel %vm707, %v2091, 0
      %v2124 = vsel %vm707, %v2093, 0
      %v2126 = vsel %vm707, %v2095, 0
      %v2128 = vsel %vm707, %v2097, 0
      %v2130 = vsel %vm707, %v2099, 0
      %v2132 = vsel %vm707, %v2101, 0
      %v2134 = vsel %vm707, %v2103, 0
      %v2136 = vsel %vm707, %v2105, 0
      %v2138 = vsel %vm707, %v2107, 0
      %v2140 = vsel %vm707, %v2109, 0
      %v2142 = vsel %vm707, %v2111, 0
      %v2144 = vsel %vm707, %v2113, 0
      %v2146 = vsel %vm707, %v2115, 0
      %v2148 = vsel %vm707, %v2117, 0
      %2150 = vmatpush.xpose.msra.mxu0 0.0
      %2151 = vmatpush.xpose.msra.mxu0 0.0
      %2152 = vmatpush.xpose.msra.mxu0 0.0
      %2153 = vmatpush.xpose.msra.mxu0 0.0
      %2154 = vmatpush.xpose.msra.mxu0 0.0
      %2155 = vmatpush.xpose.msra.mxu0 0.0
      %2156 = vmatpush.xpose.msra.mxu0 0.0
      %2157 = vmatpush.xpose.msra.mxu0 0.0
      %2158 = vmatpush.xpose.msra.mxu0 %v2148
      %2159 = vmatpush.xpose.msra.mxu0 %v2146
      %2160 = vmatpush.xpose.msra.mxu0 %v2144
      %2161 = vmatpush.xpose.msra.mxu0 %v2142
      %2162 = vmatpush.xpose.msra.mxu0 %v2140
      %2163 = vmatpush.xpose.msra.mxu0 %v2138
      %2164 = vmatpush.xpose.msra.mxu0 %v2136
      %2165 = vmatpush.xpose.msra.mxu0 %v2134
      %2166 = vmatmul.f32.gmra.mxu0 %v2118
      %v2167 = vpop.f32.mrf.mxu0
      %v2168 = vadd.f32 0.0, %v2167
      %2169 = vmatmul.f32.gmra.mxu0 %v2120
      %v2170 = vpop.f32.mrf.mxu0
      %v2171 = vadd.f32 0.0, %v2170
      %2172 = vmatmul.f32.gmra.mxu0 %v2122
      %v2173 = vpop.f32.mrf.mxu0
      %v2174 = vadd.f32 0.0, %v2173
      %2175 = vmatmul.f32.gmra.mxu0 %v2124
      %v2176 = vpop.f32.mrf.mxu0
      %v2177 = vadd.f32 0.0, %v2176
      %2178 = vmatmul.f32.gmra.mxu0 %v2126
      %v2179 = vpop.f32.mrf.mxu0
      %v2180 = vadd.f32 0.0, %v2179
      %2181 = vmatmul.f32.gmra.mxu0 %v2128
      %v2182 = vpop.f32.mrf.mxu0
      %v2183 = vadd.f32 0.0, %v2182
      %2184 = vmatmul.f32.gmra.mxu0 %v2130
      %v2185 = vpop.f32.mrf.mxu0
      %v2186 = vadd.f32 0.0, %v2185
      %2187 = vmatmul.f32.gmra.mxu0 %v2132
      %v2188 = vpop.f32.mrf.mxu0
      %v2189 = vadd.f32 0.0, %v2188
      %2190 = vdwg.mxu0
      %v2191 = vmul.f32 %v2168, 0.35355338
      %v2192 = vmul.f32 %v2171, 0.35355338
      %v2193 = vmul.f32 %v2174, 0.35355338
      %v2194 = vmul.f32 %v2177, 0.35355338
      %v2195 = vmul.f32 %v2180, 0.35355338
      %v2196 = vmul.f32 %v2183, 0.35355338
      %v2197 = vmul.f32 %v2186, 0.35355338
      %v2198 = vmul.f32 %v2189, 0.35355338
      %v2199 = vsel %vm789, %v2191, -inf
      %2200 = vmax.xlane.f32.xlu0 %v2199
      %v2201 = vpop.xlane.xlu0 %2200
      %v2202 = vsel %vm789, %v2192, -inf
      %2203 = vmax.xlane.f32.xlu0 %v2202
      %v2204 = vpop.xlane.xlu0 %2203
      %v2205 = vsel %vm789, %v2193, -inf
      %2206 = vmax.xlane.f32.xlu0 %v2205
      %v2207 = vpop.xlane.xlu0 %2206
      %v2208 = vsel %vm789, %v2194, -inf
      %2209 = vmax.xlane.f32.xlu0 %v2208
      %v2210 = vpop.xlane.xlu0 %2209
      %v2211 = vsel %vm789, %v2195, -inf
      %2212 = vmax.xlane.f32.xlu0 %v2211
      %v2213 = vpop.xlane.xlu0 %2212
      %v2214 = vsel %vm789, %v2196, -inf
      %2215 = vmax.xlane.f32.xlu0 %v2214
      %v2216 = vpop.xlane.xlu0 %2215
      %v2217 = vsel %vm789, %v2197, -inf
      %2218 = vmax.xlane.f32.xlu0 %v2217
      %v2219 = vpop.xlane.xlu0 %2218
      %v2220 = vsel %vm789, %v2198, -inf
      %2221 = vmax.xlane.f32.xlu0 %v2220
      %v2222 = vpop.xlane.xlu0 %2221
      %v2223 = vsub.f32 %v2191, %v2201
      %v2224 = vsub.f32 %v2192, %v2204
      %v2225 = vsub.f32 %v2193, %v2207
      %v2226 = vsub.f32 %v2194, %v2210
      %v2227 = vsub.f32 %v2195, %v2213
      %v2228 = vsub.f32 %v2196, %v2216
      %v2229 = vsub.f32 %v2197, %v2219
      %v2230 = vsub.f32 %v2198, %v2222
      %v2231 = vmul.f32 %v2223, 1.442695
      %v2232 = vpow.pop %v2231
      %v2233 = vmul.f32 %v2224, 1.442695
      %v2234 = vpow.pop %v2233
      %v2235 = vmul.f32 %v2225, 1.442695
      %v2236 = vpow.pop %v2235
      %v2237 = vmul.f32 %v2226, 1.442695
      %v2238 = vpow.pop %v2237
      %v2239 = vmul.f32 %v2227, 1.442695
      %v2240 = vpow.pop %v2239
      %v2241 = vmul.f32 %v2228, 1.442695
      %v2242 = vpow.pop %v2241
      %v2243 = vmul.f32 %v2229, 1.442695
      %v2244 = vpow.pop %v2243
      %v2245 = vmul.f32 %v2230, 1.442695
      %v2246 = vpow.pop %v2245
      %v2247 = vsel %vm789, %v2232, 0.0
      %2248 = vadd.xlane.f32.xlu0 %v2247
      %v2249 = vpop.xlane.xlu0 %2248
      %v2250 = vsel %vm789, %v2234, 0.0
      %2251 = vadd.xlane.f32.xlu0 %v2250
      %v2252 = vpop.xlane.xlu0 %2251
      %v2253 = vsel %vm789, %v2236, 0.0
      %2254 = vadd.xlane.f32.xlu0 %v2253
      %v2255 = vpop.xlane.xlu0 %2254
      %v2256 = vsel %vm789, %v2238, 0.0
      %2257 = vadd.xlane.f32.xlu0 %v2256
      %v2258 = vpop.xlane.xlu0 %2257
      %v2259 = vsel %vm789, %v2240, 0.0
      %2260 = vadd.xlane.f32.xlu0 %v2259
      %v2261 = vpop.xlane.xlu0 %2260
      %v2262 = vsel %vm789, %v2242, 0.0
      %2263 = vadd.xlane.f32.xlu0 %v2262
      %v2264 = vpop.xlane.xlu0 %2263
      %v2265 = vsel %vm789, %v2244, 0.0
      %2266 = vadd.xlane.f32.xlu0 %v2265
      %v2267 = vpop.xlane.xlu0 %2266
      %v2268 = vsel %vm789, %v2246, 0.0
      %2269 = vadd.xlane.f32.xlu0 %v2268
      %v2270 = vpop.xlane.xlu0 %2269
      %v2271 = vrcp.pop %v2249
      %v2272 = vmul.f32 %v2249, %v2271
      %v2273 = vsub.f32 1.0, %v2272
      %v2274 = vmul.f32 %v2271, %v2273
      %v2275 = vadd.f32 %v2271, %v2274
      %vm2276 = vweird.f32 %v2249
      %vm2277 = vweird.f32 %v2271
      %vm2278 = vmor %vm2276, %vm2277
      %v2279 = vsel %vm2278, %v2271, %v2275
      %v2280 = vand.u32 2147483647, %v2249
      %vm2281 = vcmp.eq.f32.partialorder %v2280, 8.507059e+37
      %v2282 = vand.u32 %v2249, 2147483648
      %v2283 = vor.u32 1.1754944e-38, %v2282
      %v2284 = vsel %vm2281, %v2283, %v2279
      %v2285 = vmul.f32 1.0, %v2284
      %v2286 = vrcp.pop %v2252
      %v2287 = vmul.f32 %v2252, %v2286
      %v2288 = vsub.f32 1.0, %v2287
      %v2289 = vmul.f32 %v2286, %v2288
      %v2290 = vadd.f32 %v2286, %v2289
      %vm2291 = vweird.f32 %v2252
      %vm2292 = vweird.f32 %v2286
      %vm2293 = vmor %vm2291, %vm2292
      %v2294 = vsel %vm2293, %v2286, %v2290
      %v2295 = vand.u32 2147483647, %v2252
      %vm2296 = vcmp.eq.f32.partialorder %v2295, 8.507059e+37
      %v2297 = vand.u32 %v2252, 2147483648
      %v2298 = vor.u32 1.1754944e-38, %v2297
      %v2299 = vsel %vm2296, %v2298, %v2294
      %v2300 = vmul.f32 1.0, %v2299
      %v2301 = vrcp.pop %v2255
      %v2302 = vmul.f32 %v2255, %v2301
      %v2303 = vsub.f32 1.0, %v2302
      %v2304 = vmul.f32 %v2301, %v2303
      %v2305 = vadd.f32 %v2301, %v2304
      %vm2306 = vweird.f32 %v2255
      %vm2307 = vweird.f32 %v2301
      %vm2308 = vmor %vm2306, %vm2307
      %v2309 = vsel %vm2308, %v2301, %v2305
      %v2310 = vand.u32 2147483647, %v2255
      %vm2311 = vcmp.eq.f32.partialorder %v2310, 8.507059e+37
      %v2312 = vand.u32 %v2255, 2147483648
      %v2313 = vor.u32 1.1754944e-38, %v2312
      %v2314 = vsel %vm2311, %v2313, %v2309
      %v2315 = vmul.f32 1.0, %v2314
      %v2316 = vrcp.pop %v2258
      %v2317 = vmul.f32 %v2258, %v2316
      %v2318 = vsub.f32 1.0, %v2317
      %v2319 = vmul.f32 %v2316, %v2318
      %v2320 = vadd.f32 %v2316, %v2319
      %vm2321 = vweird.f32 %v2258
      %vm2322 = vweird.f32 %v2316
      %vm2323 = vmor %vm2321, %vm2322
      %v2324 = vsel %vm2323, %v2316, %v2320
      %v2325 = vand.u32 2147483647, %v2258
      %vm2326 = vcmp.eq.f32.partialorder %v2325, 8.507059e+37
      %v2327 = vand.u32 %v2258, 2147483648
      %v2328 = vor.u32 1.1754944e-38, %v2327
      %v2329 = vsel %vm2326, %v2328, %v2324
      %v2330 = vmul.f32 1.0, %v2329
      %v2331 = vrcp.pop %v2261
      %v2332 = vmul.f32 %v2261, %v2331
      %v2333 = vsub.f32 1.0, %v2332
      %v2334 = vmul.f32 %v2331, %v2333
      %v2335 = vadd.f32 %v2331, %v2334
      %vm2336 = vweird.f32 %v2261
      %vm2337 = vweird.f32 %v2331
      %vm2338 = vmor %vm2336, %vm2337
      %v2339 = vsel %vm2338, %v2331, %v2335
      %v2340 = vand.u32 2147483647, %v2261
      %vm2341 = vcmp.eq.f32.partialorder %v2340, 8.507059e+37
      %v2342 = vand.u32 %v2261, 2147483648
      %v2343 = vor.u32 1.1754944e-38, %v2342
      %v2344 = vsel %vm2341, %v2343, %v2339
      %v2345 = vmul.f32 1.0, %v2344
      %v2346 = vrcp.pop %v2264
      %v2347 = vmul.f32 %v2264, %v2346
      %v2348 = vsub.f32 1.0, %v2347
      %v2349 = vmul.f32 %v2346, %v2348
      %v2350 = vadd.f32 %v2346, %v2349
      %vm2351 = vweird.f32 %v2264
      %vm2352 = vweird.f32 %v2346
      %vm2353 = vmor %vm2351, %vm2352
      %v2354 = vsel %vm2353, %v2346, %v2350
      %v2355 = vand.u32 2147483647, %v2264
      %vm2356 = vcmp.eq.f32.partialorder %v2355, 8.507059e+37
      %v2357 = vand.u32 %v2264, 2147483648
      %v2358 = vor.u32 1.1754944e-38, %v2357
      %v2359 = vsel %vm2356, %v2358, %v2354
      %v2360 = vmul.f32 1.0, %v2359
      %v2361 = vrcp.pop %v2267
      %v2362 = vmul.f32 %v2267, %v2361
      %v2363 = vsub.f32 1.0, %v2362
      %v2364 = vmul.f32 %v2361, %v2363
      %v2365 = vadd.f32 %v2361, %v2364
      %vm2366 = vweird.f32 %v2267
      %vm2367 = vweird.f32 %v2361
      %vm2368 = vmor %vm2366, %vm2367
      %v2369 = vsel %vm2368, %v2361, %v2365
      %v2370 = vand.u32 2147483647, %v2267
      %vm2371 = vcmp.eq.f32.partialorder %v2370, 8.507059e+37
      %v2372 = vand.u32 %v2267, 2147483648
      %v2373 = vor.u32 1.1754944e-38, %v2372
      %v2374 = vsel %vm2371, %v2373, %v2369
      %v2375 = vmul.f32 1.0, %v2374
      %v2376 = vrcp.pop %v2270
      %v2377 = vmul.f32 %v2270, %v2376
      %v2378 = vsub.f32 1.0, %v2377
      %v2379 = vmul.f32 %v2376, %v2378
      %v2380 = vadd.f32 %v2376, %v2379
      %vm2381 = vweird.f32 %v2270
      %vm2382 = vweird.f32 %v2376
      %vm2383 = vmor %vm2381, %vm2382
      %v2384 = vsel %vm2383, %v2376, %v2380
      %v2385 = vand.u32 2147483647, %v2270
      %vm2386 = vcmp.eq.f32.partialorder %v2385, 8.507059e+37
      %v2387 = vand.u32 %v2270, 2147483648
      %v2388 = vor.u32 1.1754944e-38, %v2387
      %v2389 = vsel %vm2386, %v2388, %v2384
      %v2390 = vmul.f32 1.0, %v2389
      %2391 = vrot.lane.b32.xlu0 %v660, 40
      %v2392 = vpop.permute.xlu0 %2391
      %2393 = vrot.lane.b32.xlu0 %v663, 40
      %v2394 = vpop.permute.xlu0 %2393
      %2395 = vrot.lane.b32.xlu0 %v666, 40
      %v2396 = vpop.permute.xlu0 %2395
      %2397 = vrot.lane.b32.xlu0 %v669, 40
      %v2398 = vpop.permute.xlu0 %2397
      %2399 = vrot.lane.b32.xlu0 %v672, 40
      %v2400 = vpop.permute.xlu0 %2399
      %2401 = vrot.lane.b32.xlu0 %v675, 40
      %v2402 = vpop.permute.xlu0 %2401
      %2403 = vrot.lane.b32.xlu0 %v678, 40
      %v2404 = vpop.permute.xlu0 %2403
      %2405 = vrot.lane.b32.xlu0 %v681, 40
      %v2406 = vpop.permute.xlu0 %2405
      %v2416 = vsel %vm789, %v2232, 0
      %v2419 = vsel %vm789, %v2234, 0
      %v2422 = vsel %vm789, %v2236, 0
      %v2425 = vsel %vm789, %v2238, 0
      %v2428 = vsel %vm789, %v2240, 0
      %v2431 = vsel %vm789, %v2242, 0
      %v2434 = vsel %vm789, %v2244, 0
      %v2437 = vsel %vm789, %v2246, 0
      %2439 = vmatpush.msra.mxu0 0.0
      %2440 = vmatpush.msra.mxu0 0.0
      %2441 = vmatpush.msra.mxu0 0.0
      %2442 = vmatpush.msra.mxu0 0.0
      %2443 = vmatpush.msra.mxu0 0.0
      %2444 = vmatpush.msra.mxu0 0.0
      %2445 = vmatpush.msra.mxu0 0.0
      %2446 = vmatpush.msra.mxu0 0.0
      %2447 = vmatpush.msra.mxu0 %v2406
      %2448 = vmatpush.msra.mxu0 %v2404
      %2449 = vmatpush.msra.mxu0 %v2402
      %2450 = vmatpush.msra.mxu0 %v2400
      %2451 = vmatpush.msra.mxu0 %v2398
      %2452 = vmatpush.msra.mxu0 %v2396
      %2453 = vmatpush.msra.mxu0 %v2394
      %2454 = vmatpush.msra.mxu0 %v2392
      %2455 = vmatmul.f32.gmra.mxu0 %v2416
      %v2456 = vpop.f32.mrf.mxu0
      %v2457 = vadd.f32 0.0, %v2456
      %2458 = vmatmul.f32.gmra.mxu0 %v2419
      %v2459 = vpop.f32.mrf.mxu0
      %v2460 = vadd.f32 0.0, %v2459
      %2461 = vmatmul.f32.gmra.mxu0 %v2422
      %v2462 = vpop.f32.mrf.mxu0
      %v2463 = vadd.f32 0.0, %v2462
      %2464 = vmatmul.f32.gmra.mxu0 %v2425
      %v2465 = vpop.f32.mrf.mxu0
      %v2466 = vadd.f32 0.0, %v2465
      %2467 = vmatmul.f32.gmra.mxu0 %v2428
      %v2468 = vpop.f32.mrf.mxu0
      %v2469 = vadd.f32 0.0, %v2468
      %2470 = vmatmul.f32.gmra.mxu0 %v2431
      %v2471 = vpop.f32.mrf.mxu0
      %v2472 = vadd.f32 0.0, %v2471
      %2473 = vmatmul.f32.gmra.mxu0 %v2434
      %v2474 = vpop.f32.mrf.mxu0
      %v2475 = vadd.f32 0.0, %v2474
      %2476 = vmatmul.f32.gmra.mxu0 %v2437
      %v2477 = vpop.f32.mrf.mxu0
      %v2478 = vadd.f32 0.0, %v2477
      %2479 = vdwg.mxu0
      %v2480 = vmul.f32 %v2457, %v2285
      %v2481 = vmul.f32 %v2460, %v2300
      %v2482 = vmul.f32 %v2463, %v2315
      %v2483 = vmul.f32 %v2466, %v2330
      %v2484 = vmul.f32 %v2469, %v2345
      %v2485 = vmul.f32 %v2472, %v2360
      %v2486 = vmul.f32 %v2475, %v2375
      %v2487 = vmul.f32 %v2478, %v2390
      %v2489 = vsel %vm707, %v2480, 0
      %v2492 = vsel %vm707, %v2481, 0
      %v2495 = vsel %vm707, %v2482, 0
      %v2498 = vsel %vm707, %v2483, 0
      %v2501 = vsel %vm707, %v2484, 0
      %v2504 = vsel %vm707, %v2485, 0
      %v2507 = vsel %vm707, %v2486, 0
      %v2510 = vsel %vm707, %v2487, 0
      %2512 = vmatpush.msra.mxu0 0.0
      %2513 = vmatpush.msra.mxu0 0.0
      %2514 = vmatpush.msra.mxu0 0.0
      %2515 = vmatpush.msra.mxu0 0.0
      %2516 = vmatpush.msra.mxu0 0.0
      %2517 = vmatpush.msra.mxu0 0.0
      %2518 = vmatpush.msra.mxu0 0.0
      %2519 = vmatpush.msra.mxu0 0.0
      %2520 = vmatpush.msra.mxu0 0.0
      %2521 = vmatpush.msra.mxu0 0.0
      %2522 = vmatpush.msra.mxu0 0.0
      %2523 = vmatpush.msra.mxu0 0.0
      %2524 = vmatpush.msra.mxu0 0.0
      %2525 = vmatpush.msra.mxu0 0.0
      %2526 = vmatpush.msra.mxu0 0.0
      %2527 = vmatpush.msra.mxu0 %v617
      %2528 = vmatmul.f32.gmra.mxu0 %v2489
      %v2529 = vpop.f32.mrf.mxu0
      %v2530 = vadd.f32 0.0, %v2529
      %2531 = vmatmul.f32.gmra.mxu0 %v2492
      %v2532 = vpop.f32.mrf.mxu0
      %v2533 = vadd.f32 0.0, %v2532
      %2534 = vmatmul.f32.gmra.mxu0 %v2495
      %v2535 = vpop.f32.mrf.mxu0
      %v2536 = vadd.f32 0.0, %v2535
      %2537 = vmatmul.f32.gmra.mxu0 %v2498
      %v2538 = vpop.f32.mrf.mxu0
      %v2539 = vadd.f32 0.0, %v2538
      %2540 = vmatmul.f32.gmra.mxu0 %v2501
      %v2541 = vpop.f32.mrf.mxu0
      %v2542 = vadd.f32 0.0, %v2541
      %2543 = vmatmul.f32.gmra.mxu0 %v2504
      %v2544 = vpop.f32.mrf.mxu0
      %v2545 = vadd.f32 0.0, %v2544
      %2546 = vmatmul.f32.gmra.mxu0 %v2507
      %v2547 = vpop.f32.mrf.mxu0
      %v2548 = vadd.f32 0.0, %v2547
      %2549 = vmatmul.f32.gmra.mxu0 %v2510
      %v2550 = vpop.f32.mrf.mxu0
      %v2551 = vadd.f32 0.0, %v2550
      %2552 = vdwg.mxu0
      %v2553 = vadd.f32 %v2078, %v2530
      %v2554 = vadd.f32 %v2079, %v2533
      %v2555 = vadd.f32 %v2080, %v2536
      %v2556 = vadd.f32 %v2081, %v2539
      %v2557 = vadd.f32 %v2082, %v2542
      %v2558 = vadd.f32 %v2083, %v2545
      %v2559 = vadd.f32 %v2084, %v2548
      %v2560 = vadd.f32 %v2085, %v2551
      %v2561 = vadd.f32 %v380, %v2553
      %v2562 = vadd.f32 %v381, %v2554
      %v2563 = vadd.f32 %v382, %v2555
      %v2564 = vadd.f32 %v383, %v2556
      %v2565 = vadd.f32 %v384, %v2557
      %v2566 = vadd.f32 %v385, %v2558
      %v2567 = vadd.f32 %v386, %v2559
      %v2568 = vadd.f32 %v387, %v2560
      %v2569 = vld [vmem:[%s9 + $0x6] sm:$0x1]
      %v2570 = vperm.slane %v2569, 0
      %v2571 = vadd.f32 %v2561, %v2570
      %v2572 = vadd.f32 %v2562, %v2570
      %v2573 = vadd.f32 %v2563, %v2570
      %v2574 = vadd.f32 %v2564, %v2570
      %v2575 = vadd.f32 %v2565, %v2570
      %v2576 = vadd.f32 %v2566, %v2570
      %v2577 = vadd.f32 %v2567, %v2570
      %v2578 = vadd.f32 %v2568, %v2570
      %v2579 = vld [vmem:[%s9 + $0x2] sm:$0x1]
      %v2580 = vld [vmem:[%s9 + $0x3] sm:$0x1]
      %v2581 = vsel %vm400, %v2571, 0.0
      %2582 = vadd.xlane.f32.xlu0 %v2581
      %v2583 = vpop.xlane.xlu0 %2582
      %v2584 = vsel %vm400, %v2572, 0.0
      %2585 = vadd.xlane.f32.xlu0 %v2584
      %v2586 = vpop.xlane.xlu0 %2585
      %v2587 = vsel %vm400, %v2573, 0.0
      %2588 = vadd.xlane.f32.xlu0 %v2587
      %v2589 = vpop.xlane.xlu0 %2588
      %v2590 = vsel %vm400, %v2574, 0.0
      %2591 = vadd.xlane.f32.xlu0 %v2590
      %v2592 = vpop.xlane.xlu0 %2591
      %v2593 = vsel %vm400, %v2575, 0.0
      %2594 = vadd.xlane.f32.xlu0 %v2593
      %v2595 = vpop.xlane.xlu0 %2594
      %v2596 = vsel %vm400, %v2576, 0.0
      %2597 = vadd.xlane.f32.xlu0 %v2596
      %v2598 = vpop.xlane.xlu0 %2597
      %v2599 = vsel %vm400, %v2577, 0.0
      %2600 = vadd.xlane.f32.xlu0 %v2599
      %v2601 = vpop.xlane.xlu0 %2600
      %v2602 = vsel %vm400, %v2578, 0.0
      %2603 = vadd.xlane.f32.xlu0 %v2602
      %v2604 = vpop.xlane.xlu0 %2603
      %v2605 = vmul.f32 %v2583, %v431
      %v2606 = vmul.f32 %v2586, %v431
      %v2607 = vmul.f32 %v2589, %v431
      %v2608 = vmul.f32 %v2592, %v431
      %v2609 = vmul.f32 %v2595, %v431
      %v2610 = vmul.f32 %v2598, %v431
      %v2611 = vmul.f32 %v2601, %v431
      %v2612 = vmul.f32 %v2604, %v431
      %v2613 = vsub.f32 %v2571, %v2605
      %v2614 = vsub.f32 %v2572, %v2606
      %v2615 = vsub.f32 %v2573, %v2607
      %v2616 = vsub.f32 %v2574, %v2608
      %v2617 = vsub.f32 %v2575, %v2609
      %v2618 = vsub.f32 %v2576, %v2610
      %v2619 = vsub.f32 %v2577, %v2611
      %v2620 = vsub.f32 %v2578, %v2612
      %v2621 = vmul.f32 %v2613, %v2613
      %v2622 = vmul.f32 %v2614, %v2614
      %v2623 = vmul.f32 %v2615, %v2615
      %v2624 = vmul.f32 %v2616, %v2616
      %v2625 = vmul.f32 %v2617, %v2617
      %v2626 = vmul.f32 %v2618, %v2618
      %v2627 = vmul.f32 %v2619, %v2619
      %v2628 = vmul.f32 %v2620, %v2620
      %v2629 = vsel %vm400, %v2621, 0.0
      %2630 = vadd.xlane.f32.xlu0 %v2629
      %v2631 = vpop.xlane.xlu0 %2630
      %v2632 = vsel %vm400, %v2622, 0.0
      %2633 = vadd.xlane.f32.xlu0 %v2632
      %v2634 = vpop.xlane.xlu0 %2633
      %v2635 = vsel %vm400, %v2623, 0.0
      %2636 = vadd.xlane.f32.xlu0 %v2635
      %v2637 = vpop.xlane.xlu0 %2636
      %v2638 = vsel %vm400, %v2624, 0.0
      %2639 = vadd.xlane.f32.xlu0 %v2638
      %v2640 = vpop.xlane.xlu0 %2639
      %v2641 = vsel %vm400, %v2625, 0.0
      %2642 = vadd.xlane.f32.xlu0 %v2641
      %v2643 = vpop.xlane.xlu0 %2642
      %v2644 = vsel %vm400, %v2626, 0.0
      %2645 = vadd.xlane.f32.xlu0 %v2644
      %v2646 = vpop.xlane.xlu0 %2645
      %v2647 = vsel %vm400, %v2627, 0.0
      %2648 = vadd.xlane.f32.xlu0 %v2647
      %v2649 = vpop.xlane.xlu0 %2648
      %v2650 = vsel %vm400, %v2628, 0.0
      %2651 = vadd.xlane.f32.xlu0 %v2650
      %v2652 = vpop.xlane.xlu0 %2651
      %v2653 = vmul.f32 %v2631, %v431
      %v2654 = vmul.f32 %v2634, %v431
      %v2655 = vmul.f32 %v2637, %v431
      %v2656 = vmul.f32 %v2640, %v431
      %v2657 = vmul.f32 %v2643, %v431
      %v2658 = vmul.f32 %v2646, %v431
      %v2659 = vmul.f32 %v2649, %v431
      %v2660 = vmul.f32 %v2652, %v431
      %v2661 = vadd.f32 %v2653, 1e-05
      %v2662 = vadd.f32 %v2654, 1e-05
      %v2663 = vadd.f32 %v2655, 1e-05
      %v2664 = vadd.f32 %v2656, 1e-05
      %v2665 = vadd.f32 %v2657, 1e-05
      %v2666 = vadd.f32 %v2658, 1e-05
      %v2667 = vadd.f32 %v2659, 1e-05
      %v2668 = vadd.f32 %v2660, 1e-05
      %v2669 = vrsqrt.pop %v2661
      %v2670 = vmul.f32 %v2669, %v2661
      %v2671 = vmul.f32 %v2670, %v2669
      %v2672 = vmul.f32 0.5, %v2671
      %v2673 = vsub.f32 1.5, %v2672
      %v2674 = vmul.f32 %v2669, %v2673
      %vm2675 = vweird.f32 %v2661
      %vm2676 = vweird.f32 %v2669
      %vm2677 = vmor %vm2675, %vm2676
      %v2678 = vsel %vm2677, %v2669, %v2674
      %v2679 = vrsqrt.pop %v2662
      %v2680 = vmul.f32 %v2679, %v2662
      %v2681 = vmul.f32 %v2680, %v2679
      %v2682 = vmul.f32 0.5, %v2681
      %v2683 = vsub.f32 1.5, %v2682
      %v2684 = vmul.f32 %v2679, %v2683
      %vm2685 = vweird.f32 %v2662
      %vm2686 = vweird.f32 %v2679
      %vm2687 = vmor %vm2685, %vm2686
      %v2688 = vsel %vm2687, %v2679, %v2684
      %v2689 = vrsqrt.pop %v2663
      %v2690 = vmul.f32 %v2689, %v2663
      %v2691 = vmul.f32 %v2690, %v2689
      %v2692 = vmul.f32 0.5, %v2691
      %v2693 = vsub.f32 1.5, %v2692
      %v2694 = vmul.f32 %v2689, %v2693
      %vm2695 = vweird.f32 %v2663
      %vm2696 = vweird.f32 %v2689
      %vm2697 = vmor %vm2695, %vm2696
      %v2698 = vsel %vm2697, %v2689, %v2694
      %v2699 = vrsqrt.pop %v2664
      %v2700 = vmul.f32 %v2699, %v2664
      %v2701 = vmul.f32 %v2700, %v2699
      %v2702 = vmul.f32 0.5, %v2701
      %v2703 = vsub.f32 1.5, %v2702
      %v2704 = vmul.f32 %v2699, %v2703
      %vm2705 = vweird.f32 %v2664
      %vm2706 = vweird.f32 %v2699
      %vm2707 = vmor %vm2705, %vm2706
      %v2708 = vsel %vm2707, %v2699, %v2704
      %v2709 = vrsqrt.pop %v2665
      %v2710 = vmul.f32 %v2709, %v2665
      %v2711 = vmul.f32 %v2710, %v2709
      %v2712 = vmul.f32 0.5, %v2711
      %v2713 = vsub.f32 1.5, %v2712
      %v2714 = vmul.f32 %v2709, %v2713
      %vm2715 = vweird.f32 %v2665
      %vm2716 = vweird.f32 %v2709
      %vm2717 = vmor %vm2715, %vm2716
      %v2718 = vsel %vm2717, %v2709, %v2714
      %v2719 = vrsqrt.pop %v2666
      %v2720 = vmul.f32 %v2719, %v2666
      %v2721 = vmul.f32 %v2720, %v2719
      %v2722 = vmul.f32 0.5, %v2721
      %v2723 = vsub.f32 1.5, %v2722
      %v2724 = vmul.f32 %v2719, %v2723
      %vm2725 = vweird.f32 %v2666
      %vm2726 = vweird.f32 %v2719
      %vm2727 = vmor %vm2725, %vm2726
      %v2728 = vsel %vm2727, %v2719, %v2724
      %v2729 = vrsqrt.pop %v2667
      %v2730 = vmul.f32 %v2729, %v2667
      %v2731 = vmul.f32 %v2730, %v2729
      %v2732 = vmul.f32 0.5, %v2731
      %v2733 = vsub.f32 1.5, %v2732
      %v2734 = vmul.f32 %v2729, %v2733
      %vm2735 = vweird.f32 %v2667
      %vm2736 = vweird.f32 %v2729
      %vm2737 = vmor %vm2735, %vm2736
      %v2738 = vsel %vm2737, %v2729, %v2734
      %v2739 = vrsqrt.pop %v2668
      %v2740 = vmul.f32 %v2739, %v2668
      %v2741 = vmul.f32 %v2740, %v2739
      %v2742 = vmul.f32 0.5, %v2741
      %v2743 = vsub.f32 1.5, %v2742
      %v2744 = vmul.f32 %v2739, %v2743
      %vm2745 = vweird.f32 %v2668
      %vm2746 = vweird.f32 %v2739
      %vm2747 = vmor %vm2745, %vm2746
      %v2748 = vsel %vm2747, %v2739, %v2744
      %v2749 = vmul.f32 %v2613, %v2678
      %v2750 = vmul.f32 %v2614, %v2688
      %v2751 = vmul.f32 %v2615, %v2698
      %v2752 = vmul.f32 %v2616, %v2708
      %v2753 = vmul.f32 %v2617, %v2718
      %v2754 = vmul.f32 %v2618, %v2728
      %v2755 = vmul.f32 %v2619, %v2738
      %v2756 = vmul.f32 %v2620, %v2748
      %v2757 = vperm.slane %v2579, 0
      %v2758 = vmul.f32 %v2749, %v2757
      %v2759 = vmul.f32 %v2750, %v2757
      %v2760 = vmul.f32 %v2751, %v2757
      %v2761 = vmul.f32 %v2752, %v2757
      %v2762 = vmul.f32 %v2753, %v2757
      %v2763 = vmul.f32 %v2754, %v2757
      %v2764 = vmul.f32 %v2755, %v2757
      %v2765 = vmul.f32 %v2756, %v2757
      %v2766 = vperm.slane %v2580, 0
      %v2767 = vadd.f32 %v2758, %v2766
      %v2768 = vadd.f32 %v2759, %v2766
      %v2769 = vadd.f32 %v2760, %v2766
      %v2770 = vadd.f32 %v2761, %v2766
      %v2771 = vadd.f32 %v2762, %v2766
      %v2772 = vadd.f32 %v2763, %v2766
      %v2773 = vadd.f32 %v2764, %v2766
      %v2774 = vadd.f32 %v2765, %v2766
      %v2775 = vld [vmem:[%s4 + $0x20] sm:$0xff]
      %v2776 = vld [vmem:[%s4 + $0x28] sm:$0xff]
      %v2777 = vld [vmem:[%s4 + $0x30] sm:$0xff]
      %v2778 = vld [vmem:[%s4 + $0x38] sm:$0xff]
      %v2779 = vld [vmem:[%s4 + $0x40] sm:$0xff]
      %v2780 = vld [vmem:[%s4 + $0x48] sm:$0xff]
      %v2781 = vld [vmem:[%s4 + $0x50] sm:$0xff]
      %v2782 = vld [vmem:[%s4 + $0x58] sm:$0xff]
      %v2784 = vsel %vm400, %v2767, 0
      %v2787 = vsel %vm400, %v2768, 0
      %v2790 = vsel %vm400, %v2769, 0
      %v2793 = vsel %vm400, %v2770, 0
      %v2796 = vsel %vm400, %v2771, 0
      %v2799 = vsel %vm400, %v2772, 0
      %v2802 = vsel %vm400, %v2773, 0
      %v2805 = vsel %vm400, %v2774, 0
      %2807 = vmatpush.msra.mxu0 0.0
      %2808 = vmatpush.msra.mxu0 0.0
      %2809 = vmatpush.msra.mxu0 0.0
      %2810 = vmatpush.msra.mxu0 0.0
      %2811 = vmatpush.msra.mxu0 0.0
      %2812 = vmatpush.msra.mxu0 0.0
      %2813 = vmatpush.msra.mxu0 0.0
      %2814 = vmatpush.msra.mxu0 0.0
      %2815 = vmatpush.msra.mxu0 0.0
      %2816 = vmatpush.msra.mxu0 0.0
      %2817 = vmatpush.msra.mxu0 0.0
      %2818 = vmatpush.msra.mxu0 0.0
      %2819 = vmatpush.msra.mxu0 %v2778
      %2820 = vmatpush.msra.mxu0 %v2777
      %2821 = vmatpush.msra.mxu0 %v2776
      %2822 = vmatpush.msra.mxu0 %v2775
      %2823 = vmatmul.f32.gmra.mxu0 %v2784
      %v2824 = vpop.f32.mrf.mxu0
      %v2825 = vadd.f32 0.0, %v2824
      %2826 = vmatmul.f32.gmra.mxu0 %v2787
      %v2827 = vpop.f32.mrf.mxu0
      %v2828 = vadd.f32 0.0, %v2827
      %2829 = vmatmul.f32.gmra.mxu0 %v2790
      %v2830 = vpop.f32.mrf.mxu0
      %v2831 = vadd.f32 0.0, %v2830
      %2832 = vmatmul.f32.gmra.mxu0 %v2793
      %v2833 = vpop.f32.mrf.mxu0
      %v2834 = vadd.f32 0.0, %v2833
      %2835 = vmatmul.f32.gmra.mxu0 %v2796
      %v2836 = vpop.f32.mrf.mxu0
      %v2837 = vadd.f32 0.0, %v2836
      %2838 = vmatmul.f32.gmra.mxu0 %v2799
      %v2839 = vpop.f32.mrf.mxu0
      %v2840 = vadd.f32 0.0, %v2839
      %2841 = vmatmul.f32.gmra.mxu0 %v2802
      %v2842 = vpop.f32.mrf.mxu0
      %v2843 = vadd.f32 0.0, %v2842
      %2844 = vmatmul.f32.gmra.mxu0 %v2805
      %v2845 = vpop.f32.mrf.mxu0
      %v2846 = vadd.f32 0.0, %v2845
      %2847 = vdwg.mxu0
      %v2848 = vld [vmem:[%s5] sm:$0xff]
      %v2849 = vld [vmem:[%s5 + $0x8] sm:$0xff]
      %vm2850 = vcmask 130048
      %v2852 = vsel %vm2850, %v388, 0
      %v2855 = vsel %vm2850, %v389, 0
      %v2858 = vsel %vm2850, %v390, 0
      %v2861 = vsel %vm2850, %v391, 0
      %v2864 = vsel %vm2850, %v392, 0
      %v2867 = vsel %vm2850, %v393, 0
      %v2870 = vsel %vm2850, %v394, 0
      %v2873 = vsel %vm2850, %v395, 0
      %v2876 = vsel %vm2850, %v396, 0
      %v2879 = vsel %vm2850, %v397, 0
      %2881 = vmatpush.msra.mxu0 0.0
      %2882 = vmatpush.msra.mxu0 0.0
      %2883 = vmatpush.msra.mxu0 0.0
      %2884 = vmatpush.msra.mxu0 0.0
      %2885 = vmatpush.msra.mxu0 0.0
      %2886 = vmatpush.msra.mxu0 0.0
      %2887 = vmatpush.msra.mxu0 0.0
      %2888 = vmatpush.msra.mxu0 0.0
      %2889 = vmatpush.msra.mxu0 0.0
      %2890 = vmatpush.msra.mxu0 0.0
      %2891 = vmatpush.msra.mxu0 0.0
      %2892 = vmatpush.msra.mxu0 0.0
      %2893 = vmatpush.msra.mxu0 0.0
      %2894 = vmatpush.msra.mxu0 0.0
      %2895 = vmatpush.msra.mxu0 %v2849
      %2896 = vmatpush.msra.mxu0 %v2848
      %2897 = vmatmul.f32.gmra.mxu0 %v2852
      %v2898 = vpop.f32.mrf.mxu0
      %v2899 = vadd.f32 0.0, %v2898
      %2900 = vmatmul.f32.gmra.mxu0 %v2855
      %v2901 = vpop.f32.mrf.mxu0
      %v2902 = vadd.f32 0.0, %v2901
      %2903 = vmatmul.f32.gmra.mxu0 %v2858
      %v2904 = vpop.f32.mrf.mxu0
      %v2905 = vadd.f32 0.0, %v2904
      %2906 = vmatmul.f32.gmra.mxu0 %v2861
      %v2907 = vpop.f32.mrf.mxu0
      %v2908 = vadd.f32 0.0, %v2907
      %2909 = vmatmul.f32.gmra.mxu0 %v2864
      %v2910 = vpop.f32.mrf.mxu0
      %v2911 = vadd.f32 0.0, %v2910
      %2912 = vmatmul.f32.gmra.mxu0 %v2867
      %v2913 = vpop.f32.mrf.mxu0
      %v2914 = vadd.f32 0.0, %v2913
      %2915 = vmatmul.f32.gmra.mxu0 %v2870
      %v2916 = vpop.f32.mrf.mxu0
      %v2917 = vadd.f32 0.0, %v2916
      %2918 = vmatmul.f32.gmra.mxu0 %v2873
      %v2919 = vpop.f32.mrf.mxu0
      %v2920 = vadd.f32 0.0, %v2919
      %2921 = vmatmul.f32.gmra.mxu0 %v2876
      %v2922 = vpop.f32.mrf.mxu0
      %v2923 = vadd.f32 0.0, %v2922
      %2924 = vmatmul.f32.gmra.mxu0 %v2879
      %v2925 = vpop.f32.mrf.mxu0
      %v2926 = vadd.f32 0.0, %v2925
      %2927 = vdwg.mxu0
      %v2929 = vsel %vm707, %v2825, 0
      %v2932 = vsel %vm707, %v2828, 0
      %v2935 = vsel %vm707, %v2831, 0
      %v2938 = vsel %vm707, %v2834, 0
      %v2941 = vsel %vm707, %v2837, 0
      %v2944 = vsel %vm707, %v2840, 0
      %v2947 = vsel %vm707, %v2843, 0
      %v2950 = vsel %vm707, %v2846, 0
      %v2953 = vsel %vm707, %v2899, 0
      %v2956 = vsel %vm707, %v2902, 0
      %v2959 = vsel %vm707, %v2905, 0
      %v2962 = vsel %vm707, %v2908, 0
      %v2965 = vsel %vm707, %v2911, 0
      %v2968 = vsel %vm707, %v2914, 0
      %v2971 = vsel %vm707, %v2917, 0
      %v2974 = vsel %vm707, %v2920, 0
      %v2977 = vsel %vm707, %v2923, 0
      %v2980 = vsel %vm707, %v2926, 0
      %2982 = vmatpush.xpose.msra.mxu0 0.0
      %2983 = vmatpush.xpose.msra.mxu0 0.0
      %2984 = vmatpush.xpose.msra.mxu0 0.0
      %2985 = vmatpush.xpose.msra.mxu0 0.0
      %2986 = vmatpush.xpose.msra.mxu0 0.0
      %2987 = vmatpush.xpose.msra.mxu0 0.0
      %2988 = vmatpush.xpose.msra.mxu0 %v2980
      %2989 = vmatpush.xpose.msra.mxu0 %v2977
      %2990 = vmatpush.xpose.msra.mxu0 %v2974
      %2991 = vmatpush.xpose.msra.mxu0 %v2971
      %2992 = vmatpush.xpose.msra.mxu0 %v2968
      %2993 = vmatpush.xpose.msra.mxu0 %v2965
      %2994 = vmatpush.xpose.msra.mxu0 %v2962
      %2995 = vmatpush.xpose.msra.mxu0 %v2959
      %2996 = vmatpush.xpose.msra.mxu0 %v2956
      %2997 = vmatpush.xpose.msra.mxu0 %v2953
      %2998 = vmatmul.f32.gmra.mxu0 %v2929
      %v2999 = vpop.f32.mrf.mxu0
      %v3000 = vadd.f32 0.0, %v2999
      %3001 = vmatmul.f32.gmra.mxu0 %v2932
      %v3002 = vpop.f32.mrf.mxu0
      %v3003 = vadd.f32 0.0, %v3002
      %3004 = vmatmul.f32.gmra.mxu0 %v2935
      %v3005 = vpop.f32.mrf.mxu0
      %v3006 = vadd.f32 0.0, %v3005
      %3007 = vmatmul.f32.gmra.mxu0 %v2938
      %v3008 = vpop.f32.mrf.mxu0
      %v3009 = vadd.f32 0.0, %v3008
      %3010 = vmatmul.f32.gmra.mxu0 %v2941
      %v3011 = vpop.f32.mrf.mxu0
      %v3012 = vadd.f32 0.0, %v3011
      %3013 = vmatmul.f32.gmra.mxu0 %v2944
      %v3014 = vpop.f32.mrf.mxu0
      %v3015 = vadd.f32 0.0, %v3014
      %3016 = vmatmul.f32.gmra.mxu0 %v2947
      %v3017 = vpop.f32.mrf.mxu0
      %v3018 = vadd.f32 0.0, %v3017
      %3019 = vmatmul.f32.gmra.mxu0 %v2950
      %v3020 = vpop.f32.mrf.mxu0
      %v3021 = vadd.f32 0.0, %v3020
      %3022 = vdwg.mxu0
      %v3023 = vmul.f32 %v3000, 0.35355338
      %v3024 = vmul.f32 %v3003, 0.35355338
      %v3025 = vmul.f32 %v3006, 0.35355338
      %v3026 = vmul.f32 %v3009, 0.35355338
      %v3027 = vmul.f32 %v3012, 0.35355338
      %v3028 = vmul.f32 %v3015, 0.35355338
      %v3029 = vmul.f32 %v3018, 0.35355338
      %v3030 = vmul.f32 %v3021, 0.35355338
      %vm3031 = vcmask 629760
      %v3032 = vsel %vm3031, %v3023, -inf
      %3033 = vmax.xlane.f32.xlu0 %v3032
      %v3034 = vpop.xlane.xlu0 %3033
      %v3035 = vsel %vm3031, %v3024, -inf
      %3036 = vmax.xlane.f32.xlu0 %v3035
      %v3037 = vpop.xlane.xlu0 %3036
      %v3038 = vsel %vm3031, %v3025, -inf
      %3039 = vmax.xlane.f32.xlu0 %v3038
      %v3040 = vpop.xlane.xlu0 %3039
      %v3041 = vsel %vm3031, %v3026, -inf
      %3042 = vmax.xlane.f32.xlu0 %v3041
      %v3043 = vpop.xlane.xlu0 %3042
      %v3044 = vsel %vm3031, %v3027, -inf
      %3045 = vmax.xlane.f32.xlu0 %v3044
      %v3046 = vpop.xlane.xlu0 %3045
      %v3047 = vsel %vm3031, %v3028, -inf
      %3048 = vmax.xlane.f32.xlu0 %v3047
      %v3049 = vpop.xlane.xlu0 %3048
      %v3050 = vsel %vm3031, %v3029, -inf
      %3051 = vmax.xlane.f32.xlu0 %v3050
      %v3052 = vpop.xlane.xlu0 %3051
      %v3053 = vsel %vm3031, %v3030, -inf
      %3054 = vmax.xlane.f32.xlu0 %v3053
      %v3055 = vpop.xlane.xlu0 %3054
      %v3056 = vsub.f32 %v3023, %v3034
      %v3057 = vsub.f32 %v3024, %v3037
      %v3058 = vsub.f32 %v3025, %v3040
      %v3059 = vsub.f32 %v3026, %v3043
      %v3060 = vsub.f32 %v3027, %v3046
      %v3061 = vsub.f32 %v3028, %v3049
      %v3062 = vsub.f32 %v3029, %v3052
      %v3063 = vsub.f32 %v3030, %v3055
      %v3064 = vmul.f32 %v3056, 1.442695
      %v3065 = vpow.pop %v3064
      %v3066 = vmul.f32 %v3057, 1.442695
      %v3067 = vpow.pop %v3066
      %v3068 = vmul.f32 %v3058, 1.442695
      %v3069 = vpow.pop %v3068
      %v3070 = vmul.f32 %v3059, 1.442695
      %v3071 = vpow.pop %v3070
      %v3072 = vmul.f32 %v3060, 1.442695
      %v3073 = vpow.pop %v3072
      %v3074 = vmul.f32 %v3061, 1.442695
      %v3075 = vpow.pop %v3074
      %v3076 = vmul.f32 %v3062, 1.442695
      %v3077 = vpow.pop %v3076
      %v3078 = vmul.f32 %v3063, 1.442695
      %v3079 = vpow.pop %v3078
      %v3080 = vsel %vm3031, %v3065, 0.0
      %3081 = vadd.xlane.f32.xlu0 %v3080
      %v3082 = vpop.xlane.xlu0 %3081
      %v3083 = vsel %vm3031, %v3067, 0.0
      %3084 = vadd.xlane.f32.xlu0 %v3083
      %v3085 = vpop.xlane.xlu0 %3084
      %v3086 = vsel %vm3031, %v3069, 0.0
      %3087 = vadd.xlane.f32.xlu0 %v3086
      %v3088 = vpop.xlane.xlu0 %3087
      %v3089 = vsel %vm3031, %v3071, 0.0
      %3090 = vadd.xlane.f32.xlu0 %v3089
      %v3091 = vpop.xlane.xlu0 %3090
      %v3092 = vsel %vm3031, %v3073, 0.0
      %3093 = vadd.xlane.f32.xlu0 %v3092
      %v3094 = vpop.xlane.xlu0 %3093
      %v3095 = vsel %vm3031, %v3075, 0.0
      %3096 = vadd.xlane.f32.xlu0 %v3095
      %v3097 = vpop.xlane.xlu0 %3096
      %v3098 = vsel %vm3031, %v3077, 0.0
      %3099 = vadd.xlane.f32.xlu0 %v3098
      %v3100 = vpop.xlane.xlu0 %3099
      %v3101 = vsel %vm3031, %v3079, 0.0
      %3102 = vadd.xlane.f32.xlu0 %v3101
      %v3103 = vpop.xlane.xlu0 %3102
      %v3104 = vrcp.pop %v3082
      %v3105 = vmul.f32 %v3082, %v3104
      %v3106 = vsub.f32 1.0, %v3105
      %v3107 = vmul.f32 %v3104, %v3106
      %v3108 = vadd.f32 %v3104, %v3107
      %vm3109 = vweird.f32 %v3082
      %vm3110 = vweird.f32 %v3104
      %vm3111 = vmor %vm3109, %vm3110
      %v3112 = vsel %vm3111, %v3104, %v3108
      %v3113 = vand.u32 2147483647, %v3082
      %vm3114 = vcmp.eq.f32.partialorder %v3113, 8.507059e+37
      %v3115 = vand.u32 %v3082, 2147483648
      %v3116 = vor.u32 1.1754944e-38, %v3115
      %v3117 = vsel %vm3114, %v3116, %v3112
      %v3118 = vmul.f32 1.0, %v3117
      %v3119 = vrcp.pop %v3085
      %v3120 = vmul.f32 %v3085, %v3119
      %v3121 = vsub.f32 1.0, %v3120
      %v3122 = vmul.f32 %v3119, %v3121
      %v3123 = vadd.f32 %v3119, %v3122
      %vm3124 = vweird.f32 %v3085
      %vm3125 = vweird.f32 %v3119
      %vm3126 = vmor %vm3124, %vm3125
      %v3127 = vsel %vm3126, %v3119, %v3123
      %v3128 = vand.u32 2147483647, %v3085
      %vm3129 = vcmp.eq.f32.partialorder %v3128, 8.507059e+37
      %v3130 = vand.u32 %v3085, 2147483648
      %v3131 = vor.u32 1.1754944e-38, %v3130
      %v3132 = vsel %vm3129, %v3131, %v3127
      %v3133 = vmul.f32 1.0, %v3132
      %v3134 = vrcp.pop %v3088
      %v3135 = vmul.f32 %v3088, %v3134
      %v3136 = vsub.f32 1.0, %v3135
      %v3137 = vmul.f32 %v3134, %v3136
      %v3138 = vadd.f32 %v3134, %v3137
      %vm3139 = vweird.f32 %v3088
      %vm3140 = vweird.f32 %v3134
      %vm3141 = vmor %vm3139, %vm3140
      %v3142 = vsel %vm3141, %v3134, %v3138
      %v3143 = vand.u32 2147483647, %v3088
      %vm3144 = vcmp.eq.f32.partialorder %v3143, 8.507059e+37
      %v3145 = vand.u32 %v3088, 2147483648
      %v3146 = vor.u32 1.1754944e-38, %v3145
      %v3147 = vsel %vm3144, %v3146, %v3142
      %v3148 = vmul.f32 1.0, %v3147
      %v3149 = vrcp.pop %v3091
      %v3150 = vmul.f32 %v3091, %v3149
      %v3151 = vsub.f32 1.0, %v3150
      %v3152 = vmul.f32 %v3149, %v3151
      %v3153 = vadd.f32 %v3149, %v3152
      %vm3154 = vweird.f32 %v3091
      %vm3155 = vweird.f32 %v3149
      %vm3156 = vmor %vm3154, %vm3155
      %v3157 = vsel %vm3156, %v3149, %v3153
      %v3158 = vand.u32 2147483647, %v3091
      %vm3159 = vcmp.eq.f32.partialorder %v3158, 8.507059e+37
      %v3160 = vand.u32 %v3091, 2147483648
      %v3161 = vor.u32 1.1754944e-38, %v3160
      %v3162 = vsel %vm3159, %v3161, %v3157
      %v3163 = vmul.f32 1.0, %v3162
      %v3164 = vrcp.pop %v3094
      %v3165 = vmul.f32 %v3094, %v3164
      %v3166 = vsub.f32 1.0, %v3165
      %v3167 = vmul.f32 %v3164, %v3166
      %v3168 = vadd.f32 %v3164, %v3167
      %vm3169 = vweird.f32 %v3094
      %vm3170 = vweird.f32 %v3164
      %vm3171 = vmor %vm3169, %vm3170
      %v3172 = vsel %vm3171, %v3164, %v3168
      %v3173 = vand.u32 2147483647, %v3094
      %vm3174 = vcmp.eq.f32.partialorder %v3173, 8.507059e+37
      %v3175 = vand.u32 %v3094, 2147483648
      %v3176 = vor.u32 1.1754944e-38, %v3175
      %v3177 = vsel %vm3174, %v3176, %v3172
      %v3178 = vmul.f32 1.0, %v3177
      %v3179 = vrcp.pop %v3097
      %v3180 = vmul.f32 %v3097, %v3179
      %v3181 = vsub.f32 1.0, %v3180
      %v3182 = vmul.f32 %v3179, %v3181
      %v3183 = vadd.f32 %v3179, %v3182
      %vm3184 = vweird.f32 %v3097
      %vm3185 = vweird.f32 %v3179
      %vm3186 = vmor %vm3184, %vm3185
      %v3187 = vsel %vm3186, %v3179, %v3183
      %v3188 = vand.u32 2147483647, %v3097
      %vm3189 = vcmp.eq.f32.partialorder %v3188, 8.507059e+37
      %v3190 = vand.u32 %v3097, 2147483648
      %v3191 = vor.u32 1.1754944e-38, %v3190
      %v3192 = vsel %vm3189, %v3191, %v3187
      %v3193 = vmul.f32 1.0, %v3192
      %v3194 = vrcp.pop %v3100
      %v3195 = vmul.f32 %v3100, %v3194
      %v3196 = vsub.f32 1.0, %v3195
      %v3197 = vmul.f32 %v3194, %v3196
      %v3198 = vadd.f32 %v3194, %v3197
      %vm3199 = vweird.f32 %v3100
      %vm3200 = vweird.f32 %v3194
      %vm3201 = vmor %vm3199, %vm3200
      %v3202 = vsel %vm3201, %v3194, %v3198
      %v3203 = vand.u32 2147483647, %v3100
      %vm3204 = vcmp.eq.f32.partialorder %v3203, 8.507059e+37
      %v3205 = vand.u32 %v3100, 2147483648
      %v3206 = vor.u32 1.1754944e-38, %v3205
      %v3207 = vsel %vm3204, %v3206, %v3202
      %v3208 = vmul.f32 1.0, %v3207
      %v3209 = vrcp.pop %v3103
      %v3210 = vmul.f32 %v3103, %v3209
      %v3211 = vsub.f32 1.0, %v3210
      %v3212 = vmul.f32 %v3209, %v3211
      %v3213 = vadd.f32 %v3209, %v3212
      %vm3214 = vweird.f32 %v3103
      %vm3215 = vweird.f32 %v3209
      %vm3216 = vmor %vm3214, %vm3215
      %v3217 = vsel %vm3216, %v3209, %v3213
      %v3218 = vand.u32 2147483647, %v3103
      %vm3219 = vcmp.eq.f32.partialorder %v3218, 8.507059e+37
      %v3220 = vand.u32 %v3103, 2147483648
      %v3221 = vor.u32 1.1754944e-38, %v3220
      %v3222 = vsel %vm3219, %v3221, %v3217
      %v3223 = vmul.f32 1.0, %v3222
      %3224 = vrot.lane.b32.xlu0 %v2899, 96
      %v3225 = vpop.permute.xlu0 %3224
      %3226 = vrot.lane.b32.xlu0 %v2902, 96
      %v3227 = vpop.permute.xlu0 %3226
      %3228 = vrot.lane.b32.xlu0 %v2905, 96
      %v3229 = vpop.permute.xlu0 %3228
      %3230 = vrot.lane.b32.xlu0 %v2908, 96
      %v3231 = vpop.permute.xlu0 %3230
      %3232 = vrot.lane.b32.xlu0 %v2911, 96
      %v3233 = vpop.permute.xlu0 %3232
      %3234 = vrot.lane.b32.xlu0 %v2914, 96
      %v3235 = vpop.permute.xlu0 %3234
      %3236 = vrot.lane.b32.xlu0 %v2917, 96
      %v3237 = vpop.permute.xlu0 %3236
      %3238 = vrot.lane.b32.xlu0 %v2920, 96
      %v3239 = vpop.permute.xlu0 %3238
      %3240 = vrot.lane.b32.xlu0 %v2923, 96
      %v3241 = vpop.permute.xlu0 %3240
      %3242 = vrot.lane.b32.xlu0 %v2926, 96
      %v3243 = vpop.permute.xlu0 %3242
      %v3254 = vsel %vm3031, %v3065, 0
      %v3257 = vsel %vm3031, %v3067, 0
      %v3260 = vsel %vm3031, %v3069, 0
      %v3263 = vsel %vm3031, %v3071, 0
      %v3266 = vsel %vm3031, %v3073, 0
      %v3269 = vsel %vm3031, %v3075, 0
      %v3272 = vsel %vm3031, %v3077, 0
      %v3275 = vsel %vm3031, %v3079, 0
      %vm3277 = vcmask 1044480
      %v3278 = vsel %vm3277, %v3243, 0
      %3280 = vmatpush.msra.mxu0 0.0
      %3281 = vmatpush.msra.mxu0 0.0
      %3282 = vmatpush.msra.mxu0 0.0
      %3283 = vmatpush.msra.mxu0 0.0
      %3284 = vmatpush.msra.mxu0 0.0
      %3285 = vmatpush.msra.mxu0 0.0
      %3286 = vmatpush.msra.mxu0 %v3278
      %3287 = vmatpush.msra.mxu0 %v3241
      %3288 = vmatpush.msra.mxu0 %v3239
      %3289 = vmatpush.msra.mxu0 %v3237
      %3290 = vmatpush.msra.mxu0 %v3235
      %3291 = vmatpush.msra.mxu0 %v3233
      %3292 = vmatpush.msra.mxu0 %v3231
      %3293 = vmatpush.msra.mxu0 %v3229
      %3294 = vmatpush.msra.mxu0 %v3227
      %3295 = vmatpush.msra.mxu0 %v3225
      %3296 = vmatmul.f32.gmra.mxu0 %v3254
      %v3297 = vpop.f32.mrf.mxu0
      %v3298 = vadd.f32 0.0, %v3297
      %3299 = vmatmul.f32.gmra.mxu0 %v3257
      %v3300 = vpop.f32.mrf.mxu0
      %v3301 = vadd.f32 0.0, %v3300
      %3302 = vmatmul.f32.gmra.mxu0 %v3260
      %v3303 = vpop.f32.mrf.mxu0
      %v3304 = vadd.f32 0.0, %v3303
      %3305 = vmatmul.f32.gmra.mxu0 %v3263
      %v3306 = vpop.f32.mrf.mxu0
      %v3307 = vadd.f32 0.0, %v3306
      %3308 = vmatmul.f32.gmra.mxu0 %v3266
      %v3309 = vpop.f32.mrf.mxu0
      %v3310 = vadd.f32 0.0, %v3309
      %3311 = vmatmul.f32.gmra.mxu0 %v3269
      %v3312 = vpop.f32.mrf.mxu0
      %v3313 = vadd.f32 0.0, %v3312
      %3314 = vmatmul.f32.gmra.mxu0 %v3272
      %v3315 = vpop.f32.mrf.mxu0
      %v3316 = vadd.f32 0.0, %v3315
      %3317 = vmatmul.f32.gmra.mxu0 %v3275
      %v3318 = vpop.f32.mrf.mxu0
      %v3319 = vadd.f32 0.0, %v3318
      %3320 = vdwg.mxu0
      %v3321 = vmul.f32 %v3298, %v3118
      %v3322 = vmul.f32 %v3301, %v3133
      %v3323 = vmul.f32 %v3304, %v3148
      %v3324 = vmul.f32 %v3307, %v3163
      %v3325 = vmul.f32 %v3310, %v3178
      %v3326 = vmul.f32 %v3313, %v3193
      %v3327 = vmul.f32 %v3316, %v3208
      %v3328 = vmul.f32 %v3319, %v3223
      %3329 = vrot.lane.b32.xlu0 %v2825, 120
      %v3330 = vpop.permute.xlu0 %3329
      %3331 = vrot.lane.b32.xlu0 %v2828, 120
      %v3332 = vpop.permute.xlu0 %3331
      %3333 = vrot.lane.b32.xlu0 %v2831, 120
      %v3334 = vpop.permute.xlu0 %3333
      %3335 = vrot.lane.b32.xlu0 %v2834, 120
      %v3336 = vpop.permute.xlu0 %3335
      %3337 = vrot.lane.b32.xlu0 %v2837, 120
      %v3338 = vpop.permute.xlu0 %3337
      %3339 = vrot.lane.b32.xlu0 %v2840, 120
      %v3340 = vpop.permute.xlu0 %3339
      %3341 = vrot.lane.b32.xlu0 %v2843, 120
      %v3342 = vpop.permute.xlu0 %3341
      %3343 = vrot.lane.b32.xlu0 %v2846, 120
      %v3344 = vpop.permute.xlu0 %3343
      %3345 = vrot.lane.b32.xlu0 %v2899, 120
      %v3346 = vpop.permute.xlu0 %3345
      %3347 = vrot.lane.b32.xlu0 %v2902, 120
      %v3348 = vpop.permute.xlu0 %3347
      %3349 = vrot.lane.b32.xlu0 %v2905, 120
      %v3350 = vpop.permute.xlu0 %3349
      %3351 = vrot.lane.b32.xlu0 %v2908, 120
      %v3352 = vpop.permute.xlu0 %3351
      %3353 = vrot.lane.b32.xlu0 %v2911, 120
      %v3354 = vpop.permute.xlu0 %3353
      %3355 = vrot.lane.b32.xlu0 %v2914, 120
      %v3356 = vpop.permute.xlu0 %3355
      %3357 = vrot.lane.b32.xlu0 %v2917, 120
      %v3358 = vpop.permute.xlu0 %3357
      %3359 = vrot.lane.b32.xlu0 %v2920, 120
      %v3360 = vpop.permute.xlu0 %3359
      %3361 = vrot.lane.b32.xlu0 %v2923, 120
      %v3362 = vpop.permute.xlu0 %3361
      %3363 = vrot.lane.b32.xlu0 %v2926, 120
      %v3364 = vpop.permute.xlu0 %3363
      %v3365 = vsel %vm707, %v3330, 0
      %v3367 = vsel %vm707, %v3332, 0
      %v3369 = vsel %vm707, %v3334, 0
      %v3371 = vsel %vm707, %v3336, 0
      %v3373 = vsel %vm707, %v3338, 0
      %v3375 = vsel %vm707, %v3340, 0
      %v3377 = vsel %vm707, %v3342, 0
      %v3379 = vsel %vm707, %v3344, 0
      %v3381 = vsel %vm707, %v3346, 0
      %v3383 = vsel %vm707, %v3348, 0
      %v3385 = vsel %vm707, %v3350, 0
      %v3387 = vsel %vm707, %v3352, 0
      %v3389 = vsel %vm707, %v3354, 0
      %v3391 = vsel %vm707, %v3356, 0
      %v3393 = vsel %vm707, %v3358, 0
      %v3395 = vsel %vm707, %v3360, 0
      %v3397 = vsel %vm707, %v3362, 0
      %v3399 = vsel %vm707, %v3364, 0
      %3401 = vmatpush.xpose.msra.mxu0 0.0
      %3402 = vmatpush.xpose.msra.mxu0 0.0
      %3403 = vmatpush.xpose.msra.mxu0 0.0
      %3404 = vmatpush.xpose.msra.mxu0 0.0
      %3405 = vmatpush.xpose.msra.mxu0 0.0
      %3406 = vmatpush.xpose.msra.mxu0 0.0
      %3407 = vmatpush.xpose.msra.mxu0 %v3399
      %3408 = vmatpush.xpose.msra.mxu0 %v3397
      %3409 = vmatpush.xpose.msra.mxu0 %v3395
      %3410 = vmatpush.xpose.msra.mxu0 %v3393
      %3411 = vmatpush.xpose.msra.mxu0 %v3391
      %3412 = vmatpush.xpose.msra.mxu0 %v3389
      %3413 = vmatpush.xpose.msra.mxu0 %v3387
      %3414 = vmatpush.xpose.msra.mxu0 %v3385
      %3415 = vmatpush.xpose.msra.mxu0 %v3383
      %3416 = vmatpush.xpose.msra.mxu0 %v3381
      %3417 = vmatmul.f32.gmra.mxu0 %v3365
      %v3418 = vpop.f32.mrf.mxu0
      %v3419 = vadd.f32 0.0, %v3418
      %3420 = vmatmul.f32.gmra.mxu0 %v3367
      %v3421 = vpop.f32.mrf.mxu0
      %v3422 = vadd.f32 0.0, %v3421
      %3423 = vmatmul.f32.gmra.mxu0 %v3369
      %v3424 = vpop.f32.mrf.mxu0
      %v3425 = vadd.f32 0.0, %v3424
      %3426 = vmatmul.f32.gmra.mxu0 %v3371
      %v3427 = vpop.f32.mrf.mxu0
      %v3428 = vadd.f32 0.0, %v3427
      %3429 = vmatmul.f32.gmra.mxu0 %v3373
      %v3430 = vpop.f32.mrf.mxu0
      %v3431 = vadd.f32 0.0, %v3430
      %3432 = vmatmul.f32.gmra.mxu0 %v3375
      %v3433 = vpop.f32.mrf.mxu0
      %v3434 = vadd.f32 0.0, %v3433
      %3435 = vmatmul.f32.gmra.mxu0 %v3377
      %v3436 = vpop.f32.mrf.mxu0
      %v3437 = vadd.f32 0.0, %v3436
      %3438 = vmatmul.f32.gmra.mxu0 %v3379
      %v3439 = vpop.f32.mrf.mxu0
      %v3440 = vadd.f32 0.0, %v3439
      %3441 = vdwg.mxu0
      %v3442 = vmul.f32 %v3419, 0.35355338
      %v3443 = vmul.f32 %v3422, 0.35355338
      %v3444 = vmul.f32 %v3425, 0.35355338
      %v3445 = vmul.f32 %v3428, 0.35355338
      %v3446 = vmul.f32 %v3431, 0.35355338
      %v3447 = vmul.f32 %v3434, 0.35355338
      %v3448 = vmul.f32 %v3437, 0.35355338
      %v3449 = vmul.f32 %v3440, 0.35355338
      %v3450 = vsel %vm3031, %v3442, -inf
      %3451 = vmax.xlane.f32.xlu0 %v3450
      %v3452 = vpop.xlane.xlu0 %3451
      %v3453 = vsel %vm3031, %v3443, -inf
      %3454 = vmax.xlane.f32.xlu0 %v3453
      %v3455 = vpop.xlane.xlu0 %3454
      %v3456 = vsel %vm3031, %v3444, -inf
      %3457 = vmax.xlane.f32.xlu0 %v3456
      %v3458 = vpop.xlane.xlu0 %3457
      %v3459 = vsel %vm3031, %v3445, -inf
      %3460 = vmax.xlane.f32.xlu0 %v3459
      %v3461 = vpop.xlane.xlu0 %3460
      %v3462 = vsel %vm3031, %v3446, -inf
      %3463 = vmax.xlane.f32.xlu0 %v3462
      %v3464 = vpop.xlane.xlu0 %3463
      %v3465 = vsel %vm3031, %v3447, -inf
      %3466 = vmax.xlane.f32.xlu0 %v3465
      %v3467 = vpop.xlane.xlu0 %3466
      %v3468 = vsel %vm3031, %v3448, -inf
      %3469 = vmax.xlane.f32.xlu0 %v3468
      %v3470 = vpop.xlane.xlu0 %3469
      %v3471 = vsel %vm3031, %v3449, -inf
      %3472 = vmax.xlane.f32.xlu0 %v3471
      %v3473 = vpop.xlane.xlu0 %3472
      %v3474 = vsub.f32 %v3442, %v3452
      %v3475 = vsub.f32 %v3443, %v3455
      %v3476 = vsub.f32 %v3444, %v3458
      %v3477 = vsub.f32 %v3445, %v3461
      %v3478 = vsub.f32 %v3446, %v3464
      %v3479 = vsub.f32 %v3447, %v3467
      %v3480 = vsub.f32 %v3448, %v3470
      %v3481 = vsub.f32 %v3449, %v3473
      %v3482 = vmul.f32 %v3474, 1.442695
      %v3483 = vpow.pop %v3482
      %v3484 = vmul.f32 %v3475, 1.442695
      %v3485 = vpow.pop %v3484
      %v3486 = vmul.f32 %v3476, 1.442695
      %v3487 = vpow.pop %v3486
      %v3488 = vmul.f32 %v3477, 1.442695
      %v3489 = vpow.pop %v3488
      %v3490 = vmul.f32 %v3478, 1.442695
      %v3491 = vpow.pop %v3490
      %v3492 = vmul.f32 %v3479, 1.442695
      %v3493 = vpow.pop %v3492
      %v3494 = vmul.f32 %v3480, 1.442695
      %v3495 = vpow.pop %v3494
      %v3496 = vmul.f32 %v3481, 1.442695
      %v3497 = vpow.pop %v3496
      %v3498 = vsel %vm3031, %v3483, 0.0
      %3499 = vadd.xlane.f32.xlu0 %v3498
      %v3500 = vpop.xlane.xlu0 %3499
      %v3501 = vsel %vm3031, %v3485, 0.0
      %3502 = vadd.xlane.f32.xlu0 %v3501
      %v3503 = vpop.xlane.xlu0 %3502
      %v3504 = vsel %vm3031, %v3487, 0.0
      %3505 = vadd.xlane.f32.xlu0 %v3504
      %v3506 = vpop.xlane.xlu0 %3505
      %v3507 = vsel %vm3031, %v3489, 0.0
      %3508 = vadd.xlane.f32.xlu0 %v3507
      %v3509 = vpop.xlane.xlu0 %3508
      %v3510 = vsel %vm3031, %v3491, 0.0
      %3511 = vadd.xlane.f32.xlu0 %v3510
      %v3512 = vpop.xlane.xlu0 %3511
      %v3513 = vsel %vm3031, %v3493, 0.0
      %3514 = vadd.xlane.f32.xlu0 %v3513
      %v3515 = vpop.xlane.xlu0 %3514
      %v3516 = vsel %vm3031, %v3495, 0.0
      %3517 = vadd.xlane.f32.xlu0 %v3516
      %v3518 = vpop.xlane.xlu0 %3517
      %v3519 = vsel %vm3031, %v3497, 0.0
      %3520 = vadd.xlane.f32.xlu0 %v3519
      %v3521 = vpop.xlane.xlu0 %3520
      %v3522 = vrcp.pop %v3500
      %v3523 = vmul.f32 %v3500, %v3522
      %v3524 = vsub.f32 1.0, %v3523
      %v3525 = vmul.f32 %v3522, %v3524
      %v3526 = vadd.f32 %v3522, %v3525
      %vm3527 = vweird.f32 %v3500
      %vm3528 = vweird.f32 %v3522
      %vm3529 = vmor %vm3527, %vm3528
      %v3530 = vsel %vm3529, %v3522, %v3526
      %v3531 = vand.u32 2147483647, %v3500
      %vm3532 = vcmp.eq.f32.partialorder %v3531, 8.507059e+37
      %v3533 = vand.u32 %v3500, 2147483648
      %v3534 = vor.u32 1.1754944e-38, %v3533
      %v3535 = vsel %vm3532, %v3534, %v3530
      %v3536 = vmul.f32 1.0, %v3535
      %v3537 = vrcp.pop %v3503
      %v3538 = vmul.f32 %v3503, %v3537
      %v3539 = vsub.f32 1.0, %v3538
      %v3540 = vmul.f32 %v3537, %v3539
      %v3541 = vadd.f32 %v3537, %v3540
      %vm3542 = vweird.f32 %v3503
      %vm3543 = vweird.f32 %v3537
      %vm3544 = vmor %vm3542, %vm3543
      %v3545 = vsel %vm3544, %v3537, %v3541
      %v3546 = vand.u32 2147483647, %v3503
      %vm3547 = vcmp.eq.f32.partialorder %v3546, 8.507059e+37
      %v3548 = vand.u32 %v3503, 2147483648
      %v3549 = vor.u32 1.1754944e-38, %v3548
      %v3550 = vsel %vm3547, %v3549, %v3545
      %v3551 = vmul.f32 1.0, %v3550
      %v3552 = vrcp.pop %v3506
      %v3553 = vmul.f32 %v3506, %v3552
      %v3554 = vsub.f32 1.0, %v3553
      %v3555 = vmul.f32 %v3552, %v3554
      %v3556 = vadd.f32 %v3552, %v3555
      %vm3557 = vweird.f32 %v3506
      %vm3558 = vweird.f32 %v3552
      %vm3559 = vmor %vm3557, %vm3558
      %v3560 = vsel %vm3559, %v3552, %v3556
      %v3561 = vand.u32 2147483647, %v3506
      %vm3562 = vcmp.eq.f32.partialorder %v3561, 8.507059e+37
      %v3563 = vand.u32 %v3506, 2147483648
      %v3564 = vor.u32 1.1754944e-38, %v3563
      %v3565 = vsel %vm3562, %v3564, %v3560
      %v3566 = vmul.f32 1.0, %v3565
      %v3567 = vrcp.pop %v3509
      %v3568 = vmul.f32 %v3509, %v3567
      %v3569 = vsub.f32 1.0, %v3568
      %v3570 = vmul.f32 %v3567, %v3569
      %v3571 = vadd.f32 %v3567, %v3570
      %vm3572 = vweird.f32 %v3509
      %vm3573 = vweird.f32 %v3567
      %vm3574 = vmor %vm3572, %vm3573
      %v3575 = vsel %vm3574, %v3567, %v3571
      %v3576 = vand.u32 2147483647, %v3509
      %vm3577 = vcmp.eq.f32.partialorder %v3576, 8.507059e+37
      %v3578 = vand.u32 %v3509, 2147483648
      %v3579 = vor.u32 1.1754944e-38, %v3578
      %v3580 = vsel %vm3577, %v3579, %v3575
      %v3581 = vmul.f32 1.0, %v3580
      %v3582 = vrcp.pop %v3512
      %v3583 = vmul.f32 %v3512, %v3582
      %v3584 = vsub.f32 1.0, %v3583
      %v3585 = vmul.f32 %v3582, %v3584
      %v3586 = vadd.f32 %v3582, %v3585
      %vm3587 = vweird.f32 %v3512
      %vm3588 = vweird.f32 %v3582
      %vm3589 = vmor %vm3587, %vm3588
      %v3590 = vsel %vm3589, %v3582, %v3586
      %v3591 = vand.u32 2147483647, %v3512
      %vm3592 = vcmp.eq.f32.partialorder %v3591, 8.507059e+37
      %v3593 = vand.u32 %v3512, 2147483648
      %v3594 = vor.u32 1.1754944e-38, %v3593
      %v3595 = vsel %vm3592, %v3594, %v3590
      %v3596 = vmul.f32 1.0, %v3595
      %v3597 = vrcp.pop %v3515
      %v3598 = vmul.f32 %v3515, %v3597
      %v3599 = vsub.f32 1.0, %v3598
      %v3600 = vmul.f32 %v3597, %v3599
      %v3601 = vadd.f32 %v3597, %v3600
      %vm3602 = vweird.f32 %v3515
      %vm3603 = vweird.f32 %v3597
      %vm3604 = vmor %vm3602, %vm3603
      %v3605 = vsel %vm3604, %v3597, %v3601
      %v3606 = vand.u32 2147483647, %v3515
      %vm3607 = vcmp.eq.f32.partialorder %v3606, 8.507059e+37
      %v3608 = vand.u32 %v3515, 2147483648
      %v3609 = vor.u32 1.1754944e-38, %v3608
      %v3610 = vsel %vm3607, %v3609, %v3605
      %v3611 = vmul.f32 1.0, %v3610
      %v3612 = vrcp.pop %v3518
      %v3613 = vmul.f32 %v3518, %v3612
      %v3614 = vsub.f32 1.0, %v3613
      %v3615 = vmul.f32 %v3612, %v3614
      %v3616 = vadd.f32 %v3612, %v3615
      %vm3617 = vweird.f32 %v3518
      %vm3618 = vweird.f32 %v3612
      %vm3619 = vmor %vm3617, %vm3618
      %v3620 = vsel %vm3619, %v3612, %v3616
      %v3621 = vand.u32 2147483647, %v3518
      %vm3622 = vcmp.eq.f32.partialorder %v3621, 8.507059e+37
      %v3623 = vand.u32 %v3518, 2147483648
      %v3624 = vor.u32 1.1754944e-38, %v3623
      %v3625 = vsel %vm3622, %v3624, %v3620
      %v3626 = vmul.f32 1.0, %v3625
      %v3627 = vrcp.pop %v3521
      %v3628 = vmul.f32 %v3521, %v3627
      %v3629 = vsub.f32 1.0, %v3628
      %v3630 = vmul.f32 %v3627, %v3629
      %v3631 = vadd.f32 %v3627, %v3630
      %vm3632 = vweird.f32 %v3521
      %vm3633 = vweird.f32 %v3627
      %vm3634 = vmor %vm3632, %vm3633
      %v3635 = vsel %vm3634, %v3627, %v3631
      %v3636 = vand.u32 2147483647, %v3521
      %vm3637 = vcmp.eq.f32.partialorder %v3636, 8.507059e+37
      %v3638 = vand.u32 %v3521, 2147483648
      %v3639 = vor.u32 1.1754944e-38, %v3638
      %v3640 = vsel %vm3637, %v3639, %v3635
      %v3641 = vmul.f32 1.0, %v3640
      %3642 = vrot.lane.b32.xlu0 %v2899, 88
      %v3643 = vpop.permute.xlu0 %3642
      %3644 = vrot.lane.b32.xlu0 %v2902, 88
      %v3645 = vpop.permute.xlu0 %3644
      %3646 = vrot.lane.b32.xlu0 %v2905, 88
      %v3647 = vpop.permute.xlu0 %3646
      %3648 = vrot.lane.b32.xlu0 %v2908, 88
      %v3649 = vpop.permute.xlu0 %3648
      %3650 = vrot.lane.b32.xlu0 %v2911, 88
      %v3651 = vpop.permute.xlu0 %3650
      %3652 = vrot.lane.b32.xlu0 %v2914, 88
      %v3653 = vpop.permute.xlu0 %3652
      %3654 = vrot.lane.b32.xlu0 %v2917, 88
      %v3655 = vpop.permute.xlu0 %3654
      %3656 = vrot.lane.b32.xlu0 %v2920, 88
      %v3657 = vpop.permute.xlu0 %3656
      %3658 = vrot.lane.b32.xlu0 %v2923, 88
      %v3659 = vpop.permute.xlu0 %3658
      %3660 = vrot.lane.b32.xlu0 %v2926, 88
      %v3661 = vpop.permute.xlu0 %3660
      %v3672 = vsel %vm3031, %v3483, 0
      %v3675 = vsel %vm3031, %v3485, 0
      %v3678 = vsel %vm3031, %v3487, 0
      %v3681 = vsel %vm3031, %v3489, 0
      %v3684 = vsel %vm3031, %v3491, 0
      %v3687 = vsel %vm3031, %v3493, 0
      %v3690 = vsel %vm3031, %v3495, 0
      %v3693 = vsel %vm3031, %v3497, 0
      %v3695 = vsel %vm3277, %v3661, 0
      %3697 = vmatpush.msra.mxu0 0.0
      %3698 = vmatpush.msra.mxu0 0.0
      %3699 = vmatpush.msra.mxu0 0.0
      %3700 = vmatpush.msra.mxu0 0.0
      %3701 = vmatpush.msra.mxu0 0.0
      %3702 = vmatpush.msra.mxu0 0.0
      %3703 = vmatpush.msra.mxu0 %v3695
      %3704 = vmatpush.msra.mxu0 %v3659
      %3705 = vmatpush.msra.mxu0 %v3657
      %3706 = vmatpush.msra.mxu0 %v3655
      %3707 = vmatpush.msra.mxu0 %v3653
      %3708 = vmatpush.msra.mxu0 %v3651
      %3709 = vmatpush.msra.mxu0 %v3649
      %3710 = vmatpush.msra.mxu0 %v3647
      %3711 = vmatpush.msra.mxu0 %v3645
      %3712 = vmatpush.msra.mxu0 %v3643
      %3713 = vmatmul.f32.gmra.mxu0 %v3672
      %v3714 = vpop.f32.mrf.mxu0
      %v3715 = vadd.f32 0.0, %v3714
      %3716 = vmatmul.f32.gmra.mxu0 %v3675
      %v3717 = vpop.f32.mrf.mxu0
      %v3718 = vadd.f32 0.0, %v3717
      %3719 = vmatmul.f32.gmra.mxu0 %v3678
      %v3720 = vpop.f32.mrf.mxu0
      %v3721 = vadd.f32 0.0, %v3720
      %3722 = vmatmul.f32.gmra.mxu0 %v3681
      %v3723 = vpop.f32.mrf.mxu0
      %v3724 = vadd.f32 0.0, %v3723
      %3725 = vmatmul.f32.gmra.mxu0 %v3684
      %v3726 = vpop.f32.mrf.mxu0
      %v3727 = vadd.f32 0.0, %v3726
      %3728 = vmatmul.f32.gmra.mxu0 %v3687
      %v3729 = vpop.f32.mrf.mxu0
      %v3730 = vadd.f32 0.0, %v3729
      %3731 = vmatmul.f32.gmra.mxu0 %v3690
      %v3732 = vpop.f32.mrf.mxu0
      %v3733 = vadd.f32 0.0, %v3732
      %3734 = vmatmul.f32.gmra.mxu0 %v3693
      %v3735 = vpop.f32.mrf.mxu0
      %v3736 = vadd.f32 0.0, %v3735
      %3737 = vdwg.mxu0
      %v3738 = vmul.f32 %v3715, %v3536
      %v3739 = vmul.f32 %v3718, %v3551
      %v3740 = vmul.f32 %v3721, %v3566
      %v3741 = vmul.f32 %v3724, %v3581
      %v3742 = vmul.f32 %v3727, %v3596
      %v3743 = vmul.f32 %v3730, %v3611
      %v3744 = vmul.f32 %v3733, %v3626
      %v3745 = vmul.f32 %v3736, %v3641
      %v3747 = vsel %vm707, %v3738, 0
      %v3750 = vsel %vm707, %v3739, 0
      %v3753 = vsel %vm707, %v3740, 0
      %v3756 = vsel %vm707, %v3741, 0
      %v3759 = vsel %vm707, %v3742, 0
      %v3762 = vsel %vm707, %v3743, 0
      %v3765 = vsel %vm707, %v3744, 0
      %v3768 = vsel %vm707, %v3745, 0
      %3770 = vmatpush.msra.mxu0 0.0
      %3771 = vmatpush.msra.mxu0 0.0
      %3772 = vmatpush.msra.mxu0 0.0
      %3773 = vmatpush.msra.mxu0 0.0
      %3774 = vmatpush.msra.mxu0 0.0
      %3775 = vmatpush.msra.mxu0 0.0
      %3776 = vmatpush.msra.mxu0 0.0
      %3777 = vmatpush.msra.mxu0 0.0
      %3778 = vmatpush.msra.mxu0 0.0
      %3779 = vmatpush.msra.mxu0 0.0
      %3780 = vmatpush.msra.mxu0 0.0
      %3781 = vmatpush.msra.mxu0 0.0
      %3782 = vmatpush.msra.mxu0 0.0
      %3783 = vmatpush.msra.mxu0 0.0
      %3784 = vmatpush.msra.mxu0 0.0
      %3785 = vmatpush.msra.mxu0 %v2780
      %3786 = vmatmul.f32.gmra.mxu0 %v3747
      %v3787 = vpop.f32.mrf.mxu0
      %v3788 = vadd.f32 0.0, %v3787
      %3789 = vmatmul.f32.gmra.mxu0 %v3750
      %v3790 = vpop.f32.mrf.mxu0
      %v3791 = vadd.f32 0.0, %v3790
      %3792 = vmatmul.f32.gmra.mxu0 %v3753
      %v3793 = vpop.f32.mrf.mxu0
      %v3794 = vadd.f32 0.0, %v3793
      %3795 = vmatmul.f32.gmra.mxu0 %v3756
      %v3796 = vpop.f32.mrf.mxu0
      %v3797 = vadd.f32 0.0, %v3796
      %3798 = vmatmul.f32.gmra.mxu0 %v3759
      %v3799 = vpop.f32.mrf.mxu0
      %v3800 = vadd.f32 0.0, %v3799
      %3801 = vmatmul.f32.gmra.mxu0 %v3762
      %v3802 = vpop.f32.mrf.mxu0
      %v3803 = vadd.f32 0.0, %v3802
      %3804 = vmatmul.f32.gmra.mxu0 %v3765
      %v3805 = vpop.f32.mrf.mxu0
      %v3806 = vadd.f32 0.0, %v3805
      %3807 = vmatmul.f32.gmra.mxu0 %v3768
      %v3808 = vpop.f32.mrf.mxu0
      %v3809 = vadd.f32 0.0, %v3808
      %3810 = vdwg.mxu0
      %v3812 = vsel %vm707, %v3321, 0
      %v3815 = vsel %vm707, %v3322, 0
      %v3818 = vsel %vm707, %v3323, 0
      %v3821 = vsel %vm707, %v3324, 0
      %v3824 = vsel %vm707, %v3325, 0
      %v3827 = vsel %vm707, %v3326, 0
      %v3830 = vsel %vm707, %v3327, 0
      %v3833 = vsel %vm707, %v3328, 0
      %3835 = vmatpush.msra.mxu0 0.0
      %3836 = vmatpush.msra.mxu0 0.0
      %3837 = vmatpush.msra.mxu0 0.0
      %3838 = vmatpush.msra.mxu0 0.0
      %3839 = vmatpush.msra.mxu0 0.0
      %3840 = vmatpush.msra.mxu0 0.0
      %3841 = vmatpush.msra.mxu0 0.0
      %3842 = vmatpush.msra.mxu0 0.0
      %3843 = vmatpush.msra.mxu0 0.0
      %3844 = vmatpush.msra.mxu0 0.0
      %3845 = vmatpush.msra.mxu0 0.0
      %3846 = vmatpush.msra.mxu0 0.0
      %3847 = vmatpush.msra.mxu0 0.0
      %3848 = vmatpush.msra.mxu0 0.0
      %3849 = vmatpush.msra.mxu0 0.0
      %3850 = vmatpush.msra.mxu0 %v2779
      %3851 = vmatmul.f32.gmra.mxu0 %v3812
      %v3852 = vpop.f32.mrf.mxu0
      %v3853 = vadd.f32 %v3788, %v3852
      %3854 = vmatmul.f32.gmra.mxu0 %v3815
      %v3855 = vpop.f32.mrf.mxu0
      %v3856 = vadd.f32 %v3791, %v3855
      %3857 = vmatmul.f32.gmra.mxu0 %v3818
      %v3858 = vpop.f32.mrf.mxu0
      %v3859 = vadd.f32 %v3794, %v3858
      %3860 = vmatmul.f32.gmra.mxu0 %v3821
      %v3861 = vpop.f32.mrf.mxu0
      %v3862 = vadd.f32 %v3797, %v3861
      %3863 = vmatmul.f32.gmra.mxu0 %v3824
      %v3864 = vpop.f32.mrf.mxu0
      %v3865 = vadd.f32 %v3800, %v3864
      %3866 = vmatmul.f32.gmra.mxu0 %v3827
      %v3867 = vpop.f32.mrf.mxu0
      %v3868 = vadd.f32 %v3803, %v3867
      %3869 = vmatmul.f32.gmra.mxu0 %v3830
      %v3870 = vpop.f32.mrf.mxu0
      %v3871 = vadd.f32 %v3806, %v3870
      %3872 = vmatmul.f32.gmra.mxu0 %v3833
      %v3873 = vpop.f32.mrf.mxu0
      %v3874 = vadd.f32 %v3809, %v3873
      %3875 = vdwg.mxu0
      %3876 = vrot.lane.b32.xlu0 %v2825, 112
      %v3877 = vpop.permute.xlu0 %3876
      %3878 = vrot.lane.b32.xlu0 %v2828, 112
      %v3879 = vpop.permute.xlu0 %3878
      %3880 = vrot.lane.b32.xlu0 %v2831, 112
      %v3881 = vpop.permute.xlu0 %3880
      %3882 = vrot.lane.b32.xlu0 %v2834, 112
      %v3883 = vpop.permute.xlu0 %3882
      %3884 = vrot.lane.b32.xlu0 %v2837, 112
      %v3885 = vpop.permute.xlu0 %3884
      %3886 = vrot.lane.b32.xlu0 %v2840, 112
      %v3887 = vpop.permute.xlu0 %3886
      %3888 = vrot.lane.b32.xlu0 %v2843, 112
      %v3889 = vpop.permute.xlu0 %3888
      %3890 = vrot.lane.b32.xlu0 %v2846, 112
      %v3891 = vpop.permute.xlu0 %3890
      %3892 = vrot.lane.b32.xlu0 %v2899, 112
      %v3893 = vpop.permute.xlu0 %3892
      %3894 = vrot.lane.b32.xlu0 %v2902, 112
      %v3895 = vpop.permute.xlu0 %3894
      %3896 = vrot.lane.b32.xlu0 %v2905, 112
      %v3897 = vpop.permute.xlu0 %3896
      %3898 = vrot.lane.b32.xlu0 %v2908, 112
      %v3899 = vpop.permute.xlu0 %3898
      %3900 = vrot.lane.b32.xlu0 %v2911, 112
      %v3901 = vpop.permute.xlu0 %3900
      %3902 = vrot.lane.b32.xlu0 %v2914, 112
      %v3903 = vpop.permute.xlu0 %3902
      %3904 = vrot.lane.b32.xlu0 %v2917, 112
      %v3905 = vpop.permute.xlu0 %3904
      %3906 = vrot.lane.b32.xlu0 %v2920, 112
      %v3907 = vpop.permute.xlu0 %3906
      %3908 = vrot.lane.b32.xlu0 %v2923, 112
      %v3909 = vpop.permute.xlu0 %3908
      %3910 = vrot.lane.b32.xlu0 %v2926, 112
      %v3911 = vpop.permute.xlu0 %3910
      %v3912 = vsel %vm707, %v3877, 0
      %v3914 = vsel %vm707, %v3879, 0
      %v3916 = vsel %vm707, %v3881, 0
      %v3918 = vsel %vm707, %v3883, 0
      %v3920 = vsel %vm707, %v3885, 0
      %v3922 = vsel %vm707, %v3887, 0
      %v3924 = vsel %vm707, %v3889, 0
      %v3926 = vsel %vm707, %v3891, 0
      %v3928 = vsel %vm707, %v3893, 0
      %v3930 = vsel %vm707, %v3895, 0
      %v3932 = vsel %vm707, %v3897, 0
      %v3934 = vsel %vm707, %v3899, 0
      %v3936 = vsel %vm707, %v3901, 0
      %v3938 = vsel %vm707, %v3903, 0
      %v3940 = vsel %vm707, %v3905, 0
      %v3942 = vsel %vm707, %v3907, 0
      %v3944 = vsel %vm707, %v3909, 0
      %v3946 = vsel %vm707, %v3911, 0
      %3948 = vmatpush.xpose.msra.mxu0 0.0
      %3949 = vmatpush.xpose.msra.mxu0 0.0
      %3950 = vmatpush.xpose.msra.mxu0 0.0
      %3951 = vmatpush.xpose.msra.mxu0 0.0
      %3952 = vmatpush.xpose.msra.mxu0 0.0
      %3953 = vmatpush.xpose.msra.mxu0 0.0
      %3954 = vmatpush.xpose.msra.mxu0 %v3946
      %3955 = vmatpush.xpose.msra.mxu0 %v3944
      %3956 = vmatpush.xpose.msra.mxu0 %v3942
      %3957 = vmatpush.xpose.msra.mxu0 %v3940
      %3958 = vmatpush.xpose.msra.mxu0 %v3938
      %3959 = vmatpush.xpose.msra.mxu0 %v3936
      %3960 = vmatpush.xpose.msra.mxu0 %v3934
      %3961 = vmatpush.xpose.msra.mxu0 %v3932
      %3962 = vmatpush.xpose.msra.mxu0 %v3930
      %3963 = vmatpush.xpose.msra.mxu0 %v3928
      %3964 = vmatmul.f32.gmra.mxu0 %v3912
      %v3965 = vpop.f32.mrf.mxu0
      %v3966 = vadd.f32 0.0, %v3965
      %3967 = vmatmul.f32.gmra.mxu0 %v3914
      %v3968 = vpop.f32.mrf.mxu0
      %v3969 = vadd.f32 0.0, %v3968
      %3970 = vmatmul.f32.gmra.mxu0 %v3916
      %v3971 = vpop.f32.mrf.mxu0
      %v3972 = vadd.f32 0.0, %v3971
      %3973 = vmatmul.f32.gmra.mxu0 %v3918
      %v3974 = vpop.f32.mrf.mxu0
      %v3975 = vadd.f32 0.0, %v3974
      %3976 = vmatmul.f32.gmra.mxu0 %v3920
      %v3977 = vpop.f32.mrf.mxu0
      %v3978 = vadd.f32 0.0, %v3977
      %3979 = vmatmul.f32.gmra.mxu0 %v3922
      %v3980 = vpop.f32.mrf.mxu0
      %v3981 = vadd.f32 0.0, %v3980
      %3982 = vmatmul.f32.gmra.mxu0 %v3924
      %v3983 = vpop.f32.mrf.mxu0
      %v3984 = vadd.f32 0.0, %v3983
      %3985 = vmatmul.f32.gmra.mxu0 %v3926
      %v3986 = vpop.f32.mrf.mxu0
      %v3987 = vadd.f32 0.0, %v3986
      %3988 = vdwg.mxu0
      %v3989 = vmul.f32 %v3966, 0.35355338
      %v3990 = vmul.f32 %v3969, 0.35355338
      %v3991 = vmul.f32 %v3972, 0.35355338
      %v3992 = vmul.f32 %v3975, 0.35355338
      %v3993 = vmul.f32 %v3978, 0.35355338
      %v3994 = vmul.f32 %v3981, 0.35355338
      %v3995 = vmul.f32 %v3984, 0.35355338
      %v3996 = vmul.f32 %v3987, 0.35355338
      %v3997 = vsel %vm3031, %v3989, -inf
      %3998 = vmax.xlane.f32.xlu0 %v3997
      %v3999 = vpop.xlane.xlu0 %3998
      %v4000 = vsel %vm3031, %v3990, -inf
      %4001 = vmax.xlane.f32.xlu0 %v4000
      %v4002 = vpop.xlane.xlu0 %4001
      %v4003 = vsel %vm3031, %v3991, -inf
      %4004 = vmax.xlane.f32.xlu0 %v4003
      %v4005 = vpop.xlane.xlu0 %4004
      %v4006 = vsel %vm3031, %v3992, -inf
      %4007 = vmax.xlane.f32.xlu0 %v4006
      %v4008 = vpop.xlane.xlu0 %4007
      %v4009 = vsel %vm3031, %v3993, -inf
      %4010 = vmax.xlane.f32.xlu0 %v4009
      %v4011 = vpop.xlane.xlu0 %4010
      %v4012 = vsel %vm3031, %v3994, -inf
      %4013 = vmax.xlane.f32.xlu0 %v4012
      %v4014 = vpop.xlane.xlu0 %4013
      %v4015 = vsel %vm3031, %v3995, -inf
      %4016 = vmax.xlane.f32.xlu0 %v4015
      %v4017 = vpop.xlane.xlu0 %4016
      %v4018 = vsel %vm3031, %v3996, -inf
      %4019 = vmax.xlane.f32.xlu0 %v4018
      %v4020 = vpop.xlane.xlu0 %4019
      %v4021 = vsub.f32 %v3989, %v3999
      %v4022 = vsub.f32 %v3990, %v4002
      %v4023 = vsub.f32 %v3991, %v4005
      %v4024 = vsub.f32 %v3992, %v4008
      %v4025 = vsub.f32 %v3993, %v4011
      %v4026 = vsub.f32 %v3994, %v4014
      %v4027 = vsub.f32 %v3995, %v4017
      %v4028 = vsub.f32 %v3996, %v4020
      %v4029 = vmul.f32 %v4021, 1.442695
      %v4030 = vpow.pop %v4029
      %v4031 = vmul.f32 %v4022, 1.442695
      %v4032 = vpow.pop %v4031
      %v4033 = vmul.f32 %v4023, 1.442695
      %v4034 = vpow.pop %v4033
      %v4035 = vmul.f32 %v4024, 1.442695
      %v4036 = vpow.pop %v4035
      %v4037 = vmul.f32 %v4025, 1.442695
      %v4038 = vpow.pop %v4037
      %v4039 = vmul.f32 %v4026, 1.442695
      %v4040 = vpow.pop %v4039
      %v4041 = vmul.f32 %v4027, 1.442695
      %v4042 = vpow.pop %v4041
      %v4043 = vmul.f32 %v4028, 1.442695
      %v4044 = vpow.pop %v4043
      %v4045 = vsel %vm3031, %v4030, 0.0
      %4046 = vadd.xlane.f32.xlu0 %v4045
      %v4047 = vpop.xlane.xlu0 %4046
      %v4048 = vsel %vm3031, %v4032, 0.0
      %4049 = vadd.xlane.f32.xlu0 %v4048
      %v4050 = vpop.xlane.xlu0 %4049
      %v4051 = vsel %vm3031, %v4034, 0.0
      %4052 = vadd.xlane.f32.xlu0 %v4051
      %v4053 = vpop.xlane.xlu0 %4052
      %v4054 = vsel %vm3031, %v4036, 0.0
      %4055 = vadd.xlane.f32.xlu0 %v4054
      %v4056 = vpop.xlane.xlu0 %4055
      %v4057 = vsel %vm3031, %v4038, 0.0
      %4058 = vadd.xlane.f32.xlu0 %v4057
      %v4059 = vpop.xlane.xlu0 %4058
      %v4060 = vsel %vm3031, %v4040, 0.0
      %4061 = vadd.xlane.f32.xlu0 %v4060
      %v4062 = vpop.xlane.xlu0 %4061
      %v4063 = vsel %vm3031, %v4042, 0.0
      %4064 = vadd.xlane.f32.xlu0 %v4063
      %v4065 = vpop.xlane.xlu0 %4064
      %v4066 = vsel %vm3031, %v4044, 0.0
      %4067 = vadd.xlane.f32.xlu0 %v4066
      %v4068 = vpop.xlane.xlu0 %4067
      %v4069 = vrcp.pop %v4047
      %v4070 = vmul.f32 %v4047, %v4069
      %v4071 = vsub.f32 1.0, %v4070
      %v4072 = vmul.f32 %v4069, %v4071
      %v4073 = vadd.f32 %v4069, %v4072
      %vm4074 = vweird.f32 %v4047
      %vm4075 = vweird.f32 %v4069
      %vm4076 = vmor %vm4074, %vm4075
      %v4077 = vsel %vm4076, %v4069, %v4073
      %v4078 = vand.u32 2147483647, %v4047
      %vm4079 = vcmp.eq.f32.partialorder %v4078, 8.507059e+37
      %v4080 = vand.u32 %v4047, 2147483648
      %v4081 = vor.u32 1.1754944e-38, %v4080
      %v4082 = vsel %vm4079, %v4081, %v4077
      %v4083 = vmul.f32 1.0, %v4082
      %v4084 = vrcp.pop %v4050
      %v4085 = vmul.f32 %v4050, %v4084
      %v4086 = vsub.f32 1.0, %v4085
      %v4087 = vmul.f32 %v4084, %v4086
      %v4088 = vadd.f32 %v4084, %v4087
      %vm4089 = vweird.f32 %v4050
      %vm4090 = vweird.f32 %v4084
      %vm4091 = vmor %vm4089, %vm4090
      %v4092 = vsel %vm4091, %v4084, %v4088
      %v4093 = vand.u32 2147483647, %v4050
      %vm4094 = vcmp.eq.f32.partialorder %v4093, 8.507059e+37
      %v4095 = vand.u32 %v4050, 2147483648
      %v4096 = vor.u32 1.1754944e-38, %v4095
      %v4097 = vsel %vm4094, %v4096, %v4092
      %v4098 = vmul.f32 1.0, %v4097
      %v4099 = vrcp.pop %v4053
      %v4100 = vmul.f32 %v4053, %v4099
      %v4101 = vsub.f32 1.0, %v4100
      %v4102 = vmul.f32 %v4099, %v4101
      %v4103 = vadd.f32 %v4099, %v4102
      %vm4104 = vweird.f32 %v4053
      %vm4105 = vweird.f32 %v4099
      %vm4106 = vmor %vm4104, %vm4105
      %v4107 = vsel %vm4106, %v4099, %v4103
      %v4108 = vand.u32 2147483647, %v4053
      %vm4109 = vcmp.eq.f32.partialorder %v4108, 8.507059e+37
      %v4110 = vand.u32 %v4053, 2147483648
      %v4111 = vor.u32 1.1754944e-38, %v4110
      %v4112 = vsel %vm4109, %v4111, %v4107
      %v4113 = vmul.f32 1.0, %v4112
      %v4114 = vrcp.pop %v4056
      %v4115 = vmul.f32 %v4056, %v4114
      %v4116 = vsub.f32 1.0, %v4115
      %v4117 = vmul.f32 %v4114, %v4116
      %v4118 = vadd.f32 %v4114, %v4117
      %vm4119 = vweird.f32 %v4056
      %vm4120 = vweird.f32 %v4114
      %vm4121 = vmor %vm4119, %vm4120
      %v4122 = vsel %vm4121, %v4114, %v4118
      %v4123 = vand.u32 2147483647, %v4056
      %vm4124 = vcmp.eq.f32.partialorder %v4123, 8.507059e+37
      %v4125 = vand.u32 %v4056, 2147483648
      %v4126 = vor.u32 1.1754944e-38, %v4125
      %v4127 = vsel %vm4124, %v4126, %v4122
      %v4128 = vmul.f32 1.0, %v4127
      %v4129 = vrcp.pop %v4059
      %v4130 = vmul.f32 %v4059, %v4129
      %v4131 = vsub.f32 1.0, %v4130
      %v4132 = vmul.f32 %v4129, %v4131
      %v4133 = vadd.f32 %v4129, %v4132
      %vm4134 = vweird.f32 %v4059
      %vm4135 = vweird.f32 %v4129
      %vm4136 = vmor %vm4134, %vm4135
      %v4137 = vsel %vm4136, %v4129, %v4133
      %v4138 = vand.u32 2147483647, %v4059
      %vm4139 = vcmp.eq.f32.partialorder %v4138, 8.507059e+37
      %v4140 = vand.u32 %v4059, 2147483648
      %v4141 = vor.u32 1.1754944e-38, %v4140
      %v4142 = vsel %vm4139, %v4141, %v4137
      %v4143 = vmul.f32 1.0, %v4142
      %v4144 = vrcp.pop %v4062
      %v4145 = vmul.f32 %v4062, %v4144
      %v4146 = vsub.f32 1.0, %v4145
      %v4147 = vmul.f32 %v4144, %v4146
      %v4148 = vadd.f32 %v4144, %v4147
      %vm4149 = vweird.f32 %v4062
      %vm4150 = vweird.f32 %v4144
      %vm4151 = vmor %vm4149, %vm4150
      %v4152 = vsel %vm4151, %v4144, %v4148
      %v4153 = vand.u32 2147483647, %v4062
      %vm4154 = vcmp.eq.f32.partialorder %v4153, 8.507059e+37
      %v4155 = vand.u32 %v4062, 2147483648
      %v4156 = vor.u32 1.1754944e-38, %v4155
      %v4157 = vsel %vm4154, %v4156, %v4152
      %v4158 = vmul.f32 1.0, %v4157
      %v4159 = vrcp.pop %v4065
      %v4160 = vmul.f32 %v4065, %v4159
      %v4161 = vsub.f32 1.0, %v4160
      %v4162 = vmul.f32 %v4159, %v4161
      %v4163 = vadd.f32 %v4159, %v4162
      %vm4164 = vweird.f32 %v4065
      %vm4165 = vweird.f32 %v4159
      %vm4166 = vmor %vm4164, %vm4165
      %v4167 = vsel %vm4166, %v4159, %v4163
      %v4168 = vand.u32 2147483647, %v4065
      %vm4169 = vcmp.eq.f32.partialorder %v4168, 8.507059e+37
      %v4170 = vand.u32 %v4065, 2147483648
      %v4171 = vor.u32 1.1754944e-38, %v4170
      %v4172 = vsel %vm4169, %v4171, %v4167
      %v4173 = vmul.f32 1.0, %v4172
      %v4174 = vrcp.pop %v4068
      %v4175 = vmul.f32 %v4068, %v4174
      %v4176 = vsub.f32 1.0, %v4175
      %v4177 = vmul.f32 %v4174, %v4176
      %v4178 = vadd.f32 %v4174, %v4177
      %vm4179 = vweird.f32 %v4068
      %vm4180 = vweird.f32 %v4174
      %vm4181 = vmor %vm4179, %vm4180
      %v4182 = vsel %vm4181, %v4174, %v4178
      %v4183 = vand.u32 2147483647, %v4068
      %vm4184 = vcmp.eq.f32.partialorder %v4183, 8.507059e+37
      %v4185 = vand.u32 %v4068, 2147483648
      %v4186 = vor.u32 1.1754944e-38, %v4185
      %v4187 = vsel %vm4184, %v4186, %v4182
      %v4188 = vmul.f32 1.0, %v4187
      %4189 = vrot.lane.b32.xlu0 %v2899, 80
      %v4190 = vpop.permute.xlu0 %4189
      %4191 = vrot.lane.b32.xlu0 %v2902, 80
      %v4192 = vpop.permute.xlu0 %4191
      %4193 = vrot.lane.b32.xlu0 %v2905, 80
      %v4194 = vpop.permute.xlu0 %4193
      %4195 = vrot.lane.b32.xlu0 %v2908, 80
      %v4196 = vpop.permute.xlu0 %4195
      %4197 = vrot.lane.b32.xlu0 %v2911, 80
      %v4198 = vpop.permute.xlu0 %4197
      %4199 = vrot.lane.b32.xlu0 %v2914, 80
      %v4200 = vpop.permute.xlu0 %4199
      %4201 = vrot.lane.b32.xlu0 %v2917, 80
      %v4202 = vpop.permute.xlu0 %4201
      %4203 = vrot.lane.b32.xlu0 %v2920, 80
      %v4204 = vpop.permute.xlu0 %4203
      %4205 = vrot.lane.b32.xlu0 %v2923, 80
      %v4206 = vpop.permute.xlu0 %4205
      %4207 = vrot.lane.b32.xlu0 %v2926, 80
      %v4208 = vpop.permute.xlu0 %4207
      %v4219 = vsel %vm3031, %v4030, 0
      %v4222 = vsel %vm3031, %v4032, 0
      %v4225 = vsel %vm3031, %v4034, 0
      %v4228 = vsel %vm3031, %v4036, 0
      %v4231 = vsel %vm3031, %v4038, 0
      %v4234 = vsel %vm3031, %v4040, 0
      %v4237 = vsel %vm3031, %v4042, 0
      %v4240 = vsel %vm3031, %v4044, 0
      %v4242 = vsel %vm3277, %v4208, 0
      %4244 = vmatpush.msra.mxu0 0.0
      %4245 = vmatpush.msra.mxu0 0.0
      %4246 = vmatpush.msra.mxu0 0.0
      %4247 = vmatpush.msra.mxu0 0.0
      %4248 = vmatpush.msra.mxu0 0.0
      %4249 = vmatpush.msra.mxu0 0.0
      %4250 = vmatpush.msra.mxu0 %v4242
      %4251 = vmatpush.msra.mxu0 %v4206
      %4252 = vmatpush.msra.mxu0 %v4204
      %4253 = vmatpush.msra.mxu0 %v4202
      %4254 = vmatpush.msra.mxu0 %v4200
      %4255 = vmatpush.msra.mxu0 %v4198
      %4256 = vmatpush.msra.mxu0 %v4196
      %4257 = vmatpush.msra.mxu0 %v4194
      %4258 = vmatpush.msra.mxu0 %v4192
      %4259 = vmatpush.msra.mxu0 %v4190
      %4260 = vmatmul.f32.gmra.mxu0 %v4219
      %v4261 = vpop.f32.mrf.mxu0
      %v4262 = vadd.f32 0.0, %v4261
      %4263 = vmatmul.f32.gmra.mxu0 %v4222
      %v4264 = vpop.f32.mrf.mxu0
      %v4265 = vadd.f32 0.0, %v4264
      %4266 = vmatmul.f32.gmra.mxu0 %v4225
      %v4267 = vpop.f32.mrf.mxu0
      %v4268 = vadd.f32 0.0, %v4267
      %4269 = vmatmul.f32.gmra.mxu0 %v4228
      %v4270 = vpop.f32.mrf.mxu0
      %v4271 = vadd.f32 0.0, %v4270
      %4272 = vmatmul.f32.gmra.mxu0 %v4231
      %v4273 = vpop.f32.mrf.mxu0
      %v4274 = vadd.f32 0.0, %v4273
      %4275 = vmatmul.f32.gmra.mxu0 %v4234
      %v4276 = vpop.f32.mrf.mxu0
      %v4277 = vadd.f32 0.0, %v4276
      %4278 = vmatmul.f32.gmra.mxu0 %v4237
      %v4279 = vpop.f32.mrf.mxu0
      %v4280 = vadd.f32 0.0, %v4279
      %4281 = vmatmul.f32.gmra.mxu0 %v4240
      %v4282 = vpop.f32.mrf.mxu0
      %v4283 = vadd.f32 0.0, %v4282
      %4284 = vdwg.mxu0
      %v4285 = vmul.f32 %v4262, %v4083
      %v4286 = vmul.f32 %v4265, %v4098
      %v4287 = vmul.f32 %v4268, %v4113
      %v4288 = vmul.f32 %v4271, %v4128
      %v4289 = vmul.f32 %v4274, %v4143
      %v4290 = vmul.f32 %v4277, %v4158
      %v4291 = vmul.f32 %v4280, %v4173
      %v4292 = vmul.f32 %v4283, %v4188
      %v4294 = vsel %vm707, %v4285, 0
      %v4297 = vsel %vm707, %v4286, 0
      %v4300 = vsel %vm707, %v4287, 0
      %v4303 = vsel %vm707, %v4288, 0
      %v4306 = vsel %vm707, %v4289, 0
      %v4309 = vsel %vm707, %v4290, 0
      %v4312 = vsel %vm707, %v4291, 0
      %v4315 = vsel %vm707, %v4292, 0
      %4317 = vmatpush.msra.mxu0 0.0
      %4318 = vmatpush.msra.mxu0 0.0
      %4319 = vmatpush.msra.mxu0 0.0
      %4320 = vmatpush.msra.mxu0 0.0
      %4321 = vmatpush.msra.mxu0 0.0
      %4322 = vmatpush.msra.mxu0 0.0
      %4323 = vmatpush.msra.mxu0 0.0
      %4324 = vmatpush.msra.mxu0 0.0
      %4325 = vmatpush.msra.mxu0 0.0
      %4326 = vmatpush.msra.mxu0 0.0
      %4327 = vmatpush.msra.mxu0 0.0
      %4328 = vmatpush.msra.mxu0 0.0
      %4329 = vmatpush.msra.mxu0 0.0
      %4330 = vmatpush.msra.mxu0 0.0
      %4331 = vmatpush.msra.mxu0 0.0
      %4332 = vmatpush.msra.mxu0 %v2781
      %4333 = vmatmul.f32.gmra.mxu0 %v4294
      %v4334 = vpop.f32.mrf.mxu0
      %v4335 = vadd.f32 0.0, %v4334
      %4336 = vmatmul.f32.gmra.mxu0 %v4297
      %v4337 = vpop.f32.mrf.mxu0
      %v4338 = vadd.f32 0.0, %v4337
      %4339 = vmatmul.f32.gmra.mxu0 %v4300
      %v4340 = vpop.f32.mrf.mxu0
      %v4341 = vadd.f32 0.0, %v4340
      %4342 = vmatmul.f32.gmra.mxu0 %v4303
      %v4343 = vpop.f32.mrf.mxu0
      %v4344 = vadd.f32 0.0, %v4343
      %4345 = vmatmul.f32.gmra.mxu0 %v4306
      %v4346 = vpop.f32.mrf.mxu0
      %v4347 = vadd.f32 0.0, %v4346
      %4348 = vmatmul.f32.gmra.mxu0 %v4309
      %v4349 = vpop.f32.mrf.mxu0
      %v4350 = vadd.f32 0.0, %v4349
      %4351 = vmatmul.f32.gmra.mxu0 %v4312
      %v4352 = vpop.f32.mrf.mxu0
      %v4353 = vadd.f32 0.0, %v4352
      %4354 = vmatmul.f32.gmra.mxu0 %v4315
      %v4355 = vpop.f32.mrf.mxu0
      %v4356 = vadd.f32 0.0, %v4355
      %4357 = vdwg.mxu0
      %v4358 = vadd.f32 %v3853, %v4335
      %v4359 = vadd.f32 %v3856, %v4338
      %v4360 = vadd.f32 %v3859, %v4341
      %v4361 = vadd.f32 %v3862, %v4344
      %v4362 = vadd.f32 %v3865, %v4347
      %v4363 = vadd.f32 %v3868, %v4350
      %v4364 = vadd.f32 %v3871, %v4353
      %v4365 = vadd.f32 %v3874, %v4356
      %4366 = vrot.lane.b32.xlu0 %v2825, 104
      %v4367 = vpop.permute.xlu0 %4366
      %4368 = vrot.lane.b32.xlu0 %v2828, 104
      %v4369 = vpop.permute.xlu0 %4368
      %4370 = vrot.lane.b32.xlu0 %v2831, 104
      %v4371 = vpop.permute.xlu0 %4370
      %4372 = vrot.lane.b32.xlu0 %v2834, 104
      %v4373 = vpop.permute.xlu0 %4372
      %4374 = vrot.lane.b32.xlu0 %v2837, 104
      %v4375 = vpop.permute.xlu0 %4374
      %4376 = vrot.lane.b32.xlu0 %v2840, 104
      %v4377 = vpop.permute.xlu0 %4376
      %4378 = vrot.lane.b32.xlu0 %v2843, 104
      %v4379 = vpop.permute.xlu0 %4378
      %4380 = vrot.lane.b32.xlu0 %v2846, 104
      %v4381 = vpop.permute.xlu0 %4380
      %4382 = vrot.lane.b32.xlu0 %v2899, 104
      %v4383 = vpop.permute.xlu0 %4382
      %4384 = vrot.lane.b32.xlu0 %v2902, 104
      %v4385 = vpop.permute.xlu0 %4384
      %4386 = vrot.lane.b32.xlu0 %v2905, 104
      %v4387 = vpop.permute.xlu0 %4386
      %4388 = vrot.lane.b32.xlu0 %v2908, 104
      %v4389 = vpop.permute.xlu0 %4388
      %4390 = vrot.lane.b32.xlu0 %v2911, 104
      %v4391 = vpop.permute.xlu0 %4390
      %4392 = vrot.lane.b32.xlu0 %v2914, 104
      %v4393 = vpop.permute.xlu0 %4392
      %4394 = vrot.lane.b32.xlu0 %v2917, 104
      %v4395 = vpop.permute.xlu0 %4394
      %4396 = vrot.lane.b32.xlu0 %v2920, 104
      %v4397 = vpop.permute.xlu0 %4396
      %4398 = vrot.lane.b32.xlu0 %v2923, 104
      %v4399 = vpop.permute.xlu0 %4398
      %4400 = vrot.lane.b32.xlu0 %v2926, 104
      %v4401 = vpop.permute.xlu0 %4400
      %v4402 = vsel %vm707, %v4367, 0
      %v4404 = vsel %vm707, %v4369, 0
      %v4406 = vsel %vm707, %v4371, 0
      %v4408 = vsel %vm707, %v4373, 0
      %v4410 = vsel %vm707, %v4375, 0
      %v4412 = vsel %vm707, %v4377, 0
      %v4414 = vsel %vm707, %v4379, 0
      %v4416 = vsel %vm707, %v4381, 0
      %v4418 = vsel %vm707, %v4383, 0
      %v4420 = vsel %vm707, %v4385, 0
      %v4422 = vsel %vm707, %v4387, 0
      %v4424 = vsel %vm707, %v4389, 0
      %v4426 = vsel %vm707, %v4391, 0
      %v4428 = vsel %vm707, %v4393, 0
      %v4430 = vsel %vm707, %v4395, 0
      %v4432 = vsel %vm707, %v4397, 0
      %v4434 = vsel %vm707, %v4399, 0
      %v4436 = vsel %vm707, %v4401, 0
      %4438 = vmatpush.xpose.msra.mxu0 0.0
      %4439 = vmatpush.xpose.msra.mxu0 0.0
      %4440 = vmatpush.xpose.msra.mxu0 0.0
      %4441 = vmatpush.xpose.msra.mxu0 0.0
      %4442 = vmatpush.xpose.msra.mxu0 0.0
      %4443 = vmatpush.xpose.msra.mxu0 0.0
      %4444 = vmatpush.xpose.msra.mxu0 %v4436
      %4445 = vmatpush.xpose.msra.mxu0 %v4434
      %4446 = vmatpush.xpose.msra.mxu0 %v4432
      %4447 = vmatpush.xpose.msra.mxu0 %v4430
      %4448 = vmatpush.xpose.msra.mxu0 %v4428
      %4449 = vmatpush.xpose.msra.mxu0 %v4426
      %4450 = vmatpush.xpose.msra.mxu0 %v4424
      %4451 = vmatpush.xpose.msra.mxu0 %v4422
      %4452 = vmatpush.xpose.msra.mxu0 %v4420
      %4453 = vmatpush.xpose.msra.mxu0 %v4418
      %4454 = vmatmul.f32.gmra.mxu0 %v4402
      %v4455 = vpop.f32.mrf.mxu0
      %v4456 = vadd.f32 0.0, %v4455
      %4457 = vmatmul.f32.gmra.mxu0 %v4404
      %v4458 = vpop.f32.mrf.mxu0
      %v4459 = vadd.f32 0.0, %v4458
      %4460 = vmatmul.f32.gmra.mxu0 %v4406
      %v4461 = vpop.f32.mrf.mxu0
      %v4462 = vadd.f32 0.0, %v4461
      %4463 = vmatmul.f32.gmra.mxu0 %v4408
      %v4464 = vpop.f32.mrf.mxu0
      %v4465 = vadd.f32 0.0, %v4464
      %4466 = vmatmul.f32.gmra.mxu0 %v4410
      %v4467 = vpop.f32.mrf.mxu0
      %v4468 = vadd.f32 0.0, %v4467
      %4469 = vmatmul.f32.gmra.mxu0 %v4412
      %v4470 = vpop.f32.mrf.mxu0
      %v4471 = vadd.f32 0.0, %v4470
      %4472 = vmatmul.f32.gmra.mxu0 %v4414
      %v4473 = vpop.f32.mrf.mxu0
      %v4474 = vadd.f32 0.0, %v4473
      %4475 = vmatmul.f32.gmra.mxu0 %v4416
      %v4476 = vpop.f32.mrf.mxu0
      %v4477 = vadd.f32 0.0, %v4476
      %4478 = vdwg.mxu0
      %v4479 = vmul.f32 %v4456, 0.35355338
      %v4480 = vmul.f32 %v4459, 0.35355338
      %v4481 = vmul.f32 %v4462, 0.35355338
      %v4482 = vmul.f32 %v4465, 0.35355338
      %v4483 = vmul.f32 %v4468, 0.35355338
      %v4484 = vmul.f32 %v4471, 0.35355338
      %v4485 = vmul.f32 %v4474, 0.35355338
      %v4486 = vmul.f32 %v4477, 0.35355338
      %v4487 = vsel %vm3031, %v4479, -inf
      %4488 = vmax.xlane.f32.xlu0 %v4487
      %v4489 = vpop.xlane.xlu0 %4488
      %v4490 = vsel %vm3031, %v4480, -inf
      %4491 = vmax.xlane.f32.xlu0 %v4490
      %v4492 = vpop.xlane.xlu0 %4491
      %v4493 = vsel %vm3031, %v4481, -inf
      %4494 = vmax.xlane.f32.xlu0 %v4493
      %v4495 = vpop.xlane.xlu0 %4494
      %v4496 = vsel %vm3031, %v4482, -inf
      %4497 = vmax.xlane.f32.xlu0 %v4496
      %v4498 = vpop.xlane.xlu0 %4497
      %v4499 = vsel %vm3031, %v4483, -inf
      %4500 = vmax.xlane.f32.xlu0 %v4499
      %v4501 = vpop.xlane.xlu0 %4500
      %v4502 = vsel %vm3031, %v4484, -inf
      %4503 = vmax.xlane.f32.xlu0 %v4502
      %v4504 = vpop.xlane.xlu0 %4503
      %v4505 = vsel %vm3031, %v4485, -inf
      %4506 = vmax.xlane.f32.xlu0 %v4505
      %v4507 = vpop.xlane.xlu0 %4506
      %v4508 = vsel %vm3031, %v4486, -inf
      %4509 = vmax.xlane.f32.xlu0 %v4508
      %v4510 = vpop.xlane.xlu0 %4509
      %v4511 = vsub.f32 %v4479, %v4489
      %v4512 = vsub.f32 %v4480, %v4492
      %v4513 = vsub.f32 %v4481, %v4495
      %v4514 = vsub.f32 %v4482, %v4498
      %v4515 = vsub.f32 %v4483, %v4501
      %v4516 = vsub.f32 %v4484, %v4504
      %v4517 = vsub.f32 %v4485, %v4507
      %v4518 = vsub.f32 %v4486, %v4510
      %v4519 = vmul.f32 %v4511, 1.442695
      %v4520 = vpow.pop %v4519
      %v4521 = vmul.f32 %v4512, 1.442695
      %v4522 = vpow.pop %v4521
      %v4523 = vmul.f32 %v4513, 1.442695
      %v4524 = vpow.pop %v4523
      %v4525 = vmul.f32 %v4514, 1.442695
      %v4526 = vpow.pop %v4525
      %v4527 = vmul.f32 %v4515, 1.442695
      %v4528 = vpow.pop %v4527
      %v4529 = vmul.f32 %v4516, 1.442695
      %v4530 = vpow.pop %v4529
      %v4531 = vmul.f32 %v4517, 1.442695
      %v4532 = vpow.pop %v4531
      %v4533 = vmul.f32 %v4518, 1.442695
      %v4534 = vpow.pop %v4533
      %v4535 = vsel %vm3031, %v4520, 0.0
      %4536 = vadd.xlane.f32.xlu0 %v4535
      %v4537 = vpop.xlane.xlu0 %4536
      %v4538 = vsel %vm3031, %v4522, 0.0
      %4539 = vadd.xlane.f32.xlu0 %v4538
      %v4540 = vpop.xlane.xlu0 %4539
      %v4541 = vsel %vm3031, %v4524, 0.0
      %4542 = vadd.xlane.f32.xlu0 %v4541
      %v4543 = vpop.xlane.xlu0 %4542
      %v4544 = vsel %vm3031, %v4526, 0.0
      %4545 = vadd.xlane.f32.xlu0 %v4544
      %v4546 = vpop.xlane.xlu0 %4545
      %v4547 = vsel %vm3031, %v4528, 0.0
      %4548 = vadd.xlane.f32.xlu0 %v4547
      %v4549 = vpop.xlane.xlu0 %4548
      %v4550 = vsel %vm3031, %v4530, 0.0
      %4551 = vadd.xlane.f32.xlu0 %v4550
      %v4552 = vpop.xlane.xlu0 %4551
      %v4553 = vsel %vm3031, %v4532, 0.0
      %4554 = vadd.xlane.f32.xlu0 %v4553
      %v4555 = vpop.xlane.xlu0 %4554
      %v4556 = vsel %vm3031, %v4534, 0.0
      %4557 = vadd.xlane.f32.xlu0 %v4556
      %v4558 = vpop.xlane.xlu0 %4557
      %v4559 = vrcp.pop %v4537
      %v4560 = vmul.f32 %v4537, %v4559
      %v4561 = vsub.f32 1.0, %v4560
      %v4562 = vmul.f32 %v4559, %v4561
      %v4563 = vadd.f32 %v4559, %v4562
      %vm4564 = vweird.f32 %v4537
      %vm4565 = vweird.f32 %v4559
      %vm4566 = vmor %vm4564, %vm4565
      %v4567 = vsel %vm4566, %v4559, %v4563
      %v4568 = vand.u32 2147483647, %v4537
      %vm4569 = vcmp.eq.f32.partialorder %v4568, 8.507059e+37
      %v4570 = vand.u32 %v4537, 2147483648
      %v4571 = vor.u32 1.1754944e-38, %v4570
      %v4572 = vsel %vm4569, %v4571, %v4567
      %v4573 = vmul.f32 1.0, %v4572
      %v4574 = vrcp.pop %v4540
      %v4575 = vmul.f32 %v4540, %v4574
      %v4576 = vsub.f32 1.0, %v4575
      %v4577 = vmul.f32 %v4574, %v4576
      %v4578 = vadd.f32 %v4574, %v4577
      %vm4579 = vweird.f32 %v4540
      %vm4580 = vweird.f32 %v4574
      %vm4581 = vmor %vm4579, %vm4580
      %v4582 = vsel %vm4581, %v4574, %v4578
      %v4583 = vand.u32 2147483647, %v4540
      %vm4584 = vcmp.eq.f32.partialorder %v4583, 8.507059e+37
      %v4585 = vand.u32 %v4540, 2147483648
      %v4586 = vor.u32 1.1754944e-38, %v4585
      %v4587 = vsel %vm4584, %v4586, %v4582
      %v4588 = vmul.f32 1.0, %v4587
      %v4589 = vrcp.pop %v4543
      %v4590 = vmul.f32 %v4543, %v4589
      %v4591 = vsub.f32 1.0, %v4590
      %v4592 = vmul.f32 %v4589, %v4591
      %v4593 = vadd.f32 %v4589, %v4592
      %vm4594 = vweird.f32 %v4543
      %vm4595 = vweird.f32 %v4589
      %vm4596 = vmor %vm4594, %vm4595
      %v4597 = vsel %vm4596, %v4589, %v4593
      %v4598 = vand.u32 2147483647, %v4543
      %vm4599 = vcmp.eq.f32.partialorder %v4598, 8.507059e+37
      %v4600 = vand.u32 %v4543, 2147483648
      %v4601 = vor.u32 1.1754944e-38, %v4600
      %v4602 = vsel %vm4599, %v4601, %v4597
      %v4603 = vmul.f32 1.0, %v4602
      %v4604 = vrcp.pop %v4546
      %v4605 = vmul.f32 %v4546, %v4604
      %v4606 = vsub.f32 1.0, %v4605
      %v4607 = vmul.f32 %v4604, %v4606
      %v4608 = vadd.f32 %v4604, %v4607
      %vm4609 = vweird.f32 %v4546
      %vm4610 = vweird.f32 %v4604
      %vm4611 = vmor %vm4609, %vm4610
      %v4612 = vsel %vm4611, %v4604, %v4608
      %v4613 = vand.u32 2147483647, %v4546
      %vm4614 = vcmp.eq.f32.partialorder %v4613, 8.507059e+37
      %v4615 = vand.u32 %v4546, 2147483648
      %v4616 = vor.u32 1.1754944e-38, %v4615
      %v4617 = vsel %vm4614, %v4616, %v4612
      %v4618 = vmul.f32 1.0, %v4617
      %v4619 = vrcp.pop %v4549
      %v4620 = vmul.f32 %v4549, %v4619
      %v4621 = vsub.f32 1.0, %v4620
      %v4622 = vmul.f32 %v4619, %v4621
      %v4623 = vadd.f32 %v4619, %v4622
      %vm4624 = vweird.f32 %v4549
      %vm4625 = vweird.f32 %v4619
      %vm4626 = vmor %vm4624, %vm4625
      %v4627 = vsel %vm4626, %v4619, %v4623
      %v4628 = vand.u32 2147483647, %v4549
      %vm4629 = vcmp.eq.f32.partialorder %v4628, 8.507059e+37
      %v4630 = vand.u32 %v4549, 2147483648
      %v4631 = vor.u32 1.1754944e-38, %v4630
      %v4632 = vsel %vm4629, %v4631, %v4627
      %v4633 = vmul.f32 1.0, %v4632
      %v4634 = vrcp.pop %v4552
      %v4635 = vmul.f32 %v4552, %v4634
      %v4636 = vsub.f32 1.0, %v4635
      %v4637 = vmul.f32 %v4634, %v4636
      %v4638 = vadd.f32 %v4634, %v4637
      %vm4639 = vweird.f32 %v4552
      %vm4640 = vweird.f32 %v4634
      %vm4641 = vmor %vm4639, %vm4640
      %v4642 = vsel %vm4641, %v4634, %v4638
      %v4643 = vand.u32 2147483647, %v4552
      %vm4644 = vcmp.eq.f32.partialorder %v4643, 8.507059e+37
      %v4645 = vand.u32 %v4552, 2147483648
      %v4646 = vor.u32 1.1754944e-38, %v4645
      %v4647 = vsel %vm4644, %v4646, %v4642
      %v4648 = vmul.f32 1.0, %v4647
      %v4649 = vrcp.pop %v4555
      %v4650 = vmul.f32 %v4555, %v4649
      %v4651 = vsub.f32 1.0, %v4650
      %v4652 = vmul.f32 %v4649, %v4651
      %v4653 = vadd.f32 %v4649, %v4652
      %vm4654 = vweird.f32 %v4555
      %vm4655 = vweird.f32 %v4649
      %vm4656 = vmor %vm4654, %vm4655
      %v4657 = vsel %vm4656, %v4649, %v4653
      %v4658 = vand.u32 2147483647, %v4555
      %vm4659 = vcmp.eq.f32.partialorder %v4658, 8.507059e+37
      %v4660 = vand.u32 %v4555, 2147483648
      %v4661 = vor.u32 1.1754944e-38, %v4660
      %v4662 = vsel %vm4659, %v4661, %v4657
      %v4663 = vmul.f32 1.0, %v4662
      %v4664 = vrcp.pop %v4558
      %v4665 = vmul.f32 %v4558, %v4664
      %v4666 = vsub.f32 1.0, %v4665
      %v4667 = vmul.f32 %v4664, %v4666
      %v4668 = vadd.f32 %v4664, %v4667
      %vm4669 = vweird.f32 %v4558
      %vm4670 = vweird.f32 %v4664
      %vm4671 = vmor %vm4669, %vm4670
      %v4672 = vsel %vm4671, %v4664, %v4668
      %v4673 = vand.u32 2147483647, %v4558
      %vm4674 = vcmp.eq.f32.partialorder %v4673, 8.507059e+37
      %v4675 = vand.u32 %v4558, 2147483648
      %v4676 = vor.u32 1.1754944e-38, %v4675
      %v4677 = vsel %vm4674, %v4676, %v4672
      %v4678 = vmul.f32 1.0, %v4677
      %4679 = vrot.lane.b32.xlu0 %v2899, 72
      %v4680 = vpop.permute.xlu0 %4679
      %4681 = vrot.lane.b32.xlu0 %v2902, 72
      %v4682 = vpop.permute.xlu0 %4681
      %4683 = vrot.lane.b32.xlu0 %v2905, 72
      %v4684 = vpop.permute.xlu0 %4683
      %4685 = vrot.lane.b32.xlu0 %v2908, 72
      %v4686 = vpop.permute.xlu0 %4685
      %4687 = vrot.lane.b32.xlu0 %v2911, 72
      %v4688 = vpop.permute.xlu0 %4687
      %4689 = vrot.lane.b32.xlu0 %v2914, 72
      %v4690 = vpop.permute.xlu0 %4689
      %4691 = vrot.lane.b32.xlu0 %v2917, 72
      %v4692 = vpop.permute.xlu0 %4691
      %4693 = vrot.lane.b32.xlu0 %v2920, 72
      %v4694 = vpop.permute.xlu0 %4693
      %4695 = vrot.lane.b32.xlu0 %v2923, 72
      %v4696 = vpop.permute.xlu0 %4695
      %4697 = vrot.lane.b32.xlu0 %v2926, 72
      %v4698 = vpop.permute.xlu0 %4697
      %v4709 = vsel %vm3031, %v4520, 0
      %v4712 = vsel %vm3031, %v4522, 0
      %v4715 = vsel %vm3031, %v4524, 0
      %v4718 = vsel %vm3031, %v4526, 0
      %v4721 = vsel %vm3031, %v4528, 0
      %v4724 = vsel %vm3031, %v4530, 0
      %v4727 = vsel %vm3031, %v4532, 0
      %v4730 = vsel %vm3031, %v4534, 0
      %v4732 = vsel %vm3277, %v4698, 0
      %4734 = vmatpush.msra.mxu0 0.0
      %4735 = vmatpush.msra.mxu0 0.0
      %4736 = vmatpush.msra.mxu0 0.0
      %4737 = vmatpush.msra.mxu0 0.0
      %4738 = vmatpush.msra.mxu0 0.0
      %4739 = vmatpush.msra.mxu0 0.0
      %4740 = vmatpush.msra.mxu0 %v4732
      %4741 = vmatpush.msra.mxu0 %v4696
      %4742 = vmatpush.msra.mxu0 %v4694
      %4743 = vmatpush.msra.mxu0 %v4692
      %4744 = vmatpush.msra.mxu0 %v4690
      %4745 = vmatpush.msra.mxu0 %v4688
      %4746 = vmatpush.msra.mxu0 %v4686
      %4747 = vmatpush.msra.mxu0 %v4684
      %4748 = vmatpush.msra.mxu0 %v4682
      %4749 = vmatpush.msra.mxu0 %v4680
      %4750 = vmatmul.f32.gmra.mxu0 %v4709
      %v4751 = vpop.f32.mrf.mxu0
      %v4752 = vadd.f32 0.0, %v4751
      %4753 = vmatmul.f32.gmra.mxu0 %v4712
      %v4754 = vpop.f32.mrf.mxu0
      %v4755 = vadd.f32 0.0, %v4754
      %4756 = vmatmul.f32.gmra.mxu0 %v4715
      %v4757 = vpop.f32.mrf.mxu0
      %v4758 = vadd.f32 0.0, %v4757
      %4759 = vmatmul.f32.gmra.mxu0 %v4718
      %v4760 = vpop.f32.mrf.mxu0
      %v4761 = vadd.f32 0.0, %v4760
      %4762 = vmatmul.f32.gmra.mxu0 %v4721
      %v4763 = vpop.f32.mrf.mxu0
      %v4764 = vadd.f32 0.0, %v4763
      %4765 = vmatmul.f32.gmra.mxu0 %v4724
      %v4766 = vpop.f32.mrf.mxu0
      %v4767 = vadd.f32 0.0, %v4766
      %4768 = vmatmul.f32.gmra.mxu0 %v4727
      %v4769 = vpop.f32.mrf.mxu0
      %v4770 = vadd.f32 0.0, %v4769
      %4771 = vmatmul.f32.gmra.mxu0 %v4730
      %v4772 = vpop.f32.mrf.mxu0
      %v4773 = vadd.f32 0.0, %v4772
      %4774 = vdwg.mxu0
      %v4775 = vmul.f32 %v4752, %v4573
      %v4776 = vmul.f32 %v4755, %v4588
      %v4777 = vmul.f32 %v4758, %v4603
      %v4778 = vmul.f32 %v4761, %v4618
      %v4779 = vmul.f32 %v4764, %v4633
      %v4780 = vmul.f32 %v4767, %v4648
      %v4781 = vmul.f32 %v4770, %v4663
      %v4782 = vmul.f32 %v4773, %v4678
      %v4784 = vsel %vm707, %v4775, 0
      %v4787 = vsel %vm707, %v4776, 0
      %v4790 = vsel %vm707, %v4777, 0
      %v4793 = vsel %vm707, %v4778, 0
      %v4796 = vsel %vm707, %v4779, 0
      %v4799 = vsel %vm707, %v4780, 0
      %v4802 = vsel %vm707, %v4781, 0
      %v4805 = vsel %vm707, %v4782, 0
      %4807 = vmatpush.msra.mxu0 0.0
      %4808 = vmatpush.msra.mxu0 0.0
      %4809 = vmatpush.msra.mxu0 0.0
      %4810 = vmatpush.msra.mxu0 0.0
      %4811 = vmatpush.msra.mxu0 0.0
      %4812 = vmatpush.msra.mxu0 0.0
      %4813 = vmatpush.msra.mxu0 0.0
      %4814 = vmatpush.msra.mxu0 0.0
      %4815 = vmatpush.msra.mxu0 0.0
      %4816 = vmatpush.msra.mxu0 0.0
      %4817 = vmatpush.msra.mxu0 0.0
      %4818 = vmatpush.msra.mxu0 0.0
      %4819 = vmatpush.msra.mxu0 0.0
      %4820 = vmatpush.msra.mxu0 0.0
      %4821 = vmatpush.msra.mxu0 0.0
      %4822 = vmatpush.msra.mxu0 %v2782
      %4823 = vmatmul.f32.gmra.mxu0 %v4784
      %v4824 = vpop.f32.mrf.mxu0
      %v4825 = vadd.f32 0.0, %v4824
      %4826 = vmatmul.f32.gmra.mxu0 %v4787
      %v4827 = vpop.f32.mrf.mxu0
      %v4828 = vadd.f32 0.0, %v4827
      %4829 = vmatmul.f32.gmra.mxu0 %v4790
      %v4830 = vpop.f32.mrf.mxu0
      %v4831 = vadd.f32 0.0, %v4830
      %4832 = vmatmul.f32.gmra.mxu0 %v4793
      %v4833 = vpop.f32.mrf.mxu0
      %v4834 = vadd.f32 0.0, %v4833
      %4835 = vmatmul.f32.gmra.mxu0 %v4796
      %v4836 = vpop.f32.mrf.mxu0
      %v4837 = vadd.f32 0.0, %v4836
      %4838 = vmatmul.f32.gmra.mxu0 %v4799
      %v4839 = vpop.f32.mrf.mxu0
      %v4840 = vadd.f32 0.0, %v4839
      %4841 = vmatmul.f32.gmra.mxu0 %v4802
      %v4842 = vpop.f32.mrf.mxu0
      %v4843 = vadd.f32 0.0, %v4842
      %4844 = vmatmul.f32.gmra.mxu0 %v4805
      %v4845 = vpop.f32.mrf.mxu0
      %v4846 = vadd.f32 0.0, %v4845
      %4847 = vdwg.mxu0
      %v4848 = vadd.f32 %v4358, %v4825
      %v4849 = vadd.f32 %v4359, %v4828
      %v4850 = vadd.f32 %v4360, %v4831
      %v4851 = vadd.f32 %v4361, %v4834
      %v4852 = vadd.f32 %v4362, %v4837
      %v4853 = vadd.f32 %v4363, %v4840
      %v4854 = vadd.f32 %v4364, %v4843
      %v4855 = vadd.f32 %v4365, %v4846
      %v4856 = vadd.f32 %v2571, %v4848
      %v4857 = vadd.f32 %v2572, %v4849
      %v4858 = vadd.f32 %v2573, %v4850
      %v4859 = vadd.f32 %v2574, %v4851
      %v4860 = vadd.f32 %v2575, %v4852
      %v4861 = vadd.f32 %v2576, %v4853
      %v4862 = vadd.f32 %v2577, %v4854
      %v4863 = vadd.f32 %v2578, %v4855
      %v4864 = vld [vmem:[%s9 + $0x7] sm:$0x1]
      %v4865 = vperm.slane %v4864, 0
      %v4866 = vadd.f32 %v4856, %v4865
      %v4867 = vadd.f32 %v4857, %v4865
      %v4868 = vadd.f32 %v4858, %v4865
      %v4869 = vadd.f32 %v4859, %v4865
      %v4870 = vadd.f32 %v4860, %v4865
      %v4871 = vadd.f32 %v4861, %v4865
      %v4872 = vadd.f32 %v4862, %v4865
      %v4873 = vadd.f32 %v4863, %v4865
      %v4874 = vld [vmem:[%s9 + $0x4] sm:$0x1]
      %v4875 = vld [vmem:[%s9 + $0x5] sm:$0x1]
      %v4876 = vsel %vm400, %v4866, 0.0
      %4877 = vadd.xlane.f32.xlu0 %v4876
      %v4878 = vpop.xlane.xlu0 %4877
      %v4879 = vsel %vm400, %v4867, 0.0
      %4880 = vadd.xlane.f32.xlu0 %v4879
      %v4881 = vpop.xlane.xlu0 %4880
      %v4882 = vsel %vm400, %v4868, 0.0
      %4883 = vadd.xlane.f32.xlu0 %v4882
      %v4884 = vpop.xlane.xlu0 %4883
      %v4885 = vsel %vm400, %v4869, 0.0
      %4886 = vadd.xlane.f32.xlu0 %v4885
      %v4887 = vpop.xlane.xlu0 %4886
      %v4888 = vsel %vm400, %v4870, 0.0
      %4889 = vadd.xlane.f32.xlu0 %v4888
      %v4890 = vpop.xlane.xlu0 %4889
      %v4891 = vsel %vm400, %v4871, 0.0
      %4892 = vadd.xlane.f32.xlu0 %v4891
      %v4893 = vpop.xlane.xlu0 %4892
      %v4894 = vsel %vm400, %v4872, 0.0
      %4895 = vadd.xlane.f32.xlu0 %v4894
      %v4896 = vpop.xlane.xlu0 %4895
      %v4897 = vsel %vm400, %v4873, 0.0
      %4898 = vadd.xlane.f32.xlu0 %v4897
      %v4899 = vpop.xlane.xlu0 %4898
      %v4900 = vmul.f32 %v4878, %v431
      %v4901 = vmul.f32 %v4881, %v431
      %v4902 = vmul.f32 %v4884, %v431
      %v4903 = vmul.f32 %v4887, %v431
      %v4904 = vmul.f32 %v4890, %v431
      %v4905 = vmul.f32 %v4893, %v431
      %v4906 = vmul.f32 %v4896, %v431
      %v4907 = vmul.f32 %v4899, %v431
      %v4908 = vsub.f32 %v4866, %v4900
      %v4909 = vsub.f32 %v4867, %v4901
      %v4910 = vsub.f32 %v4868, %v4902
      %v4911 = vsub.f32 %v4869, %v4903
      %v4912 = vsub.f32 %v4870, %v4904
      %v4913 = vsub.f32 %v4871, %v4905
      %v4914 = vsub.f32 %v4872, %v4906
      %v4915 = vsub.f32 %v4873, %v4907
      %v4916 = vmul.f32 %v4908, %v4908
      %v4917 = vmul.f32 %v4909, %v4909
      %v4918 = vmul.f32 %v4910, %v4910
      %v4919 = vmul.f32 %v4911, %v4911
      %v4920 = vmul.f32 %v4912, %v4912
      %v4921 = vmul.f32 %v4913, %v4913
      %v4922 = vmul.f32 %v4914, %v4914
      %v4923 = vmul.f32 %v4915, %v4915
      %v4924 = vsel %vm400, %v4916, 0.0
      %4925 = vadd.xlane.f32.xlu0 %v4924
      %v4926 = vpop.xlane.xlu0 %4925
      %v4927 = vsel %vm400, %v4917, 0.0
      %4928 = vadd.xlane.f32.xlu0 %v4927
      %v4929 = vpop.xlane.xlu0 %4928
      %v4930 = vsel %vm400, %v4918, 0.0
      %4931 = vadd.xlane.f32.xlu0 %v4930
      %v4932 = vpop.xlane.xlu0 %4931
      %v4933 = vsel %vm400, %v4919, 0.0
      %4934 = vadd.xlane.f32.xlu0 %v4933
      %v4935 = vpop.xlane.xlu0 %4934
      %v4936 = vsel %vm400, %v4920, 0.0
      %4937 = vadd.xlane.f32.xlu0 %v4936
      %v4938 = vpop.xlane.xlu0 %4937
      %v4939 = vsel %vm400, %v4921, 0.0
      %4940 = vadd.xlane.f32.xlu0 %v4939
      %v4941 = vpop.xlane.xlu0 %4940
      %v4942 = vsel %vm400, %v4922, 0.0
      %4943 = vadd.xlane.f32.xlu0 %v4942
      %v4944 = vpop.xlane.xlu0 %4943
      %v4945 = vsel %vm400, %v4923, 0.0
      %4946 = vadd.xlane.f32.xlu0 %v4945
      %v4947 = vpop.xlane.xlu0 %4946
      %v4948 = vmul.f32 %v4926, %v431
      %v4949 = vmul.f32 %v4929, %v431
      %v4950 = vmul.f32 %v4932, %v431
      %v4951 = vmul.f32 %v4935, %v431
      %v4952 = vmul.f32 %v4938, %v431
      %v4953 = vmul.f32 %v4941, %v431
      %v4954 = vmul.f32 %v4944, %v431
      %v4955 = vmul.f32 %v4947, %v431
      %v4956 = vadd.f32 %v4948, 1e-05
      %v4957 = vadd.f32 %v4949, 1e-05
      %v4958 = vadd.f32 %v4950, 1e-05
      %v4959 = vadd.f32 %v4951, 1e-05
      %v4960 = vadd.f32 %v4952, 1e-05
      %v4961 = vadd.f32 %v4953, 1e-05
      %v4962 = vadd.f32 %v4954, 1e-05
      %v4963 = vadd.f32 %v4955, 1e-05
      %v4964 = vrsqrt.pop %v4956
      %v4965 = vmul.f32 %v4964, %v4956
      %v4966 = vmul.f32 %v4965, %v4964
      %v4967 = vmul.f32 0.5, %v4966
      %v4968 = vsub.f32 1.5, %v4967
      %v4969 = vmul.f32 %v4964, %v4968
      %vm4970 = vweird.f32 %v4956
      %vm4971 = vweird.f32 %v4964
      %vm4972 = vmor %vm4970, %vm4971
      %v4973 = vsel %vm4972, %v4964, %v4969
      %v4974 = vrsqrt.pop %v4957
      %v4975 = vmul.f32 %v4974, %v4957
      %v4976 = vmul.f32 %v4975, %v4974
      %v4977 = vmul.f32 0.5, %v4976
      %v4978 = vsub.f32 1.5, %v4977
      %v4979 = vmul.f32 %v4974, %v4978
      %vm4980 = vweird.f32 %v4957
      %vm4981 = vweird.f32 %v4974
      %vm4982 = vmor %vm4980, %vm4981
      %v4983 = vsel %vm4982, %v4974, %v4979
      %v4984 = vrsqrt.pop %v4958
      %v4985 = vmul.f32 %v4984, %v4958
      %v4986 = vmul.f32 %v4985, %v4984
      %v4987 = vmul.f32 0.5, %v4986
      %v4988 = vsub.f32 1.5, %v4987
      %v4989 = vmul.f32 %v4984, %v4988
      %vm4990 = vweird.f32 %v4958
      %vm4991 = vweird.f32 %v4984
      %vm4992 = vmor %vm4990, %vm4991
      %v4993 = vsel %vm4992, %v4984, %v4989
      %v4994 = vrsqrt.pop %v4959
      %v4995 = vmul.f32 %v4994, %v4959
      %v4996 = vmul.f32 %v4995, %v4994
      %v4997 = vmul.f32 0.5, %v4996
      %v4998 = vsub.f32 1.5, %v4997
      %v4999 = vmul.f32 %v4994, %v4998
      %vm5000 = vweird.f32 %v4959
      %vm5001 = vweird.f32 %v4994
      %vm5002 = vmor %vm5000, %vm5001
      %v5003 = vsel %vm5002, %v4994, %v4999
      %v5004 = vrsqrt.pop %v4960
      %v5005 = vmul.f32 %v5004, %v4960
      %v5006 = vmul.f32 %v5005, %v5004
      %v5007 = vmul.f32 0.5, %v5006
      %v5008 = vsub.f32 1.5, %v5007
      %v5009 = vmul.f32 %v5004, %v5008
      %vm5010 = vweird.f32 %v4960
      %vm5011 = vweird.f32 %v5004
      %vm5012 = vmor %vm5010, %vm5011
      %v5013 = vsel %vm5012, %v5004, %v5009
      %v5014 = vrsqrt.pop %v4961
      %v5015 = vmul.f32 %v5014, %v4961
      %v5016 = vmul.f32 %v5015, %v5014
      %v5017 = vmul.f32 0.5, %v5016
      %v5018 = vsub.f32 1.5, %v5017
      %v5019 = vmul.f32 %v5014, %v5018
      %vm5020 = vweird.f32 %v4961
      %vm5021 = vweird.f32 %v5014
      %vm5022 = vmor %vm5020, %vm5021
      %v5023 = vsel %vm5022, %v5014, %v5019
      %v5024 = vrsqrt.pop %v4962
      %v5025 = vmul.f32 %v5024, %v4962
      %v5026 = vmul.f32 %v5025, %v5024
      %v5027 = vmul.f32 0.5, %v5026
      %v5028 = vsub.f32 1.5, %v5027
      %v5029 = vmul.f32 %v5024, %v5028
      %vm5030 = vweird.f32 %v4962
      %vm5031 = vweird.f32 %v5024
      %vm5032 = vmor %vm5030, %vm5031
      %v5033 = vsel %vm5032, %v5024, %v5029
      %v5034 = vrsqrt.pop %v4963
      %v5035 = vmul.f32 %v5034, %v4963
      %v5036 = vmul.f32 %v5035, %v5034
      %v5037 = vmul.f32 0.5, %v5036
      %v5038 = vsub.f32 1.5, %v5037
      %v5039 = vmul.f32 %v5034, %v5038
      %vm5040 = vweird.f32 %v4963
      %vm5041 = vweird.f32 %v5034
      %vm5042 = vmor %vm5040, %vm5041
      %v5043 = vsel %vm5042, %v5034, %v5039
      %v5044 = vmul.f32 %v4908, %v4973
      %v5045 = vmul.f32 %v4909, %v4983
      %v5046 = vmul.f32 %v4910, %v4993
      %v5047 = vmul.f32 %v4911, %v5003
      %v5048 = vmul.f32 %v4912, %v5013
      %v5049 = vmul.f32 %v4913, %v5023
      %v5050 = vmul.f32 %v4914, %v5033
      %v5051 = vmul.f32 %v4915, %v5043
      %v5052 = vperm.slane %v4874, 0
      %v5053 = vmul.f32 %v5044, %v5052
      %v5054 = vmul.f32 %v5045, %v5052
      %v5055 = vmul.f32 %v5046, %v5052
      %v5056 = vmul.f32 %v5047, %v5052
      %v5057 = vmul.f32 %v5048, %v5052
      %v5058 = vmul.f32 %v5049, %v5052
      %v5059 = vmul.f32 %v5050, %v5052
      %v5060 = vmul.f32 %v5051, %v5052
      %v5061 = vperm.slane %v4875, 0
      %v5062 = vadd.f32 %v5053, %v5061
      %v5063 = vadd.f32 %v5054, %v5061
      %v5064 = vadd.f32 %v5055, %v5061
      %v5065 = vadd.f32 %v5056, %v5061
      %v5066 = vadd.f32 %v5057, %v5061
      %v5067 = vadd.f32 %v5058, %v5061
      %v5068 = vadd.f32 %v5059, %v5061
      %v5069 = vadd.f32 %v5060, %v5061
      %v5070 = vld [vmem:[%s6] sm:$0xff]
      %v5071 = vld [vmem:[%s6 + $0x8] sm:$0xff]
      %v5072 = vld [vmem:[%s6 + $0x10] sm:$0xff]
      %v5073 = vld [vmem:[%s6 + $0x18] sm:$0xff]
      %v5074 = vld [vmem:[%s6 + $0x20] sm:$0xff]
      %v5075 = vld [vmem:[%s6 + $0x28] sm:$0xff]
      %v5076 = vld [vmem:[%s6 + $0x30] sm:$0xff]
      %v5077 = vld [vmem:[%s6 + $0x38] sm:$0xff]
      %v5078 = vld [vmem:[%s7] sm:$0x3]
      %v5080 = vperm.slane %v5078, 0
      %v5081 = vperm.slane %v5078, 1
      %v5085 = vsel %vm400, %v5062, 0
      %v5088 = vsel %vm400, %v5063, 0
      %v5091 = vsel %vm400, %v5064, 0
      %v5094 = vsel %vm400, %v5065, 0
      %v5097 = vsel %vm400, %v5066, 0
      %v5100 = vsel %vm400, %v5067, 0
      %v5103 = vsel %vm400, %v5068, 0
      %v5106 = vsel %vm400, %v5069, 0
      %5108 = vmatpush.msra.mxu0 0.0
      %5109 = vmatpush.msra.mxu0 0.0
      %5110 = vmatpush.msra.mxu0 0.0
      %5111 = vmatpush.msra.mxu0 0.0
      %5112 = vmatpush.msra.mxu0 0.0
      %5113 = vmatpush.msra.mxu0 0.0
      %5114 = vmatpush.msra.mxu0 0.0
      %5115 = vmatpush.msra.mxu0 0.0
      %5116 = vmatpush.msra.mxu0 0.0
      %5117 = vmatpush.msra.mxu0 0.0
      %5118 = vmatpush.msra.mxu0 0.0
      %5119 = vmatpush.msra.mxu0 0.0
      %5120 = vmatpush.msra.mxu0 %v5076
      %5121 = vmatpush.msra.mxu0 %v5074
      %5122 = vmatpush.msra.mxu0 %v5072
      %5123 = vmatpush.msra.mxu0 %v5070
      %5124 = vmatmul.f32.gmra.mxu0 %v5085
      %v5125 = vpop.f32.mrf.mxu0
      %v5126 = vadd.f32 %v5080, %v5125
      %5127 = vmatmul.f32.gmra.mxu0 %v5088
      %v5128 = vpop.f32.mrf.mxu0
      %v5129 = vadd.f32 %v5080, %v5128
      %5130 = vmatmul.f32.gmra.mxu0 %v5091
      %v5131 = vpop.f32.mrf.mxu0
      %v5132 = vadd.f32 %v5080, %v5131
      %5133 = vmatmul.f32.gmra.mxu0 %v5094
      %v5134 = vpop.f32.mrf.mxu0
      %v5135 = vadd.f32 %v5080, %v5134
      %5136 = vmatmul.f32.gmra.mxu0 %v5097
      %v5137 = vpop.f32.mrf.mxu0
      %v5138 = vadd.f32 %v5080, %v5137
      %5139 = vmatmul.f32.gmra.mxu0 %v5100
      %v5140 = vpop.f32.mrf.mxu0
      %v5141 = vadd.f32 %v5080, %v5140
      %5142 = vmatmul.f32.gmra.mxu0 %v5103
      %v5143 = vpop.f32.mrf.mxu0
      %v5144 = vadd.f32 %v5080, %v5143
      %5145 = vmatmul.f32.gmra.mxu0 %v5106
      %v5146 = vpop.f32.mrf.mxu0
      %v5147 = vadd.f32 %v5080, %v5146
      %5148 = vdwg.mxu0
      %5149 = vmatpush.msra.mxu0 0.0
      %5150 = vmatpush.msra.mxu0 0.0
      %5151 = vmatpush.msra.mxu0 0.0
      %5152 = vmatpush.msra.mxu0 0.0
      %5153 = vmatpush.msra.mxu0 0.0
      %5154 = vmatpush.msra.mxu0 0.0
      %5155 = vmatpush.msra.mxu0 0.0
      %5156 = vmatpush.msra.mxu0 0.0
      %5157 = vmatpush.msra.mxu0 0.0
      %5158 = vmatpush.msra.mxu0 0.0
      %5159 = vmatpush.msra.mxu0 0.0
      %5160 = vmatpush.msra.mxu0 0.0
      %5161 = vmatpush.msra.mxu0 %v5077
      %5162 = vmatpush.msra.mxu0 %v5075
      %5163 = vmatpush.msra.mxu0 %v5073
      %5164 = vmatpush.msra.mxu0 %v5071
      %5165 = vmatmul.f32.gmra.mxu0 %v5085
      %v5166 = vpop.f32.mrf.mxu0
      %v5167 = vadd.f32 %v5081, %v5166
      %5168 = vmatmul.f32.gmra.mxu0 %v5088
      %v5169 = vpop.f32.mrf.mxu0
      %v5170 = vadd.f32 %v5081, %v5169
      %5171 = vmatmul.f32.gmra.mxu0 %v5091
      %v5172 = vpop.f32.mrf.mxu0
      %v5173 = vadd.f32 %v5081, %v5172
      %5174 = vmatmul.f32.gmra.mxu0 %v5094
      %v5175 = vpop.f32.mrf.mxu0
      %v5176 = vadd.f32 %v5081, %v5175
      %5177 = vmatmul.f32.gmra.mxu0 %v5097
      %v5178 = vpop.f32.mrf.mxu0
      %v5179 = vadd.f32 %v5081, %v5178
      %5180 = vmatmul.f32.gmra.mxu0 %v5100
      %v5181 = vpop.f32.mrf.mxu0
      %v5182 = vadd.f32 %v5081, %v5181
      %5183 = vmatmul.f32.gmra.mxu0 %v5103
      %v5184 = vpop.f32.mrf.mxu0
      %v5185 = vadd.f32 %v5081, %v5184
      %5186 = vmatmul.f32.gmra.mxu0 %v5106
      %v5187 = vpop.f32.mrf.mxu0
      %v5188 = vadd.f32 %v5081, %v5187
      %5189 = vdwg.mxu0
      %v5190 = vmul.f32 %v5167, 0.5
      %v5191 = vmul.f32 %v5170, 0.5
      %v5192 = vmul.f32 %v5173, 0.5
      %v5193 = vmul.f32 %v5176, 0.5
      %v5194 = vmul.f32 %v5179, 0.5
      %v5195 = vmul.f32 %v5182, 0.5
      %v5196 = vmul.f32 %v5185, 0.5
      %v5197 = vmul.f32 %v5188, 0.5
      %v5198 = vmul.f32 %v5167, 0.70710677
      %v5199 = vmul.f32 %v5170, 0.70710677
      %v5200 = vmul.f32 %v5173, 0.70710677
      %v5201 = vmul.f32 %v5176, 0.70710677
      %v5202 = vmul.f32 %v5179, 0.70710677
      %v5203 = vmul.f32 %v5182, 0.70710677
      %v5204 = vmul.f32 %v5185, 0.70710677
      %v5205 = vmul.f32 %v5188, 0.70710677
      %v5206 = vmul.f32 %v5198, %v5198
      %v5207 = vmin.f32 16.0, %v5206
      %v5208 = vmul.f32 %v5207, 2.1237322e-06
      %v5209 = vadd.f32 %v5208, 0.00028619796
      %v5210 = vmul.f32 %v5207, %v5209
      %v5211 = vadd.f32 %v5210, 0.0036580483
      %v5212 = vmul.f32 %v5207, %v5211
      %v5213 = vadd.f32 %v5212, 0.05243302
      %v5214 = vmul.f32 %v5207, %v5213
      %v5215 = vadd.f32 %v5214, 0.18741608
      %v5216 = vmul.f32 %v5207, %v5215
      %v5217 = vadd.f32 %v5216, 1.1283791
      %v5218 = vmul.f32 %v5198, %v5217
      %v5219 = vmul.f32 %v5207, 3.8918573e-05
      %v5220 = vadd.f32 %v5219, 0.001143296
      %v5221 = vmul.f32 %v5207, %v5220
      %v5222 = vadd.f32 %v5221, 0.014752088
      %v5223 = vmul.f32 %v5207, %v5222
      %v5224 = vadd.f32 %v5223, 0.112945676
      %v5225 = vmul.f32 %v5207, %v5224
      %v5226 = vadd.f32 %v5225, 0.4994258
      %v5227 = vmul.f32 %v5207, %v5226
      %v5228 = vadd.f32 %v5227, 1.0
      %v5229 = vrcp.pop %v5228
      %v5230 = vmul.f32 %v5228, %v5229
      %v5231 = vsub.f32 1.0, %v5230
      %v5232 = vmul.f32 %v5229, %v5231
      %v5233 = vadd.f32 %v5229, %v5232
      %vm5234 = vweird.f32 %v5228
      %vm5235 = vweird.f32 %v5229
      %vm5236 = vmor %vm5234, %vm5235
      %v5237 = vsel %vm5236, %v5229, %v5233
      %v5238 = vand.u32 2147483647, %v5228
      %vm5239 = vcmp.eq.f32.partialorder %v5238, 8.507059e+37
      %v5240 = vand.u32 %v5228, 2147483648
      %v5241 = vor.u32 1.1754944e-38, %v5240
      %v5242 = vsel %vm5239, %v5241, %v5237
      %v5243 = vmul.f32 %v5218, %v5242
      %v5244 = vmin.f32 %v5243, 1.0
      %v5245 = vmax.f32 %v5244, -1.0
      %v5246 = vmul.f32 %v5199, %v5199
      %v5247 = vmin.f32 16.0, %v5246
      %v5248 = vmul.f32 %v5247, 2.1237322e-06
      %v5249 = vadd.f32 %v5248, 0.00028619796
      %v5250 = vmul.f32 %v5247, %v5249
      %v5251 = vadd.f32 %v5250, 0.0036580483
      %v5252 = vmul.f32 %v5247, %v5251
      %v5253 = vadd.f32 %v5252, 0.05243302
      %v5254 = vmul.f32 %v5247, %v5253
      %v5255 = vadd.f32 %v5254, 0.18741608
      %v5256 = vmul.f32 %v5247, %v5255
      %v5257 = vadd.f32 %v5256, 1.1283791
      %v5258 = vmul.f32 %v5199, %v5257
      %v5259 = vmul.f32 %v5247, 3.8918573e-05
      %v5260 = vadd.f32 %v5259, 0.001143296
      %v5261 = vmul.f32 %v5247, %v5260
      %v5262 = vadd.f32 %v5261, 0.014752088
      %v5263 = vmul.f32 %v5247, %v5262
      %v5264 = vadd.f32 %v5263, 0.112945676
      %v5265 = vmul.f32 %v5247, %v5264
      %v5266 = vadd.f32 %v5265, 0.4994258
      %v5267 = vmul.f32 %v5247, %v5266
      %v5268 = vadd.f32 %v5267, 1.0
      %v5269 = vrcp.pop %v5268
      %v5270 = vmul.f32 %v5268, %v5269
      %v5271 = vsub.f32 1.0, %v5270
      %v5272 = vmul.f32 %v5269, %v5271
      %v5273 = vadd.f32 %v5269, %v5272
      %vm5274 = vweird.f32 %v5268
      %vm5275 = vweird.f32 %v5269
      %vm5276 = vmor %vm5274, %vm5275
      %v5277 = vsel %vm5276, %v5269, %v5273
      %v5278 = vand.u32 2147483647, %v5268
      %vm5279 = vcmp.eq.f32.partialorder %v5278, 8.507059e+37
      %v5280 = vand.u32 %v5268, 2147483648
      %v5281 = vor.u32 1.1754944e-38, %v5280
      %v5282 = vsel %vm5279, %v5281, %v5277
      %v5283 = vmul.f32 %v5258, %v5282
      %v5284 = vmin.f32 %v5283, 1.0
      %v5285 = vmax.f32 %v5284, -1.0
      %v5286 = vmul.f32 %v5200, %v5200
      %v5287 = vmin.f32 16.0, %v5286
      %v5288 = vmul.f32 %v5287, 2.1237322e-06
      %v5289 = vadd.f32 %v5288, 0.00028619796
      %v5290 = vmul.f32 %v5287, %v5289
      %v5291 = vadd.f32 %v5290, 0.0036580483
      %v5292 = vmul.f32 %v5287, %v5291
      %v5293 = vadd.f32 %v5292, 0.05243302
      %v5294 = vmul.f32 %v5287, %v5293
      %v5295 = vadd.f32 %v5294, 0.18741608
      %v5296 = vmul.f32 %v5287, %v5295
      %v5297 = vadd.f32 %v5296, 1.1283791
      %v5298 = vmul.f32 %v5200, %v5297
      %v5299 = vmul.f32 %v5287, 3.8918573e-05
      %v5300 = vadd.f32 %v5299, 0.001143296
      %v5301 = vmul.f32 %v5287, %v5300
      %v5302 = vadd.f32 %v5301, 0.014752088
      %v5303 = vmul.f32 %v5287, %v5302
      %v5304 = vadd.f32 %v5303, 0.112945676
      %v5305 = vmul.f32 %v5287, %v5304
      %v5306 = vadd.f32 %v5305, 0.4994258
      %v5307 = vmul.f32 %v5287, %v5306
      %v5308 = vadd.f32 %v5307, 1.0
      %v5309 = vrcp.pop %v5308
      %v5310 = vmul.f32 %v5308, %v5309
      %v5311 = vsub.f32 1.0, %v5310
      %v5312 = vmul.f32 %v5309, %v5311
      %v5313 = vadd.f32 %v5309, %v5312
      %vm5314 = vweird.f32 %v5308
      %vm5315 = vweird.f32 %v5309
      %vm5316 = vmor %vm5314, %vm5315
      %v5317 = vsel %vm5316, %v5309, %v5313
      %v5318 = vand.u32 2147483647, %v5308
      %vm5319 = vcmp.eq.f32.partialorder %v5318, 8.507059e+37
      %v5320 = vand.u32 %v5308, 2147483648
      %v5321 = vor.u32 1.1754944e-38, %v5320
      %v5322 = vsel %vm5319, %v5321, %v5317
      %v5323 = vmul.f32 %v5298, %v5322
      %v5324 = vmin.f32 %v5323, 1.0
      %v5325 = vmax.f32 %v5324, -1.0
      %v5326 = vmul.f32 %v5201, %v5201
      %v5327 = vmin.f32 16.0, %v5326
      %v5328 = vmul.f32 %v5327, 2.1237322e-06
      %v5329 = vadd.f32 %v5328, 0.00028619796
      %v5330 = vmul.f32 %v5327, %v5329
      %v5331 = vadd.f32 %v5330, 0.0036580483
      %v5332 = vmul.f32 %v5327, %v5331
      %v5333 = vadd.f32 %v5332, 0.05243302
      %v5334 = vmul.f32 %v5327, %v5333
      %v5335 = vadd.f32 %v5334, 0.18741608
      %v5336 = vmul.f32 %v5327, %v5335
      %v5337 = vadd.f32 %v5336, 1.1283791
      %v5338 = vmul.f32 %v5201, %v5337
      %v5339 = vmul.f32 %v5327, 3.8918573e-05
      %v5340 = vadd.f32 %v5339, 0.001143296
      %v5341 = vmul.f32 %v5327, %v5340
      %v5342 = vadd.f32 %v5341, 0.014752088
      %v5343 = vmul.f32 %v5327, %v5342
      %v5344 = vadd.f32 %v5343, 0.112945676
      %v5345 = vmul.f32 %v5327, %v5344
      %v5346 = vadd.f32 %v5345, 0.4994258
      %v5347 = vmul.f32 %v5327, %v5346
      %v5348 = vadd.f32 %v5347, 1.0
      %v5349 = vrcp.pop %v5348
      %v5350 = vmul.f32 %v5348, %v5349
      %v5351 = vsub.f32 1.0, %v5350
      %v5352 = vmul.f32 %v5349, %v5351
      %v5353 = vadd.f32 %v5349, %v5352
      %vm5354 = vweird.f32 %v5348
      %vm5355 = vweird.f32 %v5349
      %vm5356 = vmor %vm5354, %vm5355
      %v5357 = vsel %vm5356, %v5349, %v5353
      %v5358 = vand.u32 2147483647, %v5348
      %vm5359 = vcmp.eq.f32.partialorder %v5358, 8.507059e+37
      %v5360 = vand.u32 %v5348, 2147483648
      %v5361 = vor.u32 1.1754944e-38, %v5360
      %v5362 = vsel %vm5359, %v5361, %v5357
      %v5363 = vmul.f32 %v5338, %v5362
      %v5364 = vmin.f32 %v5363, 1.0
      %v5365 = vmax.f32 %v5364, -1.0
      %v5366 = vmul.f32 %v5202, %v5202
      %v5367 = vmin.f32 16.0, %v5366
      %v5368 = vmul.f32 %v5367, 2.1237322e-06
      %v5369 = vadd.f32 %v5368, 0.00028619796
      %v5370 = vmul.f32 %v5367, %v5369
      %v5371 = vadd.f32 %v5370, 0.0036580483
      %v5372 = vmul.f32 %v5367, %v5371
      %v5373 = vadd.f32 %v5372, 0.05243302
      %v5374 = vmul.f32 %v5367, %v5373
      %v5375 = vadd.f32 %v5374, 0.18741608
      %v5376 = vmul.f32 %v5367, %v5375
      %v5377 = vadd.f32 %v5376, 1.1283791
      %v5378 = vmul.f32 %v5202, %v5377
      %v5379 = vmul.f32 %v5367, 3.8918573e-05
      %v5380 = vadd.f32 %v5379, 0.001143296
      %v5381 = vmul.f32 %v5367, %v5380
      %v5382 = vadd.f32 %v5381, 0.014752088
      %v5383 = vmul.f32 %v5367, %v5382
      %v5384 = vadd.f32 %v5383, 0.112945676
      %v5385 = vmul.f32 %v5367, %v5384
      %v5386 = vadd.f32 %v5385, 0.4994258
      %v5387 = vmul.f32 %v5367, %v5386
      %v5388 = vadd.f32 %v5387, 1.0
      %v5389 = vrcp.pop %v5388
      %v5390 = vmul.f32 %v5388, %v5389
      %v5391 = vsub.f32 1.0, %v5390
      %v5392 = vmul.f32 %v5389, %v5391
      %v5393 = vadd.f32 %v5389, %v5392
      %vm5394 = vweird.f32 %v5388
      %vm5395 = vweird.f32 %v5389
      %vm5396 = vmor %vm5394, %vm5395
      %v5397 = vsel %vm5396, %v5389, %v5393
      %v5398 = vand.u32 2147483647, %v5388
      %vm5399 = vcmp.eq.f32.partialorder %v5398, 8.507059e+37
      %v5400 = vand.u32 %v5388, 2147483648
      %v5401 = vor.u32 1.1754944e-38, %v5400
      %v5402 = vsel %vm5399, %v5401, %v5397
      %v5403 = vmul.f32 %v5378, %v5402
      %v5404 = vmin.f32 %v5403, 1.0
      %v5405 = vmax.f32 %v5404, -1.0
      %v5406 = vmul.f32 %v5203, %v5203
      %v5407 = vmin.f32 16.0, %v5406
      %v5408 = vmul.f32 %v5407, 2.1237322e-06
      %v5409 = vadd.f32 %v5408, 0.00028619796
      %v5410 = vmul.f32 %v5407, %v5409
      %v5411 = vadd.f32 %v5410, 0.0036580483
      %v5412 = vmul.f32 %v5407, %v5411
      %v5413 = vadd.f32 %v5412, 0.05243302
      %v5414 = vmul.f32 %v5407, %v5413
      %v5415 = vadd.f32 %v5414, 0.18741608
      %v5416 = vmul.f32 %v5407, %v5415
      %v5417 = vadd.f32 %v5416, 1.1283791
      %v5418 = vmul.f32 %v5203, %v5417
      %v5419 = vmul.f32 %v5407, 3.8918573e-05
      %v5420 = vadd.f32 %v5419, 0.001143296
      %v5421 = vmul.f32 %v5407, %v5420
      %v5422 = vadd.f32 %v5421, 0.014752088
      %v5423 = vmul.f32 %v5407, %v5422
      %v5424 = vadd.f32 %v5423, 0.112945676
      %v5425 = vmul.f32 %v5407, %v5424
      %v5426 = vadd.f32 %v5425, 0.4994258
      %v5427 = vmul.f32 %v5407, %v5426
      %v5428 = vadd.f32 %v5427, 1.0
      %v5429 = vrcp.pop %v5428
      %v5430 = vmul.f32 %v5428, %v5429
      %v5431 = vsub.f32 1.0, %v5430
      %v5432 = vmul.f32 %v5429, %v5431
      %v5433 = vadd.f32 %v5429, %v5432
      %vm5434 = vweird.f32 %v5428
      %vm5435 = vweird.f32 %v5429
      %vm5436 = vmor %vm5434, %vm5435
      %v5437 = vsel %vm5436, %v5429, %v5433
      %v5438 = vand.u32 2147483647, %v5428
      %vm5439 = vcmp.eq.f32.partialorder %v5438, 8.507059e+37
      %v5440 = vand.u32 %v5428, 2147483648
      %v5441 = vor.u32 1.1754944e-38, %v5440
      %v5442 = vsel %vm5439, %v5441, %v5437
      %v5443 = vmul.f32 %v5418, %v5442
      %v5444 = vmin.f32 %v5443, 1.0
      %v5445 = vmax.f32 %v5444, -1.0
      %v5446 = vmul.f32 %v5204, %v5204
      %v5447 = vmin.f32 16.0, %v5446
      %v5448 = vmul.f32 %v5447, 2.1237322e-06
      %v5449 = vadd.f32 %v5448, 0.00028619796
      %v5450 = vmul.f32 %v5447, %v5449
      %v5451 = vadd.f32 %v5450, 0.0036580483
      %v5452 = vmul.f32 %v5447, %v5451
      %v5453 = vadd.f32 %v5452, 0.05243302
      %v5454 = vmul.f32 %v5447, %v5453
      %v5455 = vadd.f32 %v5454, 0.18741608
      %v5456 = vmul.f32 %v5447, %v5455
      %v5457 = vadd.f32 %v5456, 1.1283791
      %v5458 = vmul.f32 %v5204, %v5457
      %v5459 = vmul.f32 %v5447, 3.8918573e-05
      %v5460 = vadd.f32 %v5459, 0.001143296
      %v5461 = vmul.f32 %v5447, %v5460
      %v5462 = vadd.f32 %v5461, 0.014752088
      %v5463 = vmul.f32 %v5447, %v5462
      %v5464 = vadd.f32 %v5463, 0.112945676
      %v5465 = vmul.f32 %v5447, %v5464
      %v5466 = vadd.f32 %v5465, 0.4994258
      %v5467 = vmul.f32 %v5447, %v5466
      %v5468 = vadd.f32 %v5467, 1.0
      %v5469 = vrcp.pop %v5468
      %v5470 = vmul.f32 %v5468, %v5469
      %v5471 = vsub.f32 1.0, %v5470
      %v5472 = vmul.f32 %v5469, %v5471
      %v5473 = vadd.f32 %v5469, %v5472
      %vm5474 = vweird.f32 %v5468
      %vm5475 = vweird.f32 %v5469
      %vm5476 = vmor %vm5474, %vm5475
      %v5477 = vsel %vm5476, %v5469, %v5473
      %v5478 = vand.u32 2147483647, %v5468
      %vm5479 = vcmp.eq.f32.partialorder %v5478, 8.507059e+37
      %v5480 = vand.u32 %v5468, 2147483648
      %v5481 = vor.u32 1.1754944e-38, %v5480
      %v5482 = vsel %vm5479, %v5481, %v5477
      %v5483 = vmul.f32 %v5458, %v5482
      %v5484 = vmin.f32 %v5483, 1.0
      %v5485 = vmax.f32 %v5484, -1.0
      %v5486 = vmul.f32 %v5205, %v5205
      %v5487 = vmin.f32 16.0, %v5486
      %v5488 = vmul.f32 %v5487, 2.1237322e-06
      %v5489 = vadd.f32 %v5488, 0.00028619796
      %v5490 = vmul.f32 %v5487, %v5489
      %v5491 = vadd.f32 %v5490, 0.0036580483
      %v5492 = vmul.f32 %v5487, %v5491
      %v5493 = vadd.f32 %v5492, 0.05243302
      %v5494 = vmul.f32 %v5487, %v5493
      %v5495 = vadd.f32 %v5494, 0.18741608
      %v5496 = vmul.f32 %v5487, %v5495
      %v5497 = vadd.f32 %v5496, 1.1283791
      %v5498 = vmul.f32 %v5205, %v5497
      %v5499 = vmul.f32 %v5487, 3.8918573e-05
      %v5500 = vadd.f32 %v5499, 0.001143296
      %v5501 = vmul.f32 %v5487, %v5500
      %v5502 = vadd.f32 %v5501, 0.014752088
      %v5503 = vmul.f32 %v5487, %v5502
      %v5504 = vadd.f32 %v5503, 0.112945676
      %v5505 = vmul.f32 %v5487, %v5504
      %v5506 = vadd.f32 %v5505, 0.4994258
      %v5507 = vmul.f32 %v5487, %v5506
      %v5508 = vadd.f32 %v5507, 1.0
      %v5509 = vrcp.pop %v5508
      %v5510 = vmul.f32 %v5508, %v5509
      %v5511 = vsub.f32 1.0, %v5510
      %v5512 = vmul.f32 %v5509, %v5511
      %v5513 = vadd.f32 %v5509, %v5512
      %vm5514 = vweird.f32 %v5508
      %vm5515 = vweird.f32 %v5509
      %vm5516 = vmor %vm5514, %vm5515
      %v5517 = vsel %vm5516, %v5509, %v5513
      %v5518 = vand.u32 2147483647, %v5508
      %vm5519 = vcmp.eq.f32.partialorder %v5518, 8.507059e+37
      %v5520 = vand.u32 %v5508, 2147483648
      %v5521 = vor.u32 1.1754944e-38, %v5520
      %v5522 = vsel %vm5519, %v5521, %v5517
      %v5523 = vmul.f32 %v5498, %v5522
      %v5524 = vmin.f32 %v5523, 1.0
      %v5525 = vmax.f32 %v5524, -1.0
      %v5526 = vadd.f32 %v5245, 1.0
      %v5527 = vadd.f32 %v5285, 1.0
      %v5528 = vadd.f32 %v5325, 1.0
      %v5529 = vadd.f32 %v5365, 1.0
      %v5530 = vadd.f32 %v5405, 1.0
      %v5531 = vadd.f32 %v5445, 1.0
      %v5532 = vadd.f32 %v5485, 1.0
      %v5533 = vadd.f32 %v5525, 1.0
      %v5534 = vmul.f32 %v5190, %v5526
      %v5535 = vmul.f32 %v5191, %v5527
      %v5536 = vmul.f32 %v5192, %v5528
      %v5537 = vmul.f32 %v5193, %v5529
      %v5538 = vmul.f32 %v5194, %v5530
      %v5539 = vmul.f32 %v5195, %v5531
      %v5540 = vmul.f32 %v5196, %v5532
      %v5541 = vmul.f32 %v5197, %v5533
      %v5542 = vmul.f32 %v5126, %v5534
      %v5543 = vmul.f32 %v5129, %v5535
      %v5544 = vmul.f32 %v5132, %v5536
      %v5545 = vmul.f32 %v5135, %v5537
      %v5546 = vmul.f32 %v5138, %v5538
      %v5547 = vmul.f32 %v5141, %v5539
      %v5548 = vmul.f32 %v5144, %v5540
      %v5549 = vmul.f32 %v5147, %v5541
      %v5550 = vld [vmem:[%s8] sm:$0xff]
      %v5551 = vld [vmem:[%s8 + $0x8] sm:$0xff]
      %v5552 = vld [vmem:[%s8 + $0x10] sm:$0xff]
      %v5553 = vld [vmem:[%s8 + $0x18] sm:$0xff]
      %v5554 = vld [vmem:[%s8 + $0x20] sm:$0xff]
      %v5555 = vld [vmem:[%s8 + $0x28] sm:$0xff]
      %v5556 = vld [vmem:[%s8 + $0x30] sm:$0xff]
      %v5557 = vld [vmem:[%s8 + $0x38] sm:$0xff]
      %v5558 = vld [vmem:[%s8 + $0x40] sm:$0xff]
      %v5559 = vld [vmem:[%s8 + $0x48] sm:$0xff]
      %v5560 = vld [vmem:[%s8 + $0x50] sm:$0xff]
      %v5561 = vld [vmem:[%s8 + $0x58] sm:$0xff]
      %v5562 = vld [vmem:[%s8 + $0x60] sm:$0xff]
      %v5563 = vld [vmem:[%s8 + $0x68] sm:$0xff]
      %v5564 = vld [vmem:[%s8 + $0x70] sm:$0xff]
      %v5565 = vld [vmem:[%s8 + $0x78] sm:$0xff]
      %5566 = vmatpush.msra.mxu0 %v5565
      %5567 = vmatpush.msra.mxu0 %v5564
      %5568 = vmatpush.msra.mxu0 %v5563
      %5569 = vmatpush.msra.mxu0 %v5562
      %5570 = vmatpush.msra.mxu0 %v5561
      %5571 = vmatpush.msra.mxu0 %v5560
      %5572 = vmatpush.msra.mxu0 %v5559
      %5573 = vmatpush.msra.mxu0 %v5558
      %5574 = vmatpush.msra.mxu0 %v5557
      %5575 = vmatpush.msra.mxu0 %v5556
      %5576 = vmatpush.msra.mxu0 %v5555
      %5577 = vmatpush.msra.mxu0 %v5554
      %5578 = vmatpush.msra.mxu0 %v5553
      %5579 = vmatpush.msra.mxu0 %v5552
      %5580 = vmatpush.msra.mxu0 %v5551
      %5581 = vmatpush.msra.mxu0 %v5550
      %5582 = vmatmul.f32.gmra.mxu0 %v5542
      %v5583 = vpop.f32.mrf.mxu0
      %v5584 = vadd.f32 0.0, %v5583
      %5585 = vmatmul.f32.gmra.mxu0 %v5543
      %v5586 = vpop.f32.mrf.mxu0
      %v5587 = vadd.f32 0.0, %v5586
      %5588 = vmatmul.f32.gmra.mxu0 %v5544
      %v5589 = vpop.f32.mrf.mxu0
      %v5590 = vadd.f32 0.0, %v5589
      %5591 = vmatmul.f32.gmra.mxu0 %v5545
      %v5592 = vpop.f32.mrf.mxu0
      %v5593 = vadd.f32 0.0, %v5592
      %5594 = vmatmul.f32.gmra.mxu0 %v5546
      %v5595 = vpop.f32.mrf.mxu0
      %v5596 = vadd.f32 0.0, %v5595
      %5597 = vmatmul.f32.gmra.mxu0 %v5547
      %v5598 = vpop.f32.mrf.mxu0
      %v5599 = vadd.f32 0.0, %v5598
      %5600 = vmatmul.f32.gmra.mxu0 %v5548
      %v5601 = vpop.f32.mrf.mxu0
      %v5602 = vadd.f32 0.0, %v5601
      %5603 = vmatmul.f32.gmra.mxu0 %v5549
      %v5604 = vpop.f32.mrf.mxu0
      %v5605 = vadd.f32 0.0, %v5604
      %5606 = vdwg.mxu0
      %v5607 = vadd.f32 %v4866, %v5584
      %v5608 = vadd.f32 %v4867, %v5587
      %v5609 = vadd.f32 %v4868, %v5590
      %v5610 = vadd.f32 %v4869, %v5593
      %v5611 = vadd.f32 %v4870, %v5596
      %v5612 = vadd.f32 %v4871, %v5599
      %v5613 = vadd.f32 %v4872, %v5602
      %v5614 = vadd.f32 %v4873, %v5605
      %v5615 = vld [vmem:[%s9 + $0x8] sm:$0x1]
      %v5616 = vperm.slane %v5615, 0
      %v5617 = vadd.f32 %v5607, %v5616
      %v5618 = vadd.f32 %v5608, %v5616
      %v5619 = vadd.f32 %v5609, %v5616
      %v5620 = vadd.f32 %v5610, %v5616
      %v5621 = vadd.f32 %v5611, %v5616
      %v5622 = vadd.f32 %v5612, %v5616
      %v5623 = vadd.f32 %v5613, %v5616
      %v5624 = vadd.f32 %v5614, %v5616
      %5625 = vst.msk [vmem:[%s379] sm:$0xff] %vm400, %v5617
      %5626 = vst.msk [vmem:[%s379 + $0x8] sm:$0xff] %vm400, %v5618
      %5627 = vst.msk [vmem:[%s379 + $0x10] sm:$0xff] %vm400, %v5619
      %5628 = vst.msk [vmem:[%s379 + $0x18] sm:$0xff] %vm400, %v5620
      %5629 = vst.msk [vmem:[%s379 + $0x20] sm:$0xff] %vm400, %v5621
      %5630 = vst.msk [vmem:[%s379 + $0x28] sm:$0xff] %vm400, %v5622
      %5631 = vst.msk [vmem:[%s379 + $0x30] sm:$0xff] %vm400, %v5623
      %5632 = vst.msk [vmem:[%s379 + $0x38] sm:$0xff] %vm400, %v5624
      %p5633 = scmp.lt.s32.totalorder %s21, 1
      %s5634 = scalar_select %p5633, %s21, 1
      %s5635 = smul.addr %s5634, 8
      %s5636 = smul.addr %s5635, 8
      %s5637 = scalar_lea.vmem %s10, %s5636
      // Predicated region
      $region61: #{hybrid_transformer_block.1} parent=59 // pred_check
        %p5638 = pneg %p259
      $region62: #{hybrid_transformer_block.1} parent=59 // pred_check_branch
        %5640 = sbr.rel (%p5638) target = $region64
      $region63: #{hybrid_transformer_block.1} parent=59 // pred_region
        _
      $region64: #{hybrid_transformer_block.1} parent=59 // pred_fallthru
        _
    $region60: #{hybrid_transformer_block.1} parent=5 // pred_fallthru
      _
    %p5641 = scmp.le.s32.totalorder 2, %s16
    // Predicated region
    $region65: #{hybrid_transformer_block.1} parent=5 // pred_check
      %p5642 = pneg %p5641
    $region66: #{hybrid_transformer_block.1} parent=5 // pred_check_branch
      %5644 = sbr.rel (%p5642) target = $region68
    $region67: #{hybrid_transformer_block.1} parent=5 // pred_region
      %s5645 = ssub.s32 %s16, 2
      // Predicated region
      $region69: #{hybrid_transformer_block.1} parent=67 // pred_check
        %p5646 = pneg %p265
      $region70: #{hybrid_transformer_block.1} parent=67 // pred_check_branch
        %5648 = sbr.rel (%p5646) target = $region72
      $region71: #{hybrid_transformer_block.1} parent=67 // pred_region
        %p5649 = scmp.lt.s32.totalorder %s22, 1
        %s5650 = scalar_select %p5649, %s22, 1
        %s5651 = smul.addr %s5650, 8
        %s5652 = smul.addr %s5651, 8
        %s5653 = scalar_lea.vmem %s10, %s5652
      $region72: #{hybrid_transformer_block.1} parent=67 // pred_fallthru
        _
    $region68: #{hybrid_transformer_block.1} parent=5 // pred_fallthru
      _
  $region6: #{hybrid_transformer_block.1} parent=0 // loop_footer
    %s20 = sadd.s32 1, %s16
  $region7: #{hybrid_transformer_block.1} parent=0 // loop_footer_branch
    %15 = sbr.rel target = $region3
  $region8: #{hybrid_transformer_block.1} parent=0 // loop_exit
    _

</llo_original>
